<compile_context>
chip_gen: v7x
topology: tpu7x:2x2x1
jax: 0.10.0
libtpu: 0.0.40
codegen_flags: <defaults>
</compile_context>

<pallas_src>
import math

import numpy as np
import jax
import jax.numpy as jnp
from jax import lax
from jax.experimental import pallas as pl
from jax.experimental.pallas import tpu as pltpu


# ----------------------------- kernel helpers -----------------------------

def _ln(x, g, b, eps=1e-5):
    mu = jnp.mean(x, axis=-1, keepdims=True)
    var = jnp.mean(jnp.square(x - mu), axis=-1, keepdims=True)
    return (x - mu) * lax.rsqrt(var + eps) * g + b


def _linear(x, w, b):
    # x [N, in]; w [out, in] (torch nn.Linear layout, bf16); b [1, out] f32.
    # Operands hit the MXU in bf16, accumulation is f32.
    y = lax.dot_general(x.astype(w.dtype), w, (((1,), (1,)), ((), ())),
                        preferred_element_type=jnp.float32)
    return y + b


def _split_heads(z, n_heads, d_head):
    # [N, n_heads*d_head] -> [n_heads, N, d_head]   (one-time static relayout)
    return jnp.stack(
        [z[:, h * d_head:(h + 1) * d_head] for h in range(n_heads)], axis=0)


def _merge_heads(z):
    # [n_heads, N, d_head] -> [N, n_heads*d_head]
    return jnp.concatenate([z[h] for h in range(z.shape[0])], axis=-1)


def _rel_shift(bd_full):
    # Transformer-XL relative shift, O(T^2) memory and work:
    #   out[n, i, j] = bd_full[n, i, T-1-i+j]  for j <= i,  0 otherwise.
    # The invalid (j > i) band reads the zero padding, so the result does not
    # depend on the causal mask hiding spill-over garbage.
    NH, T, _ = bd_full.shape
    padded = jnp.concatenate(
        [bd_full, jnp.zeros((NH, T, T), bd_full.dtype)], axis=-1)   # [NH, T, 2T]
    rows = [padded[:, i:i + 1, T - 1 - i: 2 * T - 1 - i] for i in range(T)]
    # TODO(synk): for large T replace this trace-time-unrolled skew with a
    # single strided pltpu.roll on the XLU (or a fori_loop of dynamic slices).
    return jnp.concatenate(rows, axis=1)                             # [NH, T, T]


def _softmax(s):
    m = jnp.max(s, axis=-1, keepdims=True)
    e = jnp.exp(s - m)
    return e * pl.reciprocal(jnp.sum(e, axis=-1, keepdims=True), approx=True)


# --------------------------------- kernel ----------------------------------

def _decoder_layer_kernel(x_ref, ctx_ref, mtgt_ref, msrc_ref, pos_ref, lv_ref,
                          ln1_g, ln1_b,
                          wqkv, bqkv, wpos, bpos, rwb, rrb, wo1, bo1,
                          ln2_g, ln2_b,
                          wq, bq, wkv, bkv, wo2, bo2,
                          ln3_g, ln3_b,
                          wf1, bf1, wf2, bf2,
                          out_ref, cov_ref):
    f32, bf16 = jnp.float32, jnp.bfloat16
    T, H = x_ref.shape[1], x_ref.shape[2]
    S = ctx_ref.shape[1]
    NH, dh = rwb.shape[0], rwb.shape[2]
    scale = 1.0 / math.sqrt(dh)
    NEG = -1e30

    x = x_ref[0] + lv_ref[...]                  # [T, H] f32 (input + layer_vector)
    ctx = ctx_ref[0]                            # [S, H] bf16 (matmul-only input)

    # Additive masks, hoisted out of the attention math (computed once).
    # (Fully-masked rows would give softmax over raw scores rather than a
    #  uniform distribution; neither occurs with a causal tgt mask / non-empty
    #  source, matching the reference at these inputs.)
    bias_t = jnp.where(mtgt_ref[0] > 0, NEG, 0.0).astype(f32)    # [T, T]
    bias_s = jnp.where(msrc_ref[0] > 0, NEG, 0.0).astype(f32)    # [1, S]

    # ---- relative self-attention (preprocess_attn -> multihead_tgt ->
    #      postprocess_attn) ----
    h = _ln(x, ln1_g[...], ln1_b[...])
    qkv = _linear(h, wqkv[...], bqkv[...])           # [T, 3H]  (one K=H matmul)
    r = _linear(pos_ref[...], wpos[...], bpos[...])  # [T, H]

    qh = _split_heads(qkv[:, :H], NH, dh)            # [NH, T, dh] f32
    kh = _split_heads(qkv[:, H:2 * H], NH, dh).astype(bf16)
    vh = _split_heads(qkv[:, 2 * H:], NH, dh).astype(bf16)
    rh = _split_heads(r, NH, dh).astype(bf16)

    q_rw = (qh + rwb[...]).astype(bf16)              # [NH, T, dh]
    q_rr = (qh + rrb[...]).astype(bf16)

    ac = jnp.einsum('nid,njd->nij', q_rw, kh, preferred_element_type=f32)
    bd = _rel_shift(
        jnp.einsum('nid,njd->nij', q_rr, rh, preferred_element_type=f32))
    score = (ac + bd) * scale + bias_t[None]         # [NH, T, T]
    probs = _softmax(score)
    o = jnp.einsum('nij,njd->nid', probs.astype(bf16), vh,
                   preferred_element_type=f32)       # [NH, T, dh]
    # single fused [T,H]x[H,H] output projection (residual, dropout = identity)
    x = x + _linear(_merge_heads(o), wo1[...], bo1[...])

    # ---- encoder-decoder attention (preprocess_src_attn -> multihead_src ->
    #      postprocess_src_attn) ----
    h = _ln(x, ln2_g[...], ln2_b[...])
    q2 = _linear(h, wq[...], bq[...])                # [T, H]
    kv = _linear(ctx, wkv[...], bkv[...])            # [S, 2H]
    q2h = _split_heads(q2, NH, dh).astype(bf16)
    k2h = _split_heads(kv[:, :H], NH, dh).astype(bf16)
    v2h = _split_heads(kv[:, H:], NH, dh).astype(bf16)

    s2 = jnp.einsum('nid,njd->nij', q2h, k2h, preferred_element_type=f32) * scale
    cov = _softmax(s2 + bias_s[None])                # [NH, T, S]
    cov_ref[0] = cov.astype(cov_ref.dtype)           # coverage output
    o2 = jnp.einsum('nij,njd->nid', cov.astype(bf16), v2h,
                    preferred_element_type=f32)
    x = x + _linear(_merge_heads(o2), wo2[...], bo2[...])

    # ---- position-wise FFN (preprocess_ffn -> feedforward -> postprocess_ffn)
    # TODO(synk): at production H/inner sizes, tile the FFN along the inner
    # dimension (extra grid axis / emit_pipeline) to respect v7x's 64 MiB VMEM.
    h = _ln(x, ln3_g[...], ln3_b[...])
    f = jnp.maximum(_linear(h, wf1[...], bf1[...]), 0.0)
    f = _linear(f, wf2[...], bf2[...])
    x = x + f

    out_ref[0] = x.astype(out_ref.dtype)


# -------------------------------- wrapper ----------------------------------

def relative_universal_decoder_layer(inp, context, pos_emb, layer_vector,
                                     mask_tgt, mask_src, params, n_heads):
    T, B, H = inp.shape
    S = context.shape[0]
    dh = H // n_heads
    f32, bf16 = jnp.float32, jnp.bfloat16

    # Batch-first activations for per-batch blocking.  The decoder input stays
    # f32 (residual-stream precision); context only feeds a matmul, so its
    # transposed copy is made directly in bf16 (halves that HBM traffic).
    x_bf = jnp.transpose(inp, (1, 0, 2)).astype(f32)          # [B, T, H]
    ctx_bf = jnp.transpose(context, (1, 0, 2)).astype(bf16)   # [B, S, H]
    pos = pos_emb[:, 0, :].astype(f32)                        # [T, H]
    lv = layer_vector.reshape(1, H).astype(f32)
    mtgt = mask_tgt.astype(f32)                               # [B, T, T]
    msrc = mask_src.astype(f32)                               # [B, 1, S]

    p = params
    shared = [pos, lv,
              p['ln1_g'].astype(f32), p['ln1_b'].astype(f32),
              p['wqkv'].astype(bf16), p['bqkv'].astype(f32),
              p['wpos'].astype(bf16), p['bpos'].astype(f32),
              p['rwb'].reshape(n_heads, 1, dh).astype(f32),
              p['rrb'].reshape(n_heads, 1, dh).astype(f32),
              p['wo1'].astype(bf16), p['bo1'].astype(f32),
              p['ln2_g'].astype(f32), p['ln2_b'].astype(f32),
              p['wq'].astype(bf16), p['bq'].astype(f32),
              p['wkv'].astype(bf16), p['bkv'].astype(f32),
              p['wo2'].astype(bf16), p['bo2'].astype(f32),
              p['ln3_g'].astype(f32), p['ln3_b'].astype(f32),
              p['wf1'].astype(bf16), p['bf1'].astype(f32),
              p['wf2'].astype(bf16), p['bf2'].astype(f32)]

    def batch_spec(shape):
        nd = len(shape)
        return pl.BlockSpec((1,) + tuple(shape[1:]),
                            lambda b, _n=nd: (b,) + (0,) * (_n - 1))

    def full_spec(shape):
        nd = len(shape)
        return pl.BlockSpec(tuple(shape), lambda b, _n=nd: (0,) * _n)

    in_arrays = [x_bf, ctx_bf, mtgt, msrc] + shared
    in_specs = ([batch_spec(x_bf.shape), batch_spec(ctx_bf.shape),
                 batch_spec(mtgt.shape), batch_spec(msrc.shape)]
                + [full_spec(a.shape) for a in shared])

    out_shape = (jax.ShapeDtypeStruct((B, T, H), f32),
                 jax.ShapeDtypeStruct((B, n_heads, T, S), f32))
    out_specs = [batch_spec((B, T, H)), batch_spec((B, n_heads, T, S))]

    # TODO(synk): for v7x / large T, add a "parallel" T-tile grid axis so both
    # TensorCores are busy and per-step temporaries are bounded.
    y_bf, coverage = pl.pallas_call(
        _decoder_layer_kernel,
        out_shape=out_shape,
        grid_spec=pltpu.PrefetchScalarGridSpec(
            num_scalar_prefetch=0, grid=(B,),
            in_specs=in_specs, out_specs=out_specs),
        compiler_params=pltpu.CompilerParams(
            dimension_semantics=("parallel",),
            vmem_limit_bytes=32 * 1024 * 1024),
    )(*in_arrays)

    out = jnp.transpose(y_bf, (1, 0, 2))      # back to time-first [T, B, H]
    # TODO(synk): `incremental_cache` is a Python dict used only on the
    # incremental-decoding path; no Pallas equivalent, returned as None.
    return out, coverage, None


# --------------------------- plain-JAX reference ---------------------------

def reference_forward(inp, context, pos_emb, layer_vector, mask_tgt, mask_src,
                      p, n_heads):
    T, B, H = inp.shape
    S = context.shape[0]
    dh = H // n_heads
    scale = 1.0 / math.sqrt(dh)
    x = jnp.transpose(inp, (1, 0, 2)) + layer_vector.reshape(1, 1, H)
    ctx = jnp.transpose(context, (1, 0, 2))
    pos = pos_emb[:, 0, :]

    def ln(v, g, b, eps=1e-5):
        mu = v.mean(-1, keepdims=True)
        var = ((v - mu) ** 2).mean(-1, keepdims=True)
        return (v - mu) / jnp.sqrt(var + eps) * g + b

    def split_heads(z):
        return z.reshape(z.shape[0], z.shape[1], n_heads, dh).transpose(0, 2, 1, 3)

    # self attention
    h = ln(x, p['ln1_g'][0], p['ln1_b'][0])
    qkv = h @ p['wqkv'].T + p['bqkv'][0]
    q, k, v = jnp.split(qkv, 3, axis=-1)
    r = pos @ p['wpos'].T + p['bpos'][0]
    qh, kh, vh = split_heads(q), split_heads(k), split_heads(v)
    rh = r.reshape(T, n_heads, dh).transpose(1, 0, 2)
    ac = jnp.einsum('bhid,bhjd->bhij', qh + p['rwb'][None, :, None, :], kh)
    bdf = jnp.einsum('bhid,hjd->bhij', qh + p['rrb'][None, :, None, :], rh)
    idx = jnp.arange(T)[None, :] - jnp.arange(T)[:, None] + (T - 1)
    valid = (idx >= 0) & (idx < T)
    gidx = jnp.broadcast_to(jnp.clip(idx, 0, T - 1)[None, None], (B, n_heads, T, T))
    bd = jnp.where(valid[None, None], jnp.take_along_axis(bdf, gidx, axis=-1), 0.0)
    score = (ac + bd) * scale
    score = jnp.where(mask_tgt[:, None] > 0, -1e30, score)
    pa = jax.nn.softmax(score, axis=-1)
    o = jnp.einsum('bhij,bhjd->bhid', pa, vh).transpose(0, 2, 1, 3).reshape(B, T, H)
    x = x + o @ p['wo1'].T + p['bo1'][0]

    # encoder-decoder attention
    h = ln(x, p['ln2_g'][0], p['ln2_b'][0])
    q2 = split_heads(h @ p['wq'].T + p['bq'][0])
    kv = ctx @ p['wkv'].T + p['bkv'][0]
    k2, v2 = jnp.split(kv, 2, axis=-1)
    k2, v2 = split_heads(k2), split_heads(v2)
    score = jnp.einsum('bhid,bhjd->bhij', q2, k2) * scale
    score = jnp.where(mask_src[:, None] > 0, -1e30, score)
    cov = jax.nn.softmax(score, axis=-1)
    o2 = jnp.einsum('bhij,bhjd->bhid', cov, v2).transpose(0, 2, 1, 3).reshape(B, T, H)
    x = x + o2 @ p['wo2'].T + p['bo2'][0]

    # FFN
    h = ln(x, p['ln3_g'][0], p['ln3_b'][0])
    f = jax.nn.relu(h @ p['wf1'].T + p['bf1'][0]) @ p['wf2'].T + p['bf2'][0]
    x = x + f
    return jnp.transpose(x, (1, 0, 2)), cov


# ------------------------------ param init ---------------------------------

def init_params(key, H, n_heads, inner):
    d_head = H // n_heads
    keys = iter(jax.random.split(key, 32))

    def w(shape, scale=0.05):
        return (scale * jax.random.normal(next(keys), shape)).astype(jnp.float32)

    return {
        'ln1_g': 1.0 + w((1, H), 0.1), 'ln1_b': w((1, H), 0.1),
        'ln2_g': 1.0 + w((1, H), 0.1), 'ln2_b': w((1, H), 0.1),
        'ln3_g': 1.0 + w((1, H), 0.1), 'ln3_b': w((1, H), 0.1),
        'wqkv': w((3 * H, H)), 'bqkv': w((1, 3 * H)),
        'wpos': w((H, H)), 'bpos': w((1, H)),
        'rwb': w((n_heads, d_head)), 'rrb': w((n_heads, d_head)),
        'wo1': w((H, H)), 'bo1': w((1, H)),
        'wq': w((H, H)), 'bq': w((1, H)),
        'wkv': w((2 * H, H)), 'bkv': w((1, 2 * H)),
        'wo2': w((H, H)), 'bo2': w((1, H)),
        'wf1': w((inner, H)), 'bf1': w((1, inner)),
        'wf2': w((H, inner)), 'bf2': w((1, H)),
    }


# ---------------------------------- main ------------------------------------

if __name__ == "__main__":
    T, S, B, H, n_heads, inner = 8, 8, 2, 32, 4, 64
    key = jax.random.PRNGKey(0)
    k1, k2, k3, k4, kp = jax.random.split(key, 5)

    inp = jax.random.normal(k1, (T, B, H), jnp.float32)          # [T, B, H]
    context = jax.random.normal(k2, (S, B, H), jnp.float32)      # [S, B, H]
    pos_emb = jax.random.normal(k3, (T, 1, H), jnp.float32)      # [T, 1, H]
    layer_vector = 0.1 * jax.random.normal(k4, (1, 1, H), jnp.float32)
    params = init_params(kp, H, n_heads, inner)

    # causal target mask (1 = masked future position)
    causal = (jnp.arange(T)[None, :] > jnp.arange(T)[:, None]).astype(jnp.float32)
    mask_tgt = jnp.broadcast_to(causal, (B, T, T))
    # source padding mask (1 = padded); second batch element has 2 pads
    src_lens = jnp.array([S, S - 2])
    mask_src = (jnp.arange(S)[None, None, :] >=
                src_lens[:, None, None]).astype(jnp.float32)       # [B, 1, S]

    out, coverage, cache = relative_universal_decoder_layer(
        inp, context, pos_emb, layer_vector, mask_tgt, mask_src, params, n_heads)
    out = jax.block_until_ready(out)
    coverage = jax.block_until_ready(coverage)

    ref_out, ref_cov = reference_forward(
        inp, context, pos_emb, layer_vector, mask_tgt, mask_src, params, n_heads)
    # bf16 MXU operands (f32 accumulation) => slightly looser tolerance than f32
    np.testing.assert_allclose(np.asarray(out), np.asarray(ref_out),
                               rtol=2e-2, atol=2e-2)
    np.testing.assert_allclose(np.asarray(coverage), np.asarray(ref_cov),
                               rtol=2e-2, atol=2e-2)
    print("KERNEL_OK")
</pallas_src>

<mosaic_0001>
module attributes {stable_mosaic.version = 11 : i64} {
  func.func @_decoder_layer_kernel(%arg0: i32, %arg1: memref<1x8x32xf32, #tpu.memory_space<vmem>>, %arg2: memref<1x8x32xbf16, #tpu.memory_space<vmem>>, %arg3: memref<1x8x8xf32, #tpu.memory_space<vmem>>, %arg4: memref<1x1x8xf32, #tpu.memory_space<vmem>>, %arg5: memref<8x32xf32, #tpu.memory_space<vmem>>, %arg6: memref<1x32xf32, #tpu.memory_space<vmem>>, %arg7: memref<1x32xf32, #tpu.memory_space<vmem>>, %arg8: memref<1x32xf32, #tpu.memory_space<vmem>>, %arg9: memref<96x32xbf16, #tpu.memory_space<vmem>>, %arg10: memref<1x96xf32, #tpu.memory_space<vmem>>, %arg11: memref<32x32xbf16, #tpu.memory_space<vmem>>, %arg12: memref<1x32xf32, #tpu.memory_space<vmem>>, %arg13: memref<4x1x8xf32, #tpu.memory_space<vmem>>, %arg14: memref<4x1x8xf32, #tpu.memory_space<vmem>>, %arg15: memref<32x32xbf16, #tpu.memory_space<vmem>>, %arg16: memref<1x32xf32, #tpu.memory_space<vmem>>, %arg17: memref<1x32xf32, #tpu.memory_space<vmem>>, %arg18: memref<1x32xf32, #tpu.memory_space<vmem>>, %arg19: memref<32x32xbf16, #tpu.memory_space<vmem>>, %arg20: memref<1x32xf32, #tpu.memory_space<vmem>>, %arg21: memref<64x32xbf16, #tpu.memory_space<vmem>>, %arg22: memref<1x64xf32, #tpu.memory_space<vmem>>, %arg23: memref<32x32xbf16, #tpu.memory_space<vmem>>, %arg24: memref<1x32xf32, #tpu.memory_space<vmem>>, %arg25: memref<1x32xf32, #tpu.memory_space<vmem>>, %arg26: memref<1x32xf32, #tpu.memory_space<vmem>>, %arg27: memref<64x32xbf16, #tpu.memory_space<vmem>>, %arg28: memref<1x64xf32, #tpu.memory_space<vmem>>, %arg29: memref<32x64xbf16, #tpu.memory_space<vmem>>, %arg30: memref<1x32xf32, #tpu.memory_space<vmem>>, %arg31: memref<1x8x32xf32, #tpu.memory_space<vmem>>, %arg32: memref<1x4x8x8xf32, #tpu.memory_space<vmem>>) attributes {dimension_semantics = [#tpu.dimension_semantics<parallel>], iteration_bounds = array<i64: 2>, scalar_prefetch = 0 : i64, scratch_operands = 0 : i64, tpu.core_type = #tpu.core_type<tc>, window_params = [{transform_indices = @transform_0, window_bounds = array<i64: 1, 8, 32>}, {transform_indices = @transform_1, window_bounds = array<i64: 1, 8, 32>}, {transform_indices = @transform_2, window_bounds = array<i64: 1, 8, 8>}, {transform_indices = @transform_3, window_bounds = array<i64: 1, 1, 8>}, {pipeline_mode = #tpu.pipeline_mode<synchronous>, transform_indices = @transform_4, window_bounds = array<i64: 8, 32>}, {pipeline_mode = #tpu.pipeline_mode<synchronous>, transform_indices = @transform_5, window_bounds = array<i64: 1, 32>}, {pipeline_mode = #tpu.pipeline_mode<synchronous>, transform_indices = @transform_6, window_bounds = array<i64: 1, 32>}, {pipeline_mode = #tpu.pipeline_mode<synchronous>, transform_indices = @transform_7, window_bounds = array<i64: 1, 32>}, {pipeline_mode = #tpu.pipeline_mode<synchronous>, transform_indices = @transform_8, window_bounds = array<i64: 96, 32>}, {pipeline_mode = #tpu.pipeline_mode<synchronous>, transform_indices = @transform_9, window_bounds = array<i64: 1, 96>}, {pipeline_mode = #tpu.pipeline_mode<synchronous>, transform_indices = @transform_10, window_bounds = array<i64: 32, 32>}, {pipeline_mode = #tpu.pipeline_mode<synchronous>, transform_indices = @transform_11, window_bounds = array<i64: 1, 32>}, {pipeline_mode = #tpu.pipeline_mode<synchronous>, transform_indices = @transform_12, window_bounds = array<i64: 4, 1, 8>}, {pipeline_mode = #tpu.pipeline_mode<synchronous>, transform_indices = @transform_13, window_bounds = array<i64: 4, 1, 8>}, {pipeline_mode = #tpu.pipeline_mode<synchronous>, transform_indices = @transform_14, window_bounds = array<i64: 32, 32>}, {pipeline_mode = #tpu.pipeline_mode<synchronous>, transform_indices = @transform_15, window_bounds = array<i64: 1, 32>}, {pipeline_mode = #tpu.pipeline_mode<synchronous>, transform_indices = @transform_16, window_bounds = array<i64: 1, 32>}, {pipeline_mode = #tpu.pipeline_mode<synchronous>, transform_indices = @transform_17, window_bounds = array<i64: 1, 32>}, {pipeline_mode = #tpu.pipeline_mode<synchronous>, transform_indices = @transform_18, window_bounds = array<i64: 32, 32>}, {pipeline_mode = #tpu.pipeline_mode<synchronous>, transform_indices = @transform_19, window_bounds = array<i64: 1, 32>}, {pipeline_mode = #tpu.pipeline_mode<synchronous>, transform_indices = @transform_20, window_bounds = array<i64: 64, 32>}, {pipeline_mode = #tpu.pipeline_mode<synchronous>, transform_indices = @transform_21, window_bounds = array<i64: 1, 64>}, {pipeline_mode = #tpu.pipeline_mode<synchronous>, transform_indices = @transform_22, window_bounds = array<i64: 32, 32>}, {pipeline_mode = #tpu.pipeline_mode<synchronous>, transform_indices = @transform_23, window_bounds = array<i64: 1, 32>}, {pipeline_mode = #tpu.pipeline_mode<synchronous>, transform_indices = @transform_24, window_bounds = array<i64: 1, 32>}, {pipeline_mode = #tpu.pipeline_mode<synchronous>, transform_indices = @transform_25, window_bounds = array<i64: 1, 32>}, {pipeline_mode = #tpu.pipeline_mode<synchronous>, transform_indices = @transform_26, window_bounds = array<i64: 64, 32>}, {pipeline_mode = #tpu.pipeline_mode<synchronous>, transform_indices = @transform_27, window_bounds = array<i64: 1, 64>}, {pipeline_mode = #tpu.pipeline_mode<synchronous>, transform_indices = @transform_28, window_bounds = array<i64: 32, 64>}, {pipeline_mode = #tpu.pipeline_mode<synchronous>, transform_indices = @transform_29, window_bounds = array<i64: 1, 32>}, {transform_indices = @transform_30, window_bounds = array<i64: 1, 8, 32>}, {transform_indices = @transform_31, window_bounds = array<i64: 1, 4, 8, 8>}]} {
    %c0 = arith.constant 0 : index
    %c0_0 = arith.constant 0 : index
    %c0_1 = arith.constant 0 : index
    %0 = vector.load %arg1[%c0, %c0_0, %c0_1] : memref<1x8x32xf32, #tpu.memory_space<vmem>>, vector<1x8x32xf32>
    %1 = vector.shape_cast %0 : vector<1x8x32xf32> to vector<8x32xf32>
    %c0_2 = arith.constant 0 : index
    %c0_3 = arith.constant 0 : index
    %2 = vector.load %arg6[%c0_2, %c0_3] : memref<1x32xf32, #tpu.memory_space<vmem>>, vector<1x32xf32>
    %3 = vector.broadcast %2 : vector<1x32xf32> to vector<8x32xf32>
    %4 = arith.addf %1, %3 : vector<8x32xf32>
    %c0_4 = arith.constant 0 : index
    %c0_5 = arith.constant 0 : index
    %c0_6 = arith.constant 0 : index
    %5 = vector.load %arg2[%c0_4, %c0_5, %c0_6] : memref<1x8x32xbf16, #tpu.memory_space<vmem>>, vector<1x8x32xbf16>
    %6 = vector.shape_cast %5 : vector<1x8x32xbf16> to vector<8x32xbf16>
    %c0_7 = arith.constant 0 : index
    %c0_8 = arith.constant 0 : index
    %c0_9 = arith.constant 0 : index
    %7 = vector.load %arg3[%c0_7, %c0_8, %c0_9] : memref<1x8x8xf32, #tpu.memory_space<vmem>>, vector<1x8x8xf32>
    %8 = vector.shape_cast %7 : vector<1x8x8xf32> to vector<8x8xf32>
    %cst = arith.constant 0.000000e+00 : f32
    %9 = vector.broadcast %cst : f32 to vector<8x8xf32>
    %10 = arith.cmpf ogt, %8, %9 : vector<8x8xf32>
    %cst_10 = arith.constant -1.000000e+30 : f32
    %cst_11 = arith.constant 0.000000e+00 : f32
    %11 = vector.broadcast %cst_10 : f32 to vector<8x8xf32>
    %12 = vector.broadcast %cst_11 : f32 to vector<8x8xf32>
    %13 = arith.select %10, %11, %12 : vector<8x8xi1>, vector<8x8xf32>
    %c0_12 = arith.constant 0 : index
    %c0_13 = arith.constant 0 : index
    %c0_14 = arith.constant 0 : index
    %14 = vector.load %arg4[%c0_12, %c0_13, %c0_14] : memref<1x1x8xf32, #tpu.memory_space<vmem>>, vector<1x1x8xf32>
    %15 = vector.shape_cast %14 : vector<1x1x8xf32> to vector<1x8xf32>
    %cst_15 = arith.constant 0.000000e+00 : f32
    %16 = vector.broadcast %cst_15 : f32 to vector<1x8xf32>
    %17 = arith.cmpf ogt, %15, %16 : vector<1x8xf32>
    %cst_16 = arith.constant -1.000000e+30 : f32
    %cst_17 = arith.constant 0.000000e+00 : f32
    %18 = vector.broadcast %cst_16 : f32 to vector<1x8xf32>
    %19 = vector.broadcast %cst_17 : f32 to vector<1x8xf32>
    %20 = arith.select %17, %18, %19 : vector<1x8xi1>, vector<1x8xf32>
    %c0_18 = arith.constant 0 : index
    %c0_19 = arith.constant 0 : index
    %21 = vector.load %arg7[%c0_18, %c0_19] : memref<1x32xf32, #tpu.memory_space<vmem>>, vector<1x32xf32>
    %c0_20 = arith.constant 0 : index
    %c0_21 = arith.constant 0 : index
    %22 = vector.load %arg8[%c0_20, %c0_21] : memref<1x32xf32, #tpu.memory_space<vmem>>, vector<1x32xf32>
    %cst_22 = arith.constant dense<0.000000e+00> : vector<8xf32>
    %23 = vector.multi_reduction <add>, %4, %cst_22 [1] : vector<8x32xf32> to vector<8xf32>
    %24 = vector.shape_cast %23 : vector<8xf32> to vector<8x1xf32>
    %cst_23 = arith.constant 3.200000e+01 : f32
    %25 = vector.broadcast %cst_23 : f32 to vector<8x1xf32>
    %26 = arith.divf %24, %25 : vector<8x1xf32>
    %27 = vector.broadcast %26 : vector<8x1xf32> to vector<8x32xf32>
    %28 = arith.subf %4, %27 : vector<8x32xf32>
    %29 = arith.mulf %28, %28 : vector<8x32xf32>
    %cst_24 = arith.constant dense<0.000000e+00> : vector<8xf32>
    %30 = vector.multi_reduction <add>, %29, %cst_24 [1] : vector<8x32xf32> to vector<8xf32>
    %31 = vector.shape_cast %30 : vector<8xf32> to vector<8x1xf32>
    %cst_25 = arith.constant 3.200000e+01 : f32
    %32 = vector.broadcast %cst_25 : f32 to vector<8x1xf32>
    %33 = arith.divf %31, %32 : vector<8x1xf32>
    %34 = vector.broadcast %26 : vector<8x1xf32> to vector<8x32xf32>
    %35 = arith.subf %4, %34 : vector<8x32xf32>
    %cst_26 = arith.constant 9.99999974E-6 : f32
    %36 = vector.broadcast %cst_26 : f32 to vector<8x1xf32>
    %37 = arith.addf %33, %36 : vector<8x1xf32>
    %38 = math.rsqrt %37 : vector<8x1xf32>
    %39 = vector.broadcast %38 : vector<8x1xf32> to vector<8x32xf32>
    %40 = arith.mulf %35, %39 : vector<8x32xf32>
    %41 = vector.broadcast %21 : vector<1x32xf32> to vector<8x32xf32>
    %42 = arith.mulf %40, %41 : vector<8x32xf32>
    %43 = vector.broadcast %22 : vector<1x32xf32> to vector<8x32xf32>
    %44 = arith.addf %42, %43 : vector<8x32xf32>
    %c0_27 = arith.constant 0 : index
    %c0_28 = arith.constant 0 : index
    %45 = vector.load %arg9[%c0_27, %c0_28] : memref<96x32xbf16, #tpu.memory_space<vmem>>, vector<96x32xbf16>
    %c0_29 = arith.constant 0 : index
    %c0_30 = arith.constant 0 : index
    %46 = vector.load %arg10[%c0_29, %c0_30] : memref<1x96xf32, #tpu.memory_space<vmem>>, vector<1x96xf32>
    %47 = arith.truncf %44 : vector<8x32xf32> to vector<8x32xbf16>
    %cst_31 = arith.constant dense<0.000000e+00> : vector<8x96xf32>
    %48 = tpu.matmul %47, %45, %cst_31 {dimension_numbers = #tpu.dot_dimension_numbers<[1], [1], [0], [0], [0, 0, 1, 0], [], []>} : vector<8x32xbf16>, vector<96x32xbf16>, vector<8x96xf32> -> vector<8x96xf32>
    %49 = vector.broadcast %46 : vector<1x96xf32> to vector<8x96xf32>
    %50 = arith.addf %48, %49 : vector<8x96xf32>
    %c0_32 = arith.constant 0 : index
    %c0_33 = arith.constant 0 : index
    %51 = vector.load %arg5[%c0_32, %c0_33] : memref<8x32xf32, #tpu.memory_space<vmem>>, vector<8x32xf32>
    %c0_34 = arith.constant 0 : index
    %c0_35 = arith.constant 0 : index
    %52 = vector.load %arg11[%c0_34, %c0_35] : memref<32x32xbf16, #tpu.memory_space<vmem>>, vector<32x32xbf16>
    %c0_36 = arith.constant 0 : index
    %c0_37 = arith.constant 0 : index
    %53 = vector.load %arg12[%c0_36, %c0_37] : memref<1x32xf32, #tpu.memory_space<vmem>>, vector<1x32xf32>
    %54 = arith.truncf %51 : vector<8x32xf32> to vector<8x32xbf16>
    %cst_38 = arith.constant dense<0.000000e+00> : vector<8x32xf32>
    %55 = tpu.matmul %54, %52, %cst_38 {dimension_numbers = #tpu.dot_dimension_numbers<[1], [1], [0], [0], [0, 0, 1, 0], [], []>} : vector<8x32xbf16>, vector<32x32xbf16>, vector<8x32xf32> -> vector<8x32xf32>
    %56 = vector.broadcast %53 : vector<1x32xf32> to vector<8x32xf32>
    %57 = arith.addf %55, %56 : vector<8x32xf32>
    %58 = vector.extract_strided_slice %50 {offsets = [0, 0], sizes = [8, 32], strides = [1, 1]} : vector<8x96xf32> to vector<8x32xf32>
    %59 = vector.extract_strided_slice %58 {offsets = [0, 0], sizes = [8, 8], strides = [1, 1]} : vector<8x32xf32> to vector<8x8xf32>
    %60 = vector.extract_strided_slice %58 {offsets = [0, 8], sizes = [8, 8], strides = [1, 1]} : vector<8x32xf32> to vector<8x8xf32>
    %61 = vector.extract_strided_slice %58 {offsets = [0, 16], sizes = [8, 8], strides = [1, 1]} : vector<8x32xf32> to vector<8x8xf32>
    %62 = vector.extract_strided_slice %58 {offsets = [0, 24], sizes = [8, 8], strides = [1, 1]} : vector<8x32xf32> to vector<8x8xf32>
    %63 = vector.shape_cast %59 : vector<8x8xf32> to vector<1x8x8xf32>
    %64 = vector.shape_cast %60 : vector<8x8xf32> to vector<1x8x8xf32>
    %65 = vector.shape_cast %61 : vector<8x8xf32> to vector<1x8x8xf32>
    %66 = vector.shape_cast %62 : vector<8x8xf32> to vector<1x8x8xf32>
    %67 = tpu.concatenate %63, %64, %65, %66 in 0 : vector<1x8x8xf32>, vector<1x8x8xf32>, vector<1x8x8xf32>, vector<1x8x8xf32> -> vector<4x8x8xf32>
    %68 = vector.extract_strided_slice %50 {offsets = [0, 32], sizes = [8, 32], strides = [1, 1]} : vector<8x96xf32> to vector<8x32xf32>
    %69 = vector.extract_strided_slice %68 {offsets = [0, 0], sizes = [8, 8], strides = [1, 1]} : vector<8x32xf32> to vector<8x8xf32>
    %70 = vector.extract_strided_slice %68 {offsets = [0, 8], sizes = [8, 8], strides = [1, 1]} : vector<8x32xf32> to vector<8x8xf32>
    %71 = vector.extract_strided_slice %68 {offsets = [0, 16], sizes = [8, 8], strides = [1, 1]} : vector<8x32xf32> to vector<8x8xf32>
    %72 = vector.extract_strided_slice %68 {offsets = [0, 24], sizes = [8, 8], strides = [1, 1]} : vector<8x32xf32> to vector<8x8xf32>
    %73 = vector.shape_cast %69 : vector<8x8xf32> to vector<1x8x8xf32>
    %74 = vector.shape_cast %70 : vector<8x8xf32> to vector<1x8x8xf32>
    %75 = vector.shape_cast %71 : vector<8x8xf32> to vector<1x8x8xf32>
    %76 = vector.shape_cast %72 : vector<8x8xf32> to vector<1x8x8xf32>
    %77 = tpu.concatenate %73, %74, %75, %76 in 0 : vector<1x8x8xf32>, vector<1x8x8xf32>, vector<1x8x8xf32>, vector<1x8x8xf32> -> vector<4x8x8xf32>
    %78 = arith.truncf %77 : vector<4x8x8xf32> to vector<4x8x8xbf16>
    %79 = vector.extract_strided_slice %50 {offsets = [0, 64], sizes = [8, 32], strides = [1, 1]} : vector<8x96xf32> to vector<8x32xf32>
    %80 = vector.extract_strided_slice %79 {offsets = [0, 0], sizes = [8, 8], strides = [1, 1]} : vector<8x32xf32> to vector<8x8xf32>
    %81 = vector.extract_strided_slice %79 {offsets = [0, 8], sizes = [8, 8], strides = [1, 1]} : vector<8x32xf32> to vector<8x8xf32>
    %82 = vector.extract_strided_slice %79 {offsets = [0, 16], sizes = [8, 8], strides = [1, 1]} : vector<8x32xf32> to vector<8x8xf32>
    %83 = vector.extract_strided_slice %79 {offsets = [0, 24], sizes = [8, 8], strides = [1, 1]} : vector<8x32xf32> to vector<8x8xf32>
    %84 = vector.shape_cast %80 : vector<8x8xf32> to vector<1x8x8xf32>
    %85 = vector.shape_cast %81 : vector<8x8xf32> to vector<1x8x8xf32>
    %86 = vector.shape_cast %82 : vector<8x8xf32> to vector<1x8x8xf32>
    %87 = vector.shape_cast %83 : vector<8x8xf32> to vector<1x8x8xf32>
    %88 = tpu.concatenate %84, %85, %86, %87 in 0 : vector<1x8x8xf32>, vector<1x8x8xf32>, vector<1x8x8xf32>, vector<1x8x8xf32> -> vector<4x8x8xf32>
    %89 = arith.truncf %88 : vector<4x8x8xf32> to vector<4x8x8xbf16>
    %90 = vector.extract_strided_slice %57 {offsets = [0, 0], sizes = [8, 8], strides = [1, 1]} : vector<8x32xf32> to vector<8x8xf32>
    %91 = vector.extract_strided_slice %57 {offsets = [0, 8], sizes = [8, 8], strides = [1, 1]} : vector<8x32xf32> to vector<8x8xf32>
    %92 = vector.extract_strided_slice %57 {offsets = [0, 16], sizes = [8, 8], strides = [1, 1]} : vector<8x32xf32> to vector<8x8xf32>
    %93 = vector.extract_strided_slice %57 {offsets = [0, 24], sizes = [8, 8], strides = [1, 1]} : vector<8x32xf32> to vector<8x8xf32>
    %94 = vector.shape_cast %90 : vector<8x8xf32> to vector<1x8x8xf32>
    %95 = vector.shape_cast %91 : vector<8x8xf32> to vector<1x8x8xf32>
    %96 = vector.shape_cast %92 : vector<8x8xf32> to vector<1x8x8xf32>
    %97 = vector.shape_cast %93 : vector<8x8xf32> to vector<1x8x8xf32>
    %98 = tpu.concatenate %94, %95, %96, %97 in 0 : vector<1x8x8xf32>, vector<1x8x8xf32>, vector<1x8x8xf32>, vector<1x8x8xf32> -> vector<4x8x8xf32>
    %99 = arith.truncf %98 : vector<4x8x8xf32> to vector<4x8x8xbf16>
    %c0_39 = arith.constant 0 : index
    %c0_40 = arith.constant 0 : index
    %c0_41 = arith.constant 0 : index
    %100 = vector.load %arg13[%c0_39, %c0_40, %c0_41] : memref<4x1x8xf32, #tpu.memory_space<vmem>>, vector<4x1x8xf32>
    %101 = vector.broadcast %100 : vector<4x1x8xf32> to vector<4x8x8xf32>
    %102 = arith.addf %67, %101 : vector<4x8x8xf32>
    %103 = arith.truncf %102 : vector<4x8x8xf32> to vector<4x8x8xbf16>
    %c0_42 = arith.constant 0 : index
    %c0_43 = arith.constant 0 : index
    %c0_44 = arith.constant 0 : index
    %104 = vector.load %arg14[%c0_42, %c0_43, %c0_44] : memref<4x1x8xf32, #tpu.memory_space<vmem>>, vector<4x1x8xf32>
    %105 = vector.broadcast %104 : vector<4x1x8xf32> to vector<4x8x8xf32>
    %106 = arith.addf %67, %105 : vector<4x8x8xf32>
    %107 = arith.truncf %106 : vector<4x8x8xf32> to vector<4x8x8xbf16>
    "tpu.trace_start"() <{level = 10 : i32, message = "nid,njd->nij"}> : () -> ()
    %cst_45 = arith.constant dense<0.000000e+00> : vector<4x8x8xf32>
    %108 = tpu.matmul %103, %78, %cst_45 {dimension_numbers = #tpu.dot_dimension_numbers<[2], [2], [1], [1], [0, 0, 0, 1, 1, 1], [0], [0]>} : vector<4x8x8xbf16>, vector<4x8x8xbf16>, vector<4x8x8xf32> -> vector<4x8x8xf32>
    %cst_46 = arith.constant dense<0.000000e+00> : vector<4x8x8xf32>
    %109 = tpu.matmul %107, %99, %cst_46 {dimension_numbers = #tpu.dot_dimension_numbers<[2], [2], [1], [1], [0, 0, 0, 1, 1, 1], [0], [0]>} : vector<4x8x8xbf16>, vector<4x8x8xbf16>, vector<4x8x8xf32> -> vector<4x8x8xf32>
    %cst_47 = arith.constant 0.000000e+00 : f32
    "tpu.trace_stop"() : () -> ()
    %110 = vector.broadcast %cst_47 : f32 to vector<4x8x8xf32>
    %111 = tpu.concatenate %109, %110 in 2 : vector<4x8x8xf32>, vector<4x8x8xf32> -> vector<4x8x16xf32>
    %112 = vector.extract_strided_slice %111 {offsets = [0, 0, 7], sizes = [4, 1, 8], strides = [1, 1, 1]} : vector<4x8x16xf32> to vector<4x1x8xf32>
    %113 = vector.extract_strided_slice %111 {offsets = [0, 1, 6], sizes = [4, 1, 8], strides = [1, 1, 1]} : vector<4x8x16xf32> to vector<4x1x8xf32>
    %114 = vector.extract_strided_slice %111 {offsets = [0, 2, 5], sizes = [4, 1, 8], strides = [1, 1, 1]} : vector<4x8x16xf32> to vector<4x1x8xf32>
    %115 = vector.extract_strided_slice %111 {offsets = [0, 3, 4], sizes = [4, 1, 8], strides = [1, 1, 1]} : vector<4x8x16xf32> to vector<4x1x8xf32>
    %116 = vector.extract_strided_slice %111 {offsets = [0, 4, 3], sizes = [4, 1, 8], strides = [1, 1, 1]} : vector<4x8x16xf32> to vector<4x1x8xf32>
    %117 = vector.extract_strided_slice %111 {offsets = [0, 5, 2], sizes = [4, 1, 8], strides = [1, 1, 1]} : vector<4x8x16xf32> to vector<4x1x8xf32>
    %118 = vector.extract_strided_slice %111 {offsets = [0, 6, 1], sizes = [4, 1, 8], strides = [1, 1, 1]} : vector<4x8x16xf32> to vector<4x1x8xf32>
    %119 = vector.extract_strided_slice %111 {offsets = [0, 7, 0], sizes = [4, 1, 8], strides = [1, 1, 1]} : vector<4x8x16xf32> to vector<4x1x8xf32>
    %120 = tpu.concatenate %112, %113, %114, %115, %116, %117, %118, %119 in 1 : vector<4x1x8xf32>, vector<4x1x8xf32>, vector<4x1x8xf32>, vector<4x1x8xf32>, vector<4x1x8xf32>, vector<4x1x8xf32>, vector<4x1x8xf32>, vector<4x1x8xf32> -> vector<4x8x8xf32>
    %121 = arith.addf %108, %120 : vector<4x8x8xf32>
    %cst_48 = arith.constant 0.353553385 : f32
    %122 = vector.broadcast %cst_48 : f32 to vector<4x8x8xf32>
    %123 = arith.mulf %121, %122 : vector<4x8x8xf32>
    %124 = vector.shape_cast %13 : vector<8x8xf32> to vector<1x8x8xf32>
    %125 = vector.broadcast %124 : vector<1x8x8xf32> to vector<4x8x8xf32>
    %126 = arith.addf %123, %125 : vector<4x8x8xf32>
    %cst_49 = arith.constant dense<0xFF800000> : vector<4x8xf32>
    %127 = vector.multi_reduction <maximumf>, %126, %cst_49 [2] : vector<4x8x8xf32> to vector<4x8xf32>
    %128 = vector.shape_cast %127 : vector<4x8xf32> to vector<4x8x1xf32>
    %129 = vector.broadcast %128 : vector<4x8x1xf32> to vector<4x8x8xf32>
    %130 = arith.subf %126, %129 : vector<4x8x8xf32>
    %131 = math.exp %130 : vector<4x8x8xf32>
    %cst_50 = arith.constant dense<0.000000e+00> : vector<4x8xf32>
    %132 = vector.multi_reduction <add>, %131, %cst_50 [2] : vector<4x8x8xf32> to vector<4x8xf32>
    %133 = vector.shape_cast %132 : vector<4x8xf32> to vector<4x8x1xf32>
    %134 = tpu.reciprocal %133 {approx = true} : vector<4x8x1xf32> -> vector<4x8x1xf32>
    %135 = vector.broadcast %134 : vector<4x8x1xf32> to vector<4x8x8xf32>
    %136 = arith.mulf %131, %135 : vector<4x8x8xf32>
    %137 = arith.truncf %136 : vector<4x8x8xf32> to vector<4x8x8xbf16>
    "tpu.trace_start"() <{level = 10 : i32, message = "nij,njd->nid"}> : () -> ()
    %cst_51 = arith.constant dense<0.000000e+00> : vector<4x8x8xf32>
    %138 = tpu.matmul %137, %89, %cst_51 {dimension_numbers = #tpu.dot_dimension_numbers<[2], [1], [1], [2], [0, 0, 0, 1, 1, 2], [0], [0]>} : vector<4x8x8xbf16>, vector<4x8x8xbf16>, vector<4x8x8xf32> -> vector<4x8x8xf32>
    "tpu.trace_stop"() : () -> ()
    %139 = vector.extract_strided_slice %138 {offsets = [0, 0, 0], sizes = [1, 8, 8], strides = [1, 1, 1]} : vector<4x8x8xf32> to vector<1x8x8xf32>
    %140 = vector.shape_cast %139 : vector<1x8x8xf32> to vector<8x8xf32>
    %141 = vector.extract_strided_slice %138 {offsets = [1, 0, 0], sizes = [1, 8, 8], strides = [1, 1, 1]} : vector<4x8x8xf32> to vector<1x8x8xf32>
    %142 = vector.shape_cast %141 : vector<1x8x8xf32> to vector<8x8xf32>
    %143 = vector.extract_strided_slice %138 {offsets = [2, 0, 0], sizes = [1, 8, 8], strides = [1, 1, 1]} : vector<4x8x8xf32> to vector<1x8x8xf32>
    %144 = vector.shape_cast %143 : vector<1x8x8xf32> to vector<8x8xf32>
    %145 = vector.extract_strided_slice %138 {offsets = [3, 0, 0], sizes = [1, 8, 8], strides = [1, 1, 1]} : vector<4x8x8xf32> to vector<1x8x8xf32>
    %146 = vector.shape_cast %145 : vector<1x8x8xf32> to vector<8x8xf32>
    %147 = tpu.concatenate %140, %142, %144, %146 in 1 : vector<8x8xf32>, vector<8x8xf32>, vector<8x8xf32>, vector<8x8xf32> -> vector<8x32xf32>
    %c0_52 = arith.constant 0 : index
    %c0_53 = arith.constant 0 : index
    %148 = vector.load %arg15[%c0_52, %c0_53] : memref<32x32xbf16, #tpu.memory_space<vmem>>, vector<32x32xbf16>
    %c0_54 = arith.constant 0 : index
    %c0_55 = arith.constant 0 : index
    %149 = vector.load %arg16[%c0_54, %c0_55] : memref<1x32xf32, #tpu.memory_space<vmem>>, vector<1x32xf32>
    %150 = arith.truncf %147 : vector<8x32xf32> to vector<8x32xbf16>
    %cst_56 = arith.constant dense<0.000000e+00> : vector<8x32xf32>
    %151 = tpu.matmul %150, %148, %cst_56 {dimension_numbers = #tpu.dot_dimension_numbers<[1], [1], [0], [0], [0, 0, 1, 0], [], []>} : vector<8x32xbf16>, vector<32x32xbf16>, vector<8x32xf32> -> vector<8x32xf32>
    %152 = vector.broadcast %149 : vector<1x32xf32> to vector<8x32xf32>
    %153 = arith.addf %151, %152 : vector<8x32xf32>
    %154 = arith.addf %4, %153 : vector<8x32xf32>
    %c0_57 = arith.constant 0 : index
    %c0_58 = arith.constant 0 : index
    %155 = vector.load %arg17[%c0_57, %c0_58] : memref<1x32xf32, #tpu.memory_space<vmem>>, vector<1x32xf32>
    %c0_59 = arith.constant 0 : index
    %c0_60 = arith.constant 0 : index
    %156 = vector.load %arg18[%c0_59, %c0_60] : memref<1x32xf32, #tpu.memory_space<vmem>>, vector<1x32xf32>
    %cst_61 = arith.constant dense<0.000000e+00> : vector<8xf32>
    %157 = vector.multi_reduction <add>, %154, %cst_61 [1] : vector<8x32xf32> to vector<8xf32>
    %158 = vector.shape_cast %157 : vector<8xf32> to vector<8x1xf32>
    %cst_62 = arith.constant 3.200000e+01 : f32
    %159 = vector.broadcast %cst_62 : f32 to vector<8x1xf32>
    %160 = arith.divf %158, %159 : vector<8x1xf32>
    %161 = vector.broadcast %160 : vector<8x1xf32> to vector<8x32xf32>
    %162 = arith.subf %154, %161 : vector<8x32xf32>
    %163 = arith.mulf %162, %162 : vector<8x32xf32>
    %cst_63 = arith.constant dense<0.000000e+00> : vector<8xf32>
    %164 = vector.multi_reduction <add>, %163, %cst_63 [1] : vector<8x32xf32> to vector<8xf32>
    %165 = vector.shape_cast %164 : vector<8xf32> to vector<8x1xf32>
    %cst_64 = arith.constant 3.200000e+01 : f32
    %166 = vector.broadcast %cst_64 : f32 to vector<8x1xf32>
    %167 = arith.divf %165, %166 : vector<8x1xf32>
    %168 = vector.broadcast %160 : vector<8x1xf32> to vector<8x32xf32>
    %169 = arith.subf %154, %168 : vector<8x32xf32>
    %cst_65 = arith.constant 9.99999974E-6 : f32
    %170 = vector.broadcast %cst_65 : f32 to vector<8x1xf32>
    %171 = arith.addf %167, %170 : vector<8x1xf32>
    %172 = math.rsqrt %171 : vector<8x1xf32>
    %173 = vector.broadcast %172 : vector<8x1xf32> to vector<8x32xf32>
    %174 = arith.mulf %169, %173 : vector<8x32xf32>
    %175 = vector.broadcast %155 : vector<1x32xf32> to vector<8x32xf32>
    %176 = arith.mulf %174, %175 : vector<8x32xf32>
    %177 = vector.broadcast %156 : vector<1x32xf32> to vector<8x32xf32>
    %178 = arith.addf %176, %177 : vector<8x32xf32>
    %c0_66 = arith.constant 0 : index
    %c0_67 = arith.constant 0 : index
    %179 = vector.load %arg19[%c0_66, %c0_67] : memref<32x32xbf16, #tpu.memory_space<vmem>>, vector<32x32xbf16>
    %c0_68 = arith.constant 0 : index
    %c0_69 = arith.constant 0 : index
    %180 = vector.load %arg20[%c0_68, %c0_69] : memref<1x32xf32, #tpu.memory_space<vmem>>, vector<1x32xf32>
    %181 = arith.truncf %178 : vector<8x32xf32> to vector<8x32xbf16>
    %cst_70 = arith.constant dense<0.000000e+00> : vector<8x32xf32>
    %182 = tpu.matmul %181, %179, %cst_70 {dimension_numbers = #tpu.dot_dimension_numbers<[1], [1], [0], [0], [0, 0, 1, 0], [], []>} : vector<8x32xbf16>, vector<32x32xbf16>, vector<8x32xf32> -> vector<8x32xf32>
    %183 = vector.broadcast %180 : vector<1x32xf32> to vector<8x32xf32>
    %184 = arith.addf %182, %183 : vector<8x32xf32>
    %c0_71 = arith.constant 0 : index
    %c0_72 = arith.constant 0 : index
    %185 = vector.load %arg21[%c0_71, %c0_72] : memref<64x32xbf16, #tpu.memory_space<vmem>>, vector<64x32xbf16>
    %c0_73 = arith.constant 0 : index
    %c0_74 = arith.constant 0 : index
    %186 = vector.load %arg22[%c0_73, %c0_74] : memref<1x64xf32, #tpu.memory_space<vmem>>, vector<1x64xf32>
    %cst_75 = arith.constant dense<0.000000e+00> : vector<8x64xf32>
    %187 = tpu.matmul %6, %185, %cst_75 {dimension_numbers = #tpu.dot_dimension_numbers<[1], [1], [0], [0], [0, 0, 1, 0], [], []>} : vector<8x32xbf16>, vector<64x32xbf16>, vector<8x64xf32> -> vector<8x64xf32>
    %188 = vector.broadcast %186 : vector<1x64xf32> to vector<8x64xf32>
    %189 = arith.addf %187, %188 : vector<8x64xf32>
    %190 = vector.extract_strided_slice %184 {offsets = [0, 0], sizes = [8, 8], strides = [1, 1]} : vector<8x32xf32> to vector<8x8xf32>
    %191 = vector.extract_strided_slice %184 {offsets = [0, 8], sizes = [8, 8], strides = [1, 1]} : vector<8x32xf32> to vector<8x8xf32>
    %192 = vector.extract_strided_slice %184 {offsets = [0, 16], sizes = [8, 8], strides = [1, 1]} : vector<8x32xf32> to vector<8x8xf32>
    %193 = vector.extract_strided_slice %184 {offsets = [0, 24], sizes = [8, 8], strides = [1, 1]} : vector<8x32xf32> to vector<8x8xf32>
    %194 = vector.shape_cast %190 : vector<8x8xf32> to vector<1x8x8xf32>
    %195 = vector.shape_cast %191 : vector<8x8xf32> to vector<1x8x8xf32>
    %196 = vector.shape_cast %192 : vector<8x8xf32> to vector<1x8x8xf32>
    %197 = vector.shape_cast %193 : vector<8x8xf32> to vector<1x8x8xf32>
    %198 = tpu.concatenate %194, %195, %196, %197 in 0 : vector<1x8x8xf32>, vector<1x8x8xf32>, vector<1x8x8xf32>, vector<1x8x8xf32> -> vector<4x8x8xf32>
    %199 = arith.truncf %198 : vector<4x8x8xf32> to vector<4x8x8xbf16>
    %200 = vector.extract_strided_slice %189 {offsets = [0, 0], sizes = [8, 32], strides = [1, 1]} : vector<8x64xf32> to vector<8x32xf32>
    %201 = vector.extract_strided_slice %200 {offsets = [0, 0], sizes = [8, 8], strides = [1, 1]} : vector<8x32xf32> to vector<8x8xf32>
    %202 = vector.extract_strided_slice %200 {offsets = [0, 8], sizes = [8, 8], strides = [1, 1]} : vector<8x32xf32> to vector<8x8xf32>
    %203 = vector.extract_strided_slice %200 {offsets = [0, 16], sizes = [8, 8], strides = [1, 1]} : vector<8x32xf32> to vector<8x8xf32>
    %204 = vector.extract_strided_slice %200 {offsets = [0, 24], sizes = [8, 8], strides = [1, 1]} : vector<8x32xf32> to vector<8x8xf32>
    %205 = vector.shape_cast %201 : vector<8x8xf32> to vector<1x8x8xf32>
    %206 = vector.shape_cast %202 : vector<8x8xf32> to vector<1x8x8xf32>
    %207 = vector.shape_cast %203 : vector<8x8xf32> to vector<1x8x8xf32>
    %208 = vector.shape_cast %204 : vector<8x8xf32> to vector<1x8x8xf32>
    %209 = tpu.concatenate %205, %206, %207, %208 in 0 : vector<1x8x8xf32>, vector<1x8x8xf32>, vector<1x8x8xf32>, vector<1x8x8xf32> -> vector<4x8x8xf32>
    %210 = arith.truncf %209 : vector<4x8x8xf32> to vector<4x8x8xbf16>
    %211 = vector.extract_strided_slice %189 {offsets = [0, 32], sizes = [8, 32], strides = [1, 1]} : vector<8x64xf32> to vector<8x32xf32>
    %212 = vector.extract_strided_slice %211 {offsets = [0, 0], sizes = [8, 8], strides = [1, 1]} : vector<8x32xf32> to vector<8x8xf32>
    %213 = vector.extract_strided_slice %211 {offsets = [0, 8], sizes = [8, 8], strides = [1, 1]} : vector<8x32xf32> to vector<8x8xf32>
    %214 = vector.extract_strided_slice %211 {offsets = [0, 16], sizes = [8, 8], strides = [1, 1]} : vector<8x32xf32> to vector<8x8xf32>
    %215 = vector.extract_strided_slice %211 {offsets = [0, 24], sizes = [8, 8], strides = [1, 1]} : vector<8x32xf32> to vector<8x8xf32>
    %216 = vector.shape_cast %212 : vector<8x8xf32> to vector<1x8x8xf32>
    %217 = vector.shape_cast %213 : vector<8x8xf32> to vector<1x8x8xf32>
    %218 = vector.shape_cast %214 : vector<8x8xf32> to vector<1x8x8xf32>
    %219 = vector.shape_cast %215 : vector<8x8xf32> to vector<1x8x8xf32>
    %220 = tpu.concatenate %216, %217, %218, %219 in 0 : vector<1x8x8xf32>, vector<1x8x8xf32>, vector<1x8x8xf32>, vector<1x8x8xf32> -> vector<4x8x8xf32>
    %221 = arith.truncf %220 : vector<4x8x8xf32> to vector<4x8x8xbf16>
    "tpu.trace_start"() <{level = 10 : i32, message = "nid,njd->nij"}> : () -> ()
    %cst_76 = arith.constant dense<0.000000e+00> : vector<4x8x8xf32>
    %222 = tpu.matmul %199, %210, %cst_76 {dimension_numbers = #tpu.dot_dimension_numbers<[2], [2], [1], [1], [0, 0, 0, 1, 1, 1], [0], [0]>} : vector<4x8x8xbf16>, vector<4x8x8xbf16>, vector<4x8x8xf32> -> vector<4x8x8xf32>
    "tpu.trace_stop"() : () -> ()
    %cst_77 = arith.constant 0.353553385 : f32
    %223 = vector.broadcast %cst_77 : f32 to vector<4x8x8xf32>
    %224 = arith.mulf %222, %223 : vector<4x8x8xf32>
    %225 = vector.shape_cast %20 : vector<1x8xf32> to vector<1x1x8xf32>
    %226 = vector.broadcast %225 : vector<1x1x8xf32> to vector<4x8x8xf32>
    %227 = arith.addf %224, %226 : vector<4x8x8xf32>
    %cst_78 = arith.constant dense<0xFF800000> : vector<4x8xf32>
    %228 = vector.multi_reduction <maximumf>, %227, %cst_78 [2] : vector<4x8x8xf32> to vector<4x8xf32>
    %229 = vector.shape_cast %228 : vector<4x8xf32> to vector<4x8x1xf32>
    %230 = vector.broadcast %229 : vector<4x8x1xf32> to vector<4x8x8xf32>
    %231 = arith.subf %227, %230 : vector<4x8x8xf32>
    %232 = math.exp %231 : vector<4x8x8xf32>
    %cst_79 = arith.constant dense<0.000000e+00> : vector<4x8xf32>
    %233 = vector.multi_reduction <add>, %232, %cst_79 [2] : vector<4x8x8xf32> to vector<4x8xf32>
    %234 = vector.shape_cast %233 : vector<4x8xf32> to vector<4x8x1xf32>
    %235 = tpu.reciprocal %234 {approx = true} : vector<4x8x1xf32> -> vector<4x8x1xf32>
    %236 = vector.broadcast %235 : vector<4x8x1xf32> to vector<4x8x8xf32>
    %237 = arith.mulf %232, %236 : vector<4x8x8xf32>
    %c0_80 = arith.constant 0 : index
    %c0_81 = arith.constant 0 : index
    %c0_82 = arith.constant 0 : index
    %c0_83 = arith.constant 0 : index
    %238 = vector.load %arg32[%c0_80, %c0_81, %c0_82, %c0_83] : memref<1x4x8x8xf32, #tpu.memory_space<vmem>>, vector<1x4x8x8xf32>
    %239 = vector.shape_cast %238 : vector<1x4x8x8xf32> to vector<4x8x8xf32>
    %240 = vector.shape_cast %237 : vector<4x8x8xf32> to vector<1x4x8x8xf32>
    tpu.vector_store %arg32[%c0_80, %c0_81, %c0_82, %c0_83], %240 {strides = array<i32>} : memref<1x4x8x8xf32, #tpu.memory_space<vmem>>, vector<1x4x8x8xf32>,
    %241 = arith.truncf %237 : vector<4x8x8xf32> to vector<4x8x8xbf16>
    "tpu.trace_start"() <{level = 10 : i32, message = "nij,njd->nid"}> : () -> ()
    %cst_84 = arith.constant dense<0.000000e+00> : vector<4x8x8xf32>
    %242 = tpu.matmul %241, %221, %cst_84 {dimension_numbers = #tpu.dot_dimension_numbers<[2], [1], [1], [2], [0, 0, 0, 1, 1, 2], [0], [0]>} : vector<4x8x8xbf16>, vector<4x8x8xbf16>, vector<4x8x8xf32> -> vector<4x8x8xf32>
    "tpu.trace_stop"() : () -> ()
    %243 = vector.extract_strided_slice %242 {offsets = [0, 0, 0], sizes = [1, 8, 8], strides = [1, 1, 1]} : vector<4x8x8xf32> to vector<1x8x8xf32>
    %244 = vector.shape_cast %243 : vector<1x8x8xf32> to vector<8x8xf32>
    %245 = vector.extract_strided_slice %242 {offsets = [1, 0, 0], sizes = [1, 8, 8], strides = [1, 1, 1]} : vector<4x8x8xf32> to vector<1x8x8xf32>
    %246 = vector.shape_cast %245 : vector<1x8x8xf32> to vector<8x8xf32>
    %247 = vector.extract_strided_slice %242 {offsets = [2, 0, 0], sizes = [1, 8, 8], strides = [1, 1, 1]} : vector<4x8x8xf32> to vector<1x8x8xf32>
    %248 = vector.shape_cast %247 : vector<1x8x8xf32> to vector<8x8xf32>
    %249 = vector.extract_strided_slice %242 {offsets = [3, 0, 0], sizes = [1, 8, 8], strides = [1, 1, 1]} : vector<4x8x8xf32> to vector<1x8x8xf32>
    %250 = vector.shape_cast %249 : vector<1x8x8xf32> to vector<8x8xf32>
    %251 = tpu.concatenate %244, %246, %248, %250 in 1 : vector<8x8xf32>, vector<8x8xf32>, vector<8x8xf32>, vector<8x8xf32> -> vector<8x32xf32>
    %c0_85 = arith.constant 0 : index
    %c0_86 = arith.constant 0 : index
    %252 = vector.load %arg23[%c0_85, %c0_86] : memref<32x32xbf16, #tpu.memory_space<vmem>>, vector<32x32xbf16>
    %c0_87 = arith.constant 0 : index
    %c0_88 = arith.constant 0 : index
    %253 = vector.load %arg24[%c0_87, %c0_88] : memref<1x32xf32, #tpu.memory_space<vmem>>, vector<1x32xf32>
    %254 = arith.truncf %251 : vector<8x32xf32> to vector<8x32xbf16>
    %cst_89 = arith.constant dense<0.000000e+00> : vector<8x32xf32>
    %255 = tpu.matmul %254, %252, %cst_89 {dimension_numbers = #tpu.dot_dimension_numbers<[1], [1], [0], [0], [0, 0, 1, 0], [], []>} : vector<8x32xbf16>, vector<32x32xbf16>, vector<8x32xf32> -> vector<8x32xf32>
    %256 = vector.broadcast %253 : vector<1x32xf32> to vector<8x32xf32>
    %257 = arith.addf %255, %256 : vector<8x32xf32>
    %258 = arith.addf %154, %257 : vector<8x32xf32>
    %c0_90 = arith.constant 0 : index
    %c0_91 = arith.constant 0 : index
    %259 = vector.load %arg25[%c0_90, %c0_91] : memref<1x32xf32, #tpu.memory_space<vmem>>, vector<1x32xf32>
    %c0_92 = arith.constant 0 : index
    %c0_93 = arith.constant 0 : index
    %260 = vector.load %arg26[%c0_92, %c0_93] : memref<1x32xf32, #tpu.memory_space<vmem>>, vector<1x32xf32>
    %cst_94 = arith.constant dense<0.000000e+00> : vector<8xf32>
    %261 = vector.multi_reduction <add>, %258, %cst_94 [1] : vector<8x32xf32> to vector<8xf32>
    %262 = vector.shape_cast %261 : vector<8xf32> to vector<8x1xf32>
    %cst_95 = arith.constant 3.200000e+01 : f32
    %263 = vector.broadcast %cst_95 : f32 to vector<8x1xf32>
    %264 = arith.divf %262, %263 : vector<8x1xf32>
    %265 = vector.broadcast %264 : vector<8x1xf32> to vector<8x32xf32>
    %266 = arith.subf %258, %265 : vector<8x32xf32>
    %267 = arith.mulf %266, %266 : vector<8x32xf32>
    %cst_96 = arith.constant dense<0.000000e+00> : vector<8xf32>
    %268 = vector.multi_reduction <add>, %267, %cst_96 [1] : vector<8x32xf32> to vector<8xf32>
    %269 = vector.shape_cast %268 : vector<8xf32> to vector<8x1xf32>
    %cst_97 = arith.constant 3.200000e+01 : f32
    %270 = vector.broadcast %cst_97 : f32 to vector<8x1xf32>
    %271 = arith.divf %269, %270 : vector<8x1xf32>
    %272 = vector.broadcast %264 : vector<8x1xf32> to vector<8x32xf32>
    %273 = arith.subf %258, %272 : vector<8x32xf32>
    %cst_98 = arith.constant 9.99999974E-6 : f32
    %274 = vector.broadcast %cst_98 : f32 to vector<8x1xf32>
    %275 = arith.addf %271, %274 : vector<8x1xf32>
    %276 = math.rsqrt %275 : vector<8x1xf32>
    %277 = vector.broadcast %276 : vector<8x1xf32> to vector<8x32xf32>
    %278 = arith.mulf %273, %277 : vector<8x32xf32>
    %279 = vector.broadcast %259 : vector<1x32xf32> to vector<8x32xf32>
    %280 = arith.mulf %278, %279 : vector<8x32xf32>
    %281 = vector.broadcast %260 : vector<1x32xf32> to vector<8x32xf32>
    %282 = arith.addf %280, %281 : vector<8x32xf32>
    %c0_99 = arith.constant 0 : index
    %c0_100 = arith.constant 0 : index
    %283 = vector.load %arg27[%c0_99, %c0_100] : memref<64x32xbf16, #tpu.memory_space<vmem>>, vector<64x32xbf16>
    %c0_101 = arith.constant 0 : index
    %c0_102 = arith.constant 0 : index
    %284 = vector.load %arg28[%c0_101, %c0_102] : memref<1x64xf32, #tpu.memory_space<vmem>>, vector<1x64xf32>
    %285 = arith.truncf %282 : vector<8x32xf32> to vector<8x32xbf16>
    %cst_103 = arith.constant dense<0.000000e+00> : vector<8x64xf32>
    %286 = tpu.matmul %285, %283, %cst_103 {dimension_numbers = #tpu.dot_dimension_numbers<[1], [1], [0], [0], [0, 0, 1, 0], [], []>} : vector<8x32xbf16>, vector<64x32xbf16>, vector<8x64xf32> -> vector<8x64xf32>
    %287 = vector.broadcast %284 : vector<1x64xf32> to vector<8x64xf32>
    %288 = arith.addf %286, %287 : vector<8x64xf32>
    %cst_104 = arith.constant 0.000000e+00 : f32
    %289 = vector.broadcast %cst_104 : f32 to vector<8x64xf32>
    %290 = arith.maximumf %288, %289 : vector<8x64xf32>
    %c0_105 = arith.constant 0 : index
    %c0_106 = arith.constant 0 : index
    %291 = vector.load %arg29[%c0_105, %c0_106] : memref<32x64xbf16, #tpu.memory_space<vmem>>, vector<32x64xbf16>
    %c0_107 = arith.constant 0 : index
    %c0_108 = arith.constant 0 : index
    %292 = vector.load %arg30[%c0_107, %c0_108] : memref<1x32xf32, #tpu.memory_space<vmem>>, vector<1x32xf32>
    %293 = arith.truncf %290 : vector<8x64xf32> to vector<8x64xbf16>
    %cst_109 = arith.constant dense<0.000000e+00> : vector<8x32xf32>
    %294 = tpu.matmul %293, %291, %cst_109 {dimension_numbers = #tpu.dot_dimension_numbers<[1], [1], [0], [0], [0, 0, 1, 0], [], []>} : vector<8x64xbf16>, vector<32x64xbf16>, vector<8x32xf32> -> vector<8x32xf32>
    %295 = vector.broadcast %292 : vector<1x32xf32> to vector<8x32xf32>
    %296 = arith.addf %294, %295 : vector<8x32xf32>
    %297 = arith.addf %258, %296 : vector<8x32xf32>
    %c0_110 = arith.constant 0 : index
    %c0_111 = arith.constant 0 : index
    %c0_112 = arith.constant 0 : index
    %298 = vector.load %arg31[%c0_110, %c0_111, %c0_112] : memref<1x8x32xf32, #tpu.memory_space<vmem>>, vector<1x8x32xf32>
    %299 = vector.shape_cast %298 : vector<1x8x32xf32> to vector<8x32xf32>
    %300 = vector.shape_cast %297 : vector<8x32xf32> to vector<1x8x32xf32>
    tpu.vector_store %arg31[%c0_110, %c0_111, %c0_112], %300 {strides = array<i32>} : memref<1x8x32xf32, #tpu.memory_space<vmem>>, vector<1x8x32xf32>,
    return
  }
  func.func @transform_0(%arg0: i32) -> (i32, i32, i32) {
    %c0_i32 = arith.constant 0 : i32
    %c0_i32_0 = arith.constant 0 : i32
    %c0_i32_1 = arith.constant 0 : i32
    return %arg0, %c0_i32, %c0_i32_0 : i32, i32, i32
  }
  func.func @transform_1(%arg0: i32) -> (i32, i32, i32) {
    %c0_i32 = arith.constant 0 : i32
    %c0_i32_0 = arith.constant 0 : i32
    %c0_i32_1 = arith.constant 0 : i32
    return %arg0, %c0_i32, %c0_i32_0 : i32, i32, i32
  }
  func.func @transform_2(%arg0: i32) -> (i32, i32, i32) {
    %c0_i32 = arith.constant 0 : i32
    %c0_i32_0 = arith.constant 0 : i32
    %c0_i32_1 = arith.constant 0 : i32
    return %arg0, %c0_i32, %c0_i32_0 : i32, i32, i32
  }
  func.func @transform_3(%arg0: i32) -> (i32, i32, i32) {
    %c0_i32 = arith.constant 0 : i32
    %c0_i32_0 = arith.constant 0 : i32
    %c0_i32_1 = arith.constant 0 : i32
    return %arg0, %c0_i32, %c0_i32_0 : i32, i32, i32
  }
  func.func @transform_4(%arg0: i32) -> (i32, i32) {
    %c0_i32 = arith.constant 0 : i32
    %c0_i32_0 = arith.constant 0 : i32
    %c0_i32_1 = arith.constant 0 : i32
    return %c0_i32, %c0_i32_0 : i32, i32
  }
  func.func @transform_5(%arg0: i32) -> (i32, i32) {
    %c0_i32 = arith.constant 0 : i32
    %c0_i32_0 = arith.constant 0 : i32
    %c0_i32_1 = arith.constant 0 : i32
    return %c0_i32, %c0_i32_0 : i32, i32
  }
  func.func @transform_6(%arg0: i32) -> (i32, i32) {
    %c0_i32 = arith.constant 0 : i32
    %c0_i32_0 = arith.constant 0 : i32
    %c0_i32_1 = arith.constant 0 : i32
    return %c0_i32, %c0_i32_0 : i32, i32
  }
  func.func @transform_7(%arg0: i32) -> (i32, i32) {
    %c0_i32 = arith.constant 0 : i32
    %c0_i32_0 = arith.constant 0 : i32
    %c0_i32_1 = arith.constant 0 : i32
    return %c0_i32, %c0_i32_0 : i32, i32
  }
  func.func @transform_8(%arg0: i32) -> (i32, i32) {
    %c0_i32 = arith.constant 0 : i32
    %c0_i32_0 = arith.constant 0 : i32
    %c0_i32_1 = arith.constant 0 : i32
    return %c0_i32, %c0_i32_0 : i32, i32
  }
  func.func @transform_9(%arg0: i32) -> (i32, i32) {
    %c0_i32 = arith.constant 0 : i32
    %c0_i32_0 = arith.constant 0 : i32
    %c0_i32_1 = arith.constant 0 : i32
    return %c0_i32, %c0_i32_0 : i32, i32
  }
  func.func @transform_10(%arg0: i32) -> (i32, i32) {
    %c0_i32 = arith.constant 0 : i32
    %c0_i32_0 = arith.constant 0 : i32
    %c0_i32_1 = arith.constant 0 : i32
    return %c0_i32, %c0_i32_0 : i32, i32
  }
  func.func @transform_11(%arg0: i32) -> (i32, i32) {
    %c0_i32 = arith.constant 0 : i32
    %c0_i32_0 = arith.constant 0 : i32
    %c0_i32_1 = arith.constant 0 : i32
    return %c0_i32, %c0_i32_0 : i32, i32
  }
  func.func @transform_12(%arg0: i32) -> (i32, i32, i32) {
    %c0_i32 = arith.constant 0 : i32
    %c0_i32_0 = arith.constant 0 : i32
    %c0_i32_1 = arith.constant 0 : i32
    %c0_i32_2 = arith.constant 0 : i32
    return %c0_i32, %c0_i32_0, %c0_i32_1 : i32, i32, i32
  }
  func.func @transform_13(%arg0: i32) -> (i32, i32, i32) {
    %c0_i32 = arith.constant 0 : i32
    %c0_i32_0 = arith.constant 0 : i32
    %c0_i32_1 = arith.constant 0 : i32
    %c0_i32_2 = arith.constant 0 : i32
    return %c0_i32, %c0_i32_0, %c0_i32_1 : i32, i32, i32
  }
  func.func @transform_14(%arg0: i32) -> (i32, i32) {
    %c0_i32 = arith.constant 0 : i32
    %c0_i32_0 = arith.constant 0 : i32
    %c0_i32_1 = arith.constant 0 : i32
    return %c0_i32, %c0_i32_0 : i32, i32
  }
  func.func @transform_15(%arg0: i32) -> (i32, i32) {
    %c0_i32 = arith.constant 0 : i32
    %c0_i32_0 = arith.constant 0 : i32
    %c0_i32_1 = arith.constant 0 : i32
    return %c0_i32, %c0_i32_0 : i32, i32
  }
  func.func @transform_16(%arg0: i32) -> (i32, i32) {
    %c0_i32 = arith.constant 0 : i32
    %c0_i32_0 = arith.constant 0 : i32
    %c0_i32_1 = arith.constant 0 : i32
    return %c0_i32, %c0_i32_0 : i32, i32
  }
  func.func @transform_17(%arg0: i32) -> (i32, i32) {
    %c0_i32 = arith.constant 0 : i32
    %c0_i32_0 = arith.constant 0 : i32
    %c0_i32_1 = arith.constant 0 : i32
    return %c0_i32, %c0_i32_0 : i32, i32
  }
  func.func @transform_18(%arg0: i32) -> (i32, i32) {
    %c0_i32 = arith.constant 0 : i32
    %c0_i32_0 = arith.constant 0 : i32
    %c0_i32_1 = arith.constant 0 : i32
    return %c0_i32, %c0_i32_0 : i32, i32
  }
  func.func @transform_19(%arg0: i32) -> (i32, i32) {
    %c0_i32 = arith.constant 0 : i32
    %c0_i32_0 = arith.constant 0 : i32
    %c0_i32_1 = arith.constant 0 : i32
    return %c0_i32, %c0_i32_0 : i32, i32
  }
  func.func @transform_20(%arg0: i32) -> (i32, i32) {
    %c0_i32 = arith.constant 0 : i32
    %c0_i32_0 = arith.constant 0 : i32
    %c0_i32_1 = arith.constant 0 : i32
    return %c0_i32, %c0_i32_0 : i32, i32
  }
  func.func @transform_21(%arg0: i32) -> (i32, i32) {
    %c0_i32 = arith.constant 0 : i32
    %c0_i32_0 = arith.constant 0 : i32
    %c0_i32_1 = arith.constant 0 : i32
    return %c0_i32, %c0_i32_0 : i32, i32
  }
  func.func @transform_22(%arg0: i32) -> (i32, i32) {
    %c0_i32 = arith.constant 0 : i32
    %c0_i32_0 = arith.constant 0 : i32
    %c0_i32_1 = arith.constant 0 : i32
    return %c0_i32, %c0_i32_0 : i32, i32
  }
  func.func @transform_23(%arg0: i32) -> (i32, i32) {
    %c0_i32 = arith.constant 0 : i32
    %c0_i32_0 = arith.constant 0 : i32
    %c0_i32_1 = arith.constant 0 : i32
    return %c0_i32, %c0_i32_0 : i32, i32
  }
  func.func @transform_24(%arg0: i32) -> (i32, i32) {
    %c0_i32 = arith.constant 0 : i32
    %c0_i32_0 = arith.constant 0 : i32
    %c0_i32_1 = arith.constant 0 : i32
    return %c0_i32, %c0_i32_0 : i32, i32
  }
  func.func @transform_25(%arg0: i32) -> (i32, i32) {
    %c0_i32 = arith.constant 0 : i32
    %c0_i32_0 = arith.constant 0 : i32
    %c0_i32_1 = arith.constant 0 : i32
    return %c0_i32, %c0_i32_0 : i32, i32
  }
  func.func @transform_26(%arg0: i32) -> (i32, i32) {
    %c0_i32 = arith.constant 0 : i32
    %c0_i32_0 = arith.constant 0 : i32
    %c0_i32_1 = arith.constant 0 : i32
    return %c0_i32, %c0_i32_0 : i32, i32
  }
  func.func @transform_27(%arg0: i32) -> (i32, i32) {
    %c0_i32 = arith.constant 0 : i32
    %c0_i32_0 = arith.constant 0 : i32
    %c0_i32_1 = arith.constant 0 : i32
    return %c0_i32, %c0_i32_0 : i32, i32
  }
  func.func @transform_28(%arg0: i32) -> (i32, i32) {
    %c0_i32 = arith.constant 0 : i32
    %c0_i32_0 = arith.constant 0 : i32
    %c0_i32_1 = arith.constant 0 : i32
    return %c0_i32, %c0_i32_0 : i32, i32
  }
  func.func @transform_29(%arg0: i32) -> (i32, i32) {
    %c0_i32 = arith.constant 0 : i32
    %c0_i32_0 = arith.constant 0 : i32
    %c0_i32_1 = arith.constant 0 : i32
    return %c0_i32, %c0_i32_0 : i32, i32
  }
  func.func @transform_30(%arg0: i32) -> (i32, i32, i32) {
    %c0_i32 = arith.constant 0 : i32
    %c0_i32_0 = arith.constant 0 : i32
    %c0_i32_1 = arith.constant 0 : i32
    return %arg0, %c0_i32, %c0_i32_0 : i32, i32, i32
  }
  func.func @transform_31(%arg0: i32) -> (i32, i32, i32, i32) {
    %c0_i32 = arith.constant 0 : i32
    %c0_i32_0 = arith.constant 0 : i32
    %c0_i32_1 = arith.constant 0 : i32
    %c0_i32_2 = arith.constant 0 : i32
    return %arg0, %c0_i32, %c0_i32_0, %c0_i32_1 : i32, i32, i32, i32
  }
}

</mosaic_0001>

<llo_original>
// kernel: tpu_custom_call.1
$region0: #{tpu_custom_call.1}
  #allocation0 [shape = 'u32[]', space=smem, size = 0x4, offset = 0x4, fixed_abs, tag = 'smem constant byte address 0x4 - core index']
  #allocation1 [shape = 'u32[144,128]{1,0:T(1,128)}', space=vmem, size = 0x12000, scoped, tag = 'internal scratch']
  %s0 = inlined_call_operand.smem [shape: u32[32], index: -1, kind: input, shape index: {}]
  %s1 = sld [smem:[%s0]]
  %s2 = scalar_lea.smem %s0, 1
  %s3 = sld [smem:[%s2]]
  %s4 = scalar_lea.smem %s0, 2
  %s5 = sld [smem:[%s4]]
  %s6 = scalar_lea.smem %s0, 3
  %s7 = sld [smem:[%s6]]
  %s8 = scalar_lea.smem %s0, 4
  %s9 = sld [smem:[%s8]]
  %s10 = scalar_lea.smem %s0, 5
  %s11 = sld [smem:[%s10]]
  %s12 = scalar_lea.smem %s0, 6
  %s13 = sld [smem:[%s12]]
  %s14 = scalar_lea.smem %s0, 7
  %s15 = sld [smem:[%s14]]
  %s16 = scalar_lea.smem %s0, 8
  %s17 = sld [smem:[%s16]]
  %s18 = scalar_lea.smem %s0, 9
  %s19 = sld [smem:[%s18]]
  %s20 = scalar_lea.smem %s0, 10
  %s21 = sld [smem:[%s20]]
  %s22 = scalar_lea.smem %s0, 11
  %s23 = sld [smem:[%s22]]
  %s24 = scalar_lea.smem %s0, 12
  %s25 = sld [smem:[%s24]]
  %s26 = scalar_lea.smem %s0, 13
  %s27 = sld [smem:[%s26]]
  %s28 = scalar_lea.smem %s0, 14
  %s29 = sld [smem:[%s28]]
  %s30 = scalar_lea.smem %s0, 15
  %s31 = sld [smem:[%s30]]
  %s32 = scalar_lea.smem %s0, 16
  %s33 = sld [smem:[%s32]]
  %s34 = scalar_lea.smem %s0, 17
  %s35 = sld [smem:[%s34]]
  %s36 = scalar_lea.smem %s0, 18
  %s37 = sld [smem:[%s36]]
  %s38 = scalar_lea.smem %s0, 19
  %s39 = sld [smem:[%s38]]
  %s40 = scalar_lea.smem %s0, 20
  %s41 = sld [smem:[%s40]]
  %s42 = scalar_lea.smem %s0, 21
  %s43 = sld [smem:[%s42]]
  %s44 = scalar_lea.smem %s0, 22
  %s45 = sld [smem:[%s44]]
  %s46 = scalar_lea.smem %s0, 23
  %s47 = sld [smem:[%s46]]
  %s48 = scalar_lea.smem %s0, 24
  %s49 = sld [smem:[%s48]]
  %s50 = scalar_lea.smem %s0, 25
  %s51 = sld [smem:[%s50]]
  %s52 = scalar_lea.smem %s0, 26
  %s53 = sld [smem:[%s52]]
  %s54 = scalar_lea.smem %s0, 27
  %s55 = sld [smem:[%s54]]
  %s56 = scalar_lea.smem %s0, 28
  %s57 = sld [smem:[%s56]]
  %s58 = scalar_lea.smem %s0, 29
  %s59 = sld [smem:[%s58]]
  %s60 = scalar_lea.smem %s0, 30
  %s61 = sld [smem:[%s60]]
  %s62 = scalar_lea.smem %s0, 31
  %s63 = sld [smem:[%s62]]
  %64 = xla_tuple %s61, %s63
  %s65 = sld [smem:[#allocation0]]
  $region161: #{tpu_custom_call.1} parent=0
    _
  %s67 = ssub.s32 1, %s65
  %s68 = scalar_select 0, %s67, %s65
  $region1: #{tpu_custom_call.1} parent=0
    #allocation2 [shape = 'u8[8192]{0}', space=vmem, size = 0x2000, scoped, tag = 'output window, operand 0']
    #allocation3 [shape = 's32[2]{0}', space=sflag, size = 0x8, scoped, tag = 'scoped memory for tpu_custom_call.1']
    #allocation4 [shape = 'u8[32768]{0}', space=vmem, size = 0x8000, scoped, tag = 'output window, operand 1']
    #allocation5 [shape = 's32[2]{0}', space=sflag, size = 0x8, scoped, tag = 'scoped memory for tpu_custom_call.1']
    %69 = vsyncpa [#allocation3], 0
    %s70 = scalar_lea.sflag [#allocation3], 1
    %71 = vsyncpa %s70, 0
    %72 = vsyncpa [#allocation5], 0
    %s73 = scalar_lea.sflag [#allocation5], 1
    %74 = vsyncpa %s73, 0
    loop: start=0, step=1, limit=4
    $region2: #{tpu_custom_call.1} parent=1 // loop_pre_header
      _
    $region3: #{tpu_custom_call.1} parent=1 // loop_header
      %s76 = sphi 0, %s80
      %p77 = scmp.ge.s32.totalorder %s76, 4
      %s86 = sphi 0, %s88
      %s89 = sphi 0, %s86
      %s90 = sphi 0, %s89
      %s106 = sphi 0, %s90
      %s112 = sphi 0, %s114
      %s115 = sphi 0, %s112
      %s116 = sphi 0, %s115
      %s132 = sphi 0, %s116
      %s138 = sphi 0, %s140
      %s141 = sphi 0, %s138
      %s142 = sphi 0, %s141
      %s158 = sphi 0, %s142
      %s164 = sphi 0, %s166
      %s167 = sphi 0, %s164
      %s168 = sphi 0, %s167
      %s184 = sphi 0, %s168
      %s188 = sphi 0, %s188
      %s190 = sphi 0, %s188
      %s191 = sphi 0, %s190
      %s205 = sphi 0, %s191
      %s209 = sphi 0, %s209
      %s211 = sphi 0, %s209
      %s212 = sphi 0, %s211
      %s226 = sphi 0, %s212
      %s230 = sphi 0, %s230
      %s232 = sphi 0, %s230
      %s233 = sphi 0, %s232
      %s247 = sphi 0, %s233
      %s251 = sphi 0, %s251
      %s253 = sphi 0, %s251
      %s254 = sphi 0, %s253
      %s268 = sphi 0, %s254
      %s272 = sphi 0, %s272
      %s274 = sphi 0, %s272
      %s275 = sphi 0, %s274
      %s289 = sphi 0, %s275
      %s293 = sphi 0, %s293
      %s295 = sphi 0, %s293
      %s296 = sphi 0, %s295
      %s310 = sphi 0, %s296
      %s314 = sphi 0, %s314
      %s316 = sphi 0, %s314
      %s317 = sphi 0, %s316
      %s331 = sphi 0, %s317
      %s335 = sphi 0, %s335
      %s337 = sphi 0, %s335
      %s338 = sphi 0, %s337
      %s352 = sphi 0, %s338
      %s356 = sphi 0, %s356
      %s358 = sphi 0, %s356
      %s359 = sphi 0, %s358
      %s373 = sphi 0, %s359
      %s377 = sphi 0, %s377
      %s379 = sphi 0, %s377
      %s380 = sphi 0, %s379
      %s394 = sphi 0, %s380
      %s398 = sphi 0, %s398
      %s400 = sphi 0, %s398
      %s401 = sphi 0, %s400
      %s415 = sphi 0, %s401
      %s419 = sphi 0, %s419
      %s421 = sphi 0, %s419
      %s422 = sphi 0, %s421
      %s436 = sphi 0, %s422
      %s440 = sphi 0, %s440
      %s442 = sphi 0, %s440
      %s443 = sphi 0, %s442
      %s457 = sphi 0, %s443
      %s461 = sphi 0, %s461
      %s463 = sphi 0, %s461
      %s464 = sphi 0, %s463
      %s478 = sphi 0, %s464
      %s482 = sphi 0, %s482
      %s484 = sphi 0, %s482
      %s485 = sphi 0, %s484
      %s499 = sphi 0, %s485
      %s503 = sphi 0, %s503
      %s505 = sphi 0, %s503
      %s506 = sphi 0, %s505
      %s520 = sphi 0, %s506
      %s524 = sphi 0, %s524
      %s526 = sphi 0, %s524
      %s527 = sphi 0, %s526
      %s541 = sphi 0, %s527
      %s545 = sphi 0, %s545
      %s547 = sphi 0, %s545
      %s548 = sphi 0, %s547
      %s562 = sphi 0, %s548
      %s566 = sphi 0, %s566
      %s568 = sphi 0, %s566
      %s569 = sphi 0, %s568
      %s583 = sphi 0, %s569
      %s587 = sphi 0, %s587
      %s589 = sphi 0, %s587
      %s590 = sphi 0, %s589
      %s604 = sphi 0, %s590
      %s608 = sphi 0, %s608
      %s610 = sphi 0, %s608
      %s611 = sphi 0, %s610
      %s625 = sphi 0, %s611
      %s629 = sphi 0, %s629
      %s631 = sphi 0, %s629
      %s632 = sphi 0, %s631
      %s646 = sphi 0, %s632
      %s650 = sphi 0, %s650
      %s652 = sphi 0, %s650
      %s653 = sphi 0, %s652
      %s667 = sphi 0, %s653
      %s671 = sphi 0, %s671
      %s673 = sphi 0, %s671
      %s674 = sphi 0, %s673
      %s688 = sphi 0, %s674
      %s692 = sphi 0, %s692
      %s694 = sphi 0, %s692
      %s695 = sphi 0, %s694
      %s709 = sphi 0, %s695
      %s713 = sphi 0, %s713
      %s715 = sphi 0, %s713
      %s716 = sphi 0, %s715
      %s730 = sphi 0, %s716
      %s736 = sphi 0, %s738
      %s739 = sphi 0, %s736
      %s740 = sphi 0, %s739
      %s756 = sphi 0, %s740
      %s762 = sphi 0, %s764
      %s765 = sphi 0, %s762
      %s766 = sphi 0, %s765
      %s782 = sphi 0, %s766
    $region4: #{tpu_custom_call.1} parent=1 // loop_header_branch
      %79 = sbr.rel (%p77) target = $region8
    $region5: #{tpu_custom_call.1} parent=1 // loop_body
      %s81 = ssub.s32 %s76, 1
      %s82 = ssub.s32 %s76, 2
      %s83 = sadd.s32 %s76, 1
      %s84 = ssub.s32 %s76, %s83
      %p85 = scmp.eq.s32.totalorder %s84, 0
      %s87 = sadd.s32 %s86, 1
      %s88 = scalar_select %p85, %s86, %s87
      %p91 = pneg %p85
      %p92 = scmp.eq.s32.totalorder %s76, 1
      %p93 = por %p91, %p92
      %p94 = scmp.ne.s32.totalorder %s86, %s89
      %p95 = scmp.eq.s32.totalorder %s76, 0
      %p96 = por %p94, %p95
      %p97 = scmp.ne.s32.totalorder %s86, %s89
      %p98 = scmp.eq.s32.totalorder %s81, 1
      %p99 = por %p97, %p98
      %p100 = scmp.ne.s32.totalorder %s89, %s90
      %p101 = scmp.eq.s32.totalorder %s81, 0
      %p102 = por %p100, %p101
      %p103 = scmp.ne.s32.totalorder %s89, %s90
      %p104 = scmp.eq.s32.totalorder %s82, 1
      %p105 = por %p103, %p104
      %p107 = scmp.ne.s32.totalorder %s90, %s106
      %p108 = scmp.eq.s32.totalorder %s82, 0
      %p109 = por %p107, %p108
      %s110 = ssub.s32 %s76, %s83
      %p111 = scmp.eq.s32.totalorder %s110, 0
      %s113 = sadd.s32 %s112, 1
      %s114 = scalar_select %p111, %s112, %s113
      %p117 = pneg %p111
      %p118 = scmp.eq.s32.totalorder %s76, 1
      %p119 = por %p117, %p118
      %p120 = scmp.ne.s32.totalorder %s112, %s115
      %p121 = scmp.eq.s32.totalorder %s76, 0
      %p122 = por %p120, %p121
      %p123 = scmp.ne.s32.totalorder %s112, %s115
      %p124 = scmp.eq.s32.totalorder %s81, 1
      %p125 = por %p123, %p124
      %p126 = scmp.ne.s32.totalorder %s115, %s116
      %p127 = scmp.eq.s32.totalorder %s81, 0
      %p128 = por %p126, %p127
      %p129 = scmp.ne.s32.totalorder %s115, %s116
      %p130 = scmp.eq.s32.totalorder %s82, 1
      %p131 = por %p129, %p130
      %p133 = scmp.ne.s32.totalorder %s116, %s132
      %p134 = scmp.eq.s32.totalorder %s82, 0
      %p135 = por %p133, %p134
      %s136 = ssub.s32 %s76, %s83
      %p137 = scmp.eq.s32.totalorder %s136, 0
      %s139 = sadd.s32 %s138, 1
      %s140 = scalar_select %p137, %s138, %s139
      %p143 = pneg %p137
      %p144 = scmp.eq.s32.totalorder %s76, 1
      %p145 = por %p143, %p144
      %p146 = scmp.ne.s32.totalorder %s138, %s141
      %p147 = scmp.eq.s32.totalorder %s76, 0
      %p148 = por %p146, %p147
      %p149 = scmp.ne.s32.totalorder %s138, %s141
      %p150 = scmp.eq.s32.totalorder %s81, 1
      %p151 = por %p149, %p150
      %p152 = scmp.ne.s32.totalorder %s141, %s142
      %p153 = scmp.eq.s32.totalorder %s81, 0
      %p154 = por %p152, %p153
      %p155 = scmp.ne.s32.totalorder %s141, %s142
      %p156 = scmp.eq.s32.totalorder %s82, 1
      %p157 = por %p155, %p156
      %p159 = scmp.ne.s32.totalorder %s142, %s158
      %p160 = scmp.eq.s32.totalorder %s82, 0
      %p161 = por %p159, %p160
      %s162 = ssub.s32 %s76, %s83
      %p163 = scmp.eq.s32.totalorder %s162, 0
      %s165 = sadd.s32 %s164, 1
      %s166 = scalar_select %p163, %s164, %s165
      %p169 = pneg %p163
      %p170 = scmp.eq.s32.totalorder %s76, 1
      %p171 = por %p169, %p170
      %p172 = scmp.ne.s32.totalorder %s164, %s167
      %p173 = scmp.eq.s32.totalorder %s76, 0
      %p174 = por %p172, %p173
      %p175 = scmp.ne.s32.totalorder %s164, %s167
      %p176 = scmp.eq.s32.totalorder %s81, 1
      %p177 = por %p175, %p176
      %p178 = scmp.ne.s32.totalorder %s167, %s168
      %p179 = scmp.eq.s32.totalorder %s81, 0
      %p180 = por %p178, %p179
      %p181 = scmp.ne.s32.totalorder %s167, %s168
      %p182 = scmp.eq.s32.totalorder %s82, 1
      %p183 = por %p181, %p182
      %p185 = scmp.ne.s32.totalorder %s168, %s184
      %p186 = scmp.eq.s32.totalorder %s82, 0
      %p187 = por %p185, %p186
      %s189 = sadd.s32 %s188, 1
      %p192 = scmp.eq.s32.totalorder %s76, 1
      %p193 = scmp.ne.s32.totalorder %s188, %s190
      %p194 = scmp.eq.s32.totalorder %s76, 0
      %p195 = por %p193, %p194
      %p196 = scmp.ne.s32.totalorder %s188, %s190
      %p197 = scmp.eq.s32.totalorder %s81, 1
      %p198 = por %p196, %p197
      %p199 = scmp.ne.s32.totalorder %s190, %s191
      %p200 = scmp.eq.s32.totalorder %s81, 0
      %p201 = por %p199, %p200
      %p202 = scmp.ne.s32.totalorder %s190, %s191
      %p203 = scmp.eq.s32.totalorder %s82, 1
      %p204 = por %p202, %p203
      %p206 = scmp.ne.s32.totalorder %s191, %s205
      %p207 = scmp.eq.s32.totalorder %s82, 0
      %p208 = por %p206, %p207
      %s210 = sadd.s32 %s209, 1
      %p213 = scmp.eq.s32.totalorder %s76, 1
      %p214 = scmp.ne.s32.totalorder %s209, %s211
      %p215 = scmp.eq.s32.totalorder %s76, 0
      %p216 = por %p214, %p215
      %p217 = scmp.ne.s32.totalorder %s209, %s211
      %p218 = scmp.eq.s32.totalorder %s81, 1
      %p219 = por %p217, %p218
      %p220 = scmp.ne.s32.totalorder %s211, %s212
      %p221 = scmp.eq.s32.totalorder %s81, 0
      %p222 = por %p220, %p221
      %p223 = scmp.ne.s32.totalorder %s211, %s212
      %p224 = scmp.eq.s32.totalorder %s82, 1
      %p225 = por %p223, %p224
      %p227 = scmp.ne.s32.totalorder %s212, %s226
      %p228 = scmp.eq.s32.totalorder %s82, 0
      %p229 = por %p227, %p228
      %s231 = sadd.s32 %s230, 1
      %p234 = scmp.eq.s32.totalorder %s76, 1
      %p235 = scmp.ne.s32.totalorder %s230, %s232
      %p236 = scmp.eq.s32.totalorder %s76, 0
      %p237 = por %p235, %p236
      %p238 = scmp.ne.s32.totalorder %s230, %s232
      %p239 = scmp.eq.s32.totalorder %s81, 1
      %p240 = por %p238, %p239
      %p241 = scmp.ne.s32.totalorder %s232, %s233
      %p242 = scmp.eq.s32.totalorder %s81, 0
      %p243 = por %p241, %p242
      %p244 = scmp.ne.s32.totalorder %s232, %s233
      %p245 = scmp.eq.s32.totalorder %s82, 1
      %p246 = por %p244, %p245
      %p248 = scmp.ne.s32.totalorder %s233, %s247
      %p249 = scmp.eq.s32.totalorder %s82, 0
      %p250 = por %p248, %p249
      %s252 = sadd.s32 %s251, 1
      %p255 = scmp.eq.s32.totalorder %s76, 1
      %p256 = scmp.ne.s32.totalorder %s251, %s253
      %p257 = scmp.eq.s32.totalorder %s76, 0
      %p258 = por %p256, %p257
      %p259 = scmp.ne.s32.totalorder %s251, %s253
      %p260 = scmp.eq.s32.totalorder %s81, 1
      %p261 = por %p259, %p260
      %p262 = scmp.ne.s32.totalorder %s253, %s254
      %p263 = scmp.eq.s32.totalorder %s81, 0
      %p264 = por %p262, %p263
      %p265 = scmp.ne.s32.totalorder %s253, %s254
      %p266 = scmp.eq.s32.totalorder %s82, 1
      %p267 = por %p265, %p266
      %p269 = scmp.ne.s32.totalorder %s254, %s268
      %p270 = scmp.eq.s32.totalorder %s82, 0
      %p271 = por %p269, %p270
      %s273 = sadd.s32 %s272, 1
      %p276 = scmp.eq.s32.totalorder %s76, 1
      %p277 = scmp.ne.s32.totalorder %s272, %s274
      %p278 = scmp.eq.s32.totalorder %s76, 0
      %p279 = por %p277, %p278
      %p280 = scmp.ne.s32.totalorder %s272, %s274
      %p281 = scmp.eq.s32.totalorder %s81, 1
      %p282 = por %p280, %p281
      %p283 = scmp.ne.s32.totalorder %s274, %s275
      %p284 = scmp.eq.s32.totalorder %s81, 0
      %p285 = por %p283, %p284
      %p286 = scmp.ne.s32.totalorder %s274, %s275
      %p287 = scmp.eq.s32.totalorder %s82, 1
      %p288 = por %p286, %p287
      %p290 = scmp.ne.s32.totalorder %s275, %s289
      %p291 = scmp.eq.s32.totalorder %s82, 0
      %p292 = por %p290, %p291
      %s294 = sadd.s32 %s293, 1
      %p297 = scmp.eq.s32.totalorder %s76, 1
      %p298 = scmp.ne.s32.totalorder %s293, %s295
      %p299 = scmp.eq.s32.totalorder %s76, 0
      %p300 = por %p298, %p299
      %p301 = scmp.ne.s32.totalorder %s293, %s295
      %p302 = scmp.eq.s32.totalorder %s81, 1
      %p303 = por %p301, %p302
      %p304 = scmp.ne.s32.totalorder %s295, %s296
      %p305 = scmp.eq.s32.totalorder %s81, 0
      %p306 = por %p304, %p305
      %p307 = scmp.ne.s32.totalorder %s295, %s296
      %p308 = scmp.eq.s32.totalorder %s82, 1
      %p309 = por %p307, %p308
      %p311 = scmp.ne.s32.totalorder %s296, %s310
      %p312 = scmp.eq.s32.totalorder %s82, 0
      %p313 = por %p311, %p312
      %s315 = sadd.s32 %s314, 1
      %p318 = scmp.eq.s32.totalorder %s76, 1
      %p319 = scmp.ne.s32.totalorder %s314, %s316
      %p320 = scmp.eq.s32.totalorder %s76, 0
      %p321 = por %p319, %p320
      %p322 = scmp.ne.s32.totalorder %s314, %s316
      %p323 = scmp.eq.s32.totalorder %s81, 1
      %p324 = por %p322, %p323
      %p325 = scmp.ne.s32.totalorder %s316, %s317
      %p326 = scmp.eq.s32.totalorder %s81, 0
      %p327 = por %p325, %p326
      %p328 = scmp.ne.s32.totalorder %s316, %s317
      %p329 = scmp.eq.s32.totalorder %s82, 1
      %p330 = por %p328, %p329
      %p332 = scmp.ne.s32.totalorder %s317, %s331
      %p333 = scmp.eq.s32.totalorder %s82, 0
      %p334 = por %p332, %p333
      %s336 = sadd.s32 %s335, 1
      %p339 = scmp.eq.s32.totalorder %s76, 1
      %p340 = scmp.ne.s32.totalorder %s335, %s337
      %p341 = scmp.eq.s32.totalorder %s76, 0
      %p342 = por %p340, %p341
      %p343 = scmp.ne.s32.totalorder %s335, %s337
      %p344 = scmp.eq.s32.totalorder %s81, 1
      %p345 = por %p343, %p344
      %p346 = scmp.ne.s32.totalorder %s337, %s338
      %p347 = scmp.eq.s32.totalorder %s81, 0
      %p348 = por %p346, %p347
      %p349 = scmp.ne.s32.totalorder %s337, %s338
      %p350 = scmp.eq.s32.totalorder %s82, 1
      %p351 = por %p349, %p350
      %p353 = scmp.ne.s32.totalorder %s338, %s352
      %p354 = scmp.eq.s32.totalorder %s82, 0
      %p355 = por %p353, %p354
      %s357 = sadd.s32 %s356, 1
      %p360 = scmp.eq.s32.totalorder %s76, 1
      %p361 = scmp.ne.s32.totalorder %s356, %s358
      %p362 = scmp.eq.s32.totalorder %s76, 0
      %p363 = por %p361, %p362
      %p364 = scmp.ne.s32.totalorder %s356, %s358
      %p365 = scmp.eq.s32.totalorder %s81, 1
      %p366 = por %p364, %p365
      %p367 = scmp.ne.s32.totalorder %s358, %s359
      %p368 = scmp.eq.s32.totalorder %s81, 0
      %p369 = por %p367, %p368
      %p370 = scmp.ne.s32.totalorder %s358, %s359
      %p371 = scmp.eq.s32.totalorder %s82, 1
      %p372 = por %p370, %p371
      %p374 = scmp.ne.s32.totalorder %s359, %s373
      %p375 = scmp.eq.s32.totalorder %s82, 0
      %p376 = por %p374, %p375
      %s378 = sadd.s32 %s377, 1
      %p381 = scmp.eq.s32.totalorder %s76, 1
      %p382 = scmp.ne.s32.totalorder %s377, %s379
      %p383 = scmp.eq.s32.totalorder %s76, 0
      %p384 = por %p382, %p383
      %p385 = scmp.ne.s32.totalorder %s377, %s379
      %p386 = scmp.eq.s32.totalorder %s81, 1
      %p387 = por %p385, %p386
      %p388 = scmp.ne.s32.totalorder %s379, %s380
      %p389 = scmp.eq.s32.totalorder %s81, 0
      %p390 = por %p388, %p389
      %p391 = scmp.ne.s32.totalorder %s379, %s380
      %p392 = scmp.eq.s32.totalorder %s82, 1
      %p393 = por %p391, %p392
      %p395 = scmp.ne.s32.totalorder %s380, %s394
      %p396 = scmp.eq.s32.totalorder %s82, 0
      %p397 = por %p395, %p396
      %s399 = sadd.s32 %s398, 1
      %p402 = scmp.eq.s32.totalorder %s76, 1
      %p403 = scmp.ne.s32.totalorder %s398, %s400
      %p404 = scmp.eq.s32.totalorder %s76, 0
      %p405 = por %p403, %p404
      %p406 = scmp.ne.s32.totalorder %s398, %s400
      %p407 = scmp.eq.s32.totalorder %s81, 1
      %p408 = por %p406, %p407
      %p409 = scmp.ne.s32.totalorder %s400, %s401
      %p410 = scmp.eq.s32.totalorder %s81, 0
      %p411 = por %p409, %p410
      %p412 = scmp.ne.s32.totalorder %s400, %s401
      %p413 = scmp.eq.s32.totalorder %s82, 1
      %p414 = por %p412, %p413
      %p416 = scmp.ne.s32.totalorder %s401, %s415
      %p417 = scmp.eq.s32.totalorder %s82, 0
      %p418 = por %p416, %p417
      %s420 = sadd.s32 %s419, 1
      %p423 = scmp.eq.s32.totalorder %s76, 1
      %p424 = scmp.ne.s32.totalorder %s419, %s421
      %p425 = scmp.eq.s32.totalorder %s76, 0
      %p426 = por %p424, %p425
      %p427 = scmp.ne.s32.totalorder %s419, %s421
      %p428 = scmp.eq.s32.totalorder %s81, 1
      %p429 = por %p427, %p428
      %p430 = scmp.ne.s32.totalorder %s421, %s422
      %p431 = scmp.eq.s32.totalorder %s81, 0
      %p432 = por %p430, %p431
      %p433 = scmp.ne.s32.totalorder %s421, %s422
      %p434 = scmp.eq.s32.totalorder %s82, 1
      %p435 = por %p433, %p434
      %p437 = scmp.ne.s32.totalorder %s422, %s436
      %p438 = scmp.eq.s32.totalorder %s82, 0
      %p439 = por %p437, %p438
      %s441 = sadd.s32 %s440, 1
      %p444 = scmp.eq.s32.totalorder %s76, 1
      %p445 = scmp.ne.s32.totalorder %s440, %s442
      %p446 = scmp.eq.s32.totalorder %s76, 0
      %p447 = por %p445, %p446
      %p448 = scmp.ne.s32.totalorder %s440, %s442
      %p449 = scmp.eq.s32.totalorder %s81, 1
      %p450 = por %p448, %p449
      %p451 = scmp.ne.s32.totalorder %s442, %s443
      %p452 = scmp.eq.s32.totalorder %s81, 0
      %p453 = por %p451, %p452
      %p454 = scmp.ne.s32.totalorder %s442, %s443
      %p455 = scmp.eq.s32.totalorder %s82, 1
      %p456 = por %p454, %p455
      %p458 = scmp.ne.s32.totalorder %s443, %s457
      %p459 = scmp.eq.s32.totalorder %s82, 0
      %p460 = por %p458, %p459
      %s462 = sadd.s32 %s461, 1
      %p465 = scmp.eq.s32.totalorder %s76, 1
      %p466 = scmp.ne.s32.totalorder %s461, %s463
      %p467 = scmp.eq.s32.totalorder %s76, 0
      %p468 = por %p466, %p467
      %p469 = scmp.ne.s32.totalorder %s461, %s463
      %p470 = scmp.eq.s32.totalorder %s81, 1
      %p471 = por %p469, %p470
      %p472 = scmp.ne.s32.totalorder %s463, %s464
      %p473 = scmp.eq.s32.totalorder %s81, 0
      %p474 = por %p472, %p473
      %p475 = scmp.ne.s32.totalorder %s463, %s464
      %p476 = scmp.eq.s32.totalorder %s82, 1
      %p477 = por %p475, %p476
      %p479 = scmp.ne.s32.totalorder %s464, %s478
      %p480 = scmp.eq.s32.totalorder %s82, 0
      %p481 = por %p479, %p480
      %s483 = sadd.s32 %s482, 1
      %p486 = scmp.eq.s32.totalorder %s76, 1
      %p487 = scmp.ne.s32.totalorder %s482, %s484
      %p488 = scmp.eq.s32.totalorder %s76, 0
      %p489 = por %p487, %p488
      %p490 = scmp.ne.s32.totalorder %s482, %s484
      %p491 = scmp.eq.s32.totalorder %s81, 1
      %p492 = por %p490, %p491
      %p493 = scmp.ne.s32.totalorder %s484, %s485
      %p494 = scmp.eq.s32.totalorder %s81, 0
      %p495 = por %p493, %p494
      %p496 = scmp.ne.s32.totalorder %s484, %s485
      %p497 = scmp.eq.s32.totalorder %s82, 1
      %p498 = por %p496, %p497
      %p500 = scmp.ne.s32.totalorder %s485, %s499
      %p501 = scmp.eq.s32.totalorder %s82, 0
      %p502 = por %p500, %p501
      %s504 = sadd.s32 %s503, 1
      %p507 = scmp.eq.s32.totalorder %s76, 1
      %p508 = scmp.ne.s32.totalorder %s503, %s505
      %p509 = scmp.eq.s32.totalorder %s76, 0
      %p510 = por %p508, %p509
      %p511 = scmp.ne.s32.totalorder %s503, %s505
      %p512 = scmp.eq.s32.totalorder %s81, 1
      %p513 = por %p511, %p512
      %p514 = scmp.ne.s32.totalorder %s505, %s506
      %p515 = scmp.eq.s32.totalorder %s81, 0
      %p516 = por %p514, %p515
      %p517 = scmp.ne.s32.totalorder %s505, %s506
      %p518 = scmp.eq.s32.totalorder %s82, 1
      %p519 = por %p517, %p518
      %p521 = scmp.ne.s32.totalorder %s506, %s520
      %p522 = scmp.eq.s32.totalorder %s82, 0
      %p523 = por %p521, %p522
      %s525 = sadd.s32 %s524, 1
      %p528 = scmp.eq.s32.totalorder %s76, 1
      %p529 = scmp.ne.s32.totalorder %s524, %s526
      %p530 = scmp.eq.s32.totalorder %s76, 0
      %p531 = por %p529, %p530
      %p532 = scmp.ne.s32.totalorder %s524, %s526
      %p533 = scmp.eq.s32.totalorder %s81, 1
      %p534 = por %p532, %p533
      %p535 = scmp.ne.s32.totalorder %s526, %s527
      %p536 = scmp.eq.s32.totalorder %s81, 0
      %p537 = por %p535, %p536
      %p538 = scmp.ne.s32.totalorder %s526, %s527
      %p539 = scmp.eq.s32.totalorder %s82, 1
      %p540 = por %p538, %p539
      %p542 = scmp.ne.s32.totalorder %s527, %s541
      %p543 = scmp.eq.s32.totalorder %s82, 0
      %p544 = por %p542, %p543
      %s546 = sadd.s32 %s545, 1
      %p549 = scmp.eq.s32.totalorder %s76, 1
      %p550 = scmp.ne.s32.totalorder %s545, %s547
      %p551 = scmp.eq.s32.totalorder %s76, 0
      %p552 = por %p550, %p551
      %p553 = scmp.ne.s32.totalorder %s545, %s547
      %p554 = scmp.eq.s32.totalorder %s81, 1
      %p555 = por %p553, %p554
      %p556 = scmp.ne.s32.totalorder %s547, %s548
      %p557 = scmp.eq.s32.totalorder %s81, 0
      %p558 = por %p556, %p557
      %p559 = scmp.ne.s32.totalorder %s547, %s548
      %p560 = scmp.eq.s32.totalorder %s82, 1
      %p561 = por %p559, %p560
      %p563 = scmp.ne.s32.totalorder %s548, %s562
      %p564 = scmp.eq.s32.totalorder %s82, 0
      %p565 = por %p563, %p564
      %s567 = sadd.s32 %s566, 1
      %p570 = scmp.eq.s32.totalorder %s76, 1
      %p571 = scmp.ne.s32.totalorder %s566, %s568
      %p572 = scmp.eq.s32.totalorder %s76, 0
      %p573 = por %p571, %p572
      %p574 = scmp.ne.s32.totalorder %s566, %s568
      %p575 = scmp.eq.s32.totalorder %s81, 1
      %p576 = por %p574, %p575
      %p577 = scmp.ne.s32.totalorder %s568, %s569
      %p578 = scmp.eq.s32.totalorder %s81, 0
      %p579 = por %p577, %p578
      %p580 = scmp.ne.s32.totalorder %s568, %s569
      %p581 = scmp.eq.s32.totalorder %s82, 1
      %p582 = por %p580, %p581
      %p584 = scmp.ne.s32.totalorder %s569, %s583
      %p585 = scmp.eq.s32.totalorder %s82, 0
      %p586 = por %p584, %p585
      %s588 = sadd.s32 %s587, 1
      %p591 = scmp.eq.s32.totalorder %s76, 1
      %p592 = scmp.ne.s32.totalorder %s587, %s589
      %p593 = scmp.eq.s32.totalorder %s76, 0
      %p594 = por %p592, %p593
      %p595 = scmp.ne.s32.totalorder %s587, %s589
      %p596 = scmp.eq.s32.totalorder %s81, 1
      %p597 = por %p595, %p596
      %p598 = scmp.ne.s32.totalorder %s589, %s590
      %p599 = scmp.eq.s32.totalorder %s81, 0
      %p600 = por %p598, %p599
      %p601 = scmp.ne.s32.totalorder %s589, %s590
      %p602 = scmp.eq.s32.totalorder %s82, 1
      %p603 = por %p601, %p602
      %p605 = scmp.ne.s32.totalorder %s590, %s604
      %p606 = scmp.eq.s32.totalorder %s82, 0
      %p607 = por %p605, %p606
      %s609 = sadd.s32 %s608, 1
      %p612 = scmp.eq.s32.totalorder %s76, 1
      %p613 = scmp.ne.s32.totalorder %s608, %s610
      %p614 = scmp.eq.s32.totalorder %s76, 0
      %p615 = por %p613, %p614
      %p616 = scmp.ne.s32.totalorder %s608, %s610
      %p617 = scmp.eq.s32.totalorder %s81, 1
      %p618 = por %p616, %p617
      %p619 = scmp.ne.s32.totalorder %s610, %s611
      %p620 = scmp.eq.s32.totalorder %s81, 0
      %p621 = por %p619, %p620
      %p622 = scmp.ne.s32.totalorder %s610, %s611
      %p623 = scmp.eq.s32.totalorder %s82, 1
      %p624 = por %p622, %p623
      %p626 = scmp.ne.s32.totalorder %s611, %s625
      %p627 = scmp.eq.s32.totalorder %s82, 0
      %p628 = por %p626, %p627
      %s630 = sadd.s32 %s629, 1
      %p633 = scmp.eq.s32.totalorder %s76, 1
      %p634 = scmp.ne.s32.totalorder %s629, %s631
      %p635 = scmp.eq.s32.totalorder %s76, 0
      %p636 = por %p634, %p635
      %p637 = scmp.ne.s32.totalorder %s629, %s631
      %p638 = scmp.eq.s32.totalorder %s81, 1
      %p639 = por %p637, %p638
      %p640 = scmp.ne.s32.totalorder %s631, %s632
      %p641 = scmp.eq.s32.totalorder %s81, 0
      %p642 = por %p640, %p641
      %p643 = scmp.ne.s32.totalorder %s631, %s632
      %p644 = scmp.eq.s32.totalorder %s82, 1
      %p645 = por %p643, %p644
      %p647 = scmp.ne.s32.totalorder %s632, %s646
      %p648 = scmp.eq.s32.totalorder %s82, 0
      %p649 = por %p647, %p648
      %s651 = sadd.s32 %s650, 1
      %p654 = scmp.eq.s32.totalorder %s76, 1
      %p655 = scmp.ne.s32.totalorder %s650, %s652
      %p656 = scmp.eq.s32.totalorder %s76, 0
      %p657 = por %p655, %p656
      %p658 = scmp.ne.s32.totalorder %s650, %s652
      %p659 = scmp.eq.s32.totalorder %s81, 1
      %p660 = por %p658, %p659
      %p661 = scmp.ne.s32.totalorder %s652, %s653
      %p662 = scmp.eq.s32.totalorder %s81, 0
      %p663 = por %p661, %p662
      %p664 = scmp.ne.s32.totalorder %s652, %s653
      %p665 = scmp.eq.s32.totalorder %s82, 1
      %p666 = por %p664, %p665
      %p668 = scmp.ne.s32.totalorder %s653, %s667
      %p669 = scmp.eq.s32.totalorder %s82, 0
      %p670 = por %p668, %p669
      %s672 = sadd.s32 %s671, 1
      %p675 = scmp.eq.s32.totalorder %s76, 1
      %p676 = scmp.ne.s32.totalorder %s671, %s673
      %p677 = scmp.eq.s32.totalorder %s76, 0
      %p678 = por %p676, %p677
      %p679 = scmp.ne.s32.totalorder %s671, %s673
      %p680 = scmp.eq.s32.totalorder %s81, 1
      %p681 = por %p679, %p680
      %p682 = scmp.ne.s32.totalorder %s673, %s674
      %p683 = scmp.eq.s32.totalorder %s81, 0
      %p684 = por %p682, %p683
      %p685 = scmp.ne.s32.totalorder %s673, %s674
      %p686 = scmp.eq.s32.totalorder %s82, 1
      %p687 = por %p685, %p686
      %p689 = scmp.ne.s32.totalorder %s674, %s688
      %p690 = scmp.eq.s32.totalorder %s82, 0
      %p691 = por %p689, %p690
      %s693 = sadd.s32 %s692, 1
      %p696 = scmp.eq.s32.totalorder %s76, 1
      %p697 = scmp.ne.s32.totalorder %s692, %s694
      %p698 = scmp.eq.s32.totalorder %s76, 0
      %p699 = por %p697, %p698
      %p700 = scmp.ne.s32.totalorder %s692, %s694
      %p701 = scmp.eq.s32.totalorder %s81, 1
      %p702 = por %p700, %p701
      %p703 = scmp.ne.s32.totalorder %s694, %s695
      %p704 = scmp.eq.s32.totalorder %s81, 0
      %p705 = por %p703, %p704
      %p706 = scmp.ne.s32.totalorder %s694, %s695
      %p707 = scmp.eq.s32.totalorder %s82, 1
      %p708 = por %p706, %p707
      %p710 = scmp.ne.s32.totalorder %s695, %s709
      %p711 = scmp.eq.s32.totalorder %s82, 0
      %p712 = por %p710, %p711
      %s714 = sadd.s32 %s713, 1
      %p717 = scmp.eq.s32.totalorder %s76, 1
      %p718 = scmp.ne.s32.totalorder %s713, %s715
      %p719 = scmp.eq.s32.totalorder %s76, 0
      %p720 = por %p718, %p719
      %p721 = scmp.ne.s32.totalorder %s713, %s715
      %p722 = scmp.eq.s32.totalorder %s81, 1
      %p723 = por %p721, %p722
      %p724 = scmp.ne.s32.totalorder %s715, %s716
      %p725 = scmp.eq.s32.totalorder %s81, 0
      %p726 = por %p724, %p725
      %p727 = scmp.ne.s32.totalorder %s715, %s716
      %p728 = scmp.eq.s32.totalorder %s82, 1
      %p729 = por %p727, %p728
      %p731 = scmp.ne.s32.totalorder %s716, %s730
      %p732 = scmp.eq.s32.totalorder %s82, 0
      %p733 = por %p731, %p732
      %s734 = ssub.s32 %s76, %s83
      %p735 = scmp.eq.s32.totalorder %s734, 0
      %s737 = sadd.s32 %s736, 1
      %s738 = scalar_select %p735, %s736, %s737
      %p741 = pneg %p735
      %p742 = scmp.eq.s32.totalorder %s76, 1
      %p743 = por %p741, %p742
      %p744 = scmp.ne.s32.totalorder %s736, %s739
      %p745 = scmp.eq.s32.totalorder %s76, 0
      %p746 = por %p744, %p745
      %p747 = scmp.ne.s32.totalorder %s736, %s739
      %p748 = scmp.eq.s32.totalorder %s81, 1
      %p749 = por %p747, %p748
      %p750 = scmp.ne.s32.totalorder %s739, %s740
      %p751 = scmp.eq.s32.totalorder %s81, 0
      %p752 = por %p750, %p751
      %p753 = scmp.ne.s32.totalorder %s739, %s740
      %p754 = scmp.eq.s32.totalorder %s82, 1
      %p755 = por %p753, %p754
      %p757 = scmp.ne.s32.totalorder %s740, %s756
      %p758 = scmp.eq.s32.totalorder %s82, 0
      %p759 = por %p757, %p758
      %s760 = ssub.s32 %s76, %s83
      %p761 = scmp.eq.s32.totalorder %s760, 0
      %s763 = sadd.s32 %s762, 1
      %s764 = scalar_select %p761, %s762, %s763
      %p767 = pneg %p761
      %p768 = scmp.eq.s32.totalorder %s76, 1
      %p769 = por %p767, %p768
      %p770 = scmp.ne.s32.totalorder %s762, %s765
      %p771 = scmp.eq.s32.totalorder %s76, 0
      %p772 = por %p770, %p771
      %p773 = scmp.ne.s32.totalorder %s762, %s765
      %p774 = scmp.eq.s32.totalorder %s81, 1
      %p775 = por %p773, %p774
      %p776 = scmp.ne.s32.totalorder %s765, %s766
      %p777 = scmp.eq.s32.totalorder %s81, 0
      %p778 = por %p776, %p777
      %p779 = scmp.ne.s32.totalorder %s765, %s766
      %p780 = scmp.eq.s32.totalorder %s82, 1
      %p781 = por %p779, %p780
      %p783 = scmp.ne.s32.totalorder %s766, %s782
      %p784 = scmp.eq.s32.totalorder %s82, 0
      %p785 = por %p783, %p784
      %p786 = scmp.le.s32.totalorder 1, %s76
      %p787 = scmp.lt.s32.totalorder %s76, 3
      %p788 = pnand %p786, %p787
      %p789 = pneg %p788
      // Predicated region
      $region9: #{tpu_custom_call.1} parent=5 // pred_check
        _
      $region10: #{tpu_custom_call.1} parent=5 // pred_check_branch
        %791 = sbr.rel (%p788) target = $region12
      $region11: #{tpu_custom_call.1} parent=5 // pred_region
        %s792 = ssub.s32 %s76, 1
        // Predicated region
        $region13: #{tpu_custom_call.1} parent=11 // pred_check
          %p793 = pneg %p201
        $region14: #{tpu_custom_call.1} parent=11 // pred_check_branch
          %795 = sbr.rel (%p793) target = $region16
        $region15: #{tpu_custom_call.1} parent=11 // pred_region
          _
        $region16: #{tpu_custom_call.1} parent=11 // pred_fallthru
          _
        // Predicated region
        $region17: #{tpu_custom_call.1} parent=11 // pred_check
          %p796 = pneg %p222
        $region18: #{tpu_custom_call.1} parent=11 // pred_check_branch
          %798 = sbr.rel (%p796) target = $region20
        $region19: #{tpu_custom_call.1} parent=11 // pred_region
          _
        $region20: #{tpu_custom_call.1} parent=11 // pred_fallthru
          _
        // Predicated region
        $region21: #{tpu_custom_call.1} parent=11 // pred_check
          %p799 = pneg %p243
        $region22: #{tpu_custom_call.1} parent=11 // pred_check_branch
          %801 = sbr.rel (%p799) target = $region24
        $region23: #{tpu_custom_call.1} parent=11 // pred_region
          _
        $region24: #{tpu_custom_call.1} parent=11 // pred_fallthru
          _
        // Predicated region
        $region25: #{tpu_custom_call.1} parent=11 // pred_check
          %p802 = pneg %p264
        $region26: #{tpu_custom_call.1} parent=11 // pred_check_branch
          %804 = sbr.rel (%p802) target = $region28
        $region27: #{tpu_custom_call.1} parent=11 // pred_region
          _
        $region28: #{tpu_custom_call.1} parent=11 // pred_fallthru
          _
        // Predicated region
        $region29: #{tpu_custom_call.1} parent=11 // pred_check
          %p805 = pneg %p285
        $region30: #{tpu_custom_call.1} parent=11 // pred_check_branch
          %807 = sbr.rel (%p805) target = $region32
        $region31: #{tpu_custom_call.1} parent=11 // pred_region
          _
        $region32: #{tpu_custom_call.1} parent=11 // pred_fallthru
          _
        // Predicated region
        $region33: #{tpu_custom_call.1} parent=11 // pred_check
          %p808 = pneg %p306
        $region34: #{tpu_custom_call.1} parent=11 // pred_check_branch
          %810 = sbr.rel (%p808) target = $region36
        $region35: #{tpu_custom_call.1} parent=11 // pred_region
          _
        $region36: #{tpu_custom_call.1} parent=11 // pred_fallthru
          _
        // Predicated region
        $region37: #{tpu_custom_call.1} parent=11 // pred_check
          %p811 = pneg %p327
        $region38: #{tpu_custom_call.1} parent=11 // pred_check_branch
          %813 = sbr.rel (%p811) target = $region40
        $region39: #{tpu_custom_call.1} parent=11 // pred_region
          _
        $region40: #{tpu_custom_call.1} parent=11 // pred_fallthru
          _
        // Predicated region
        $region41: #{tpu_custom_call.1} parent=11 // pred_check
          %p814 = pneg %p348
        $region42: #{tpu_custom_call.1} parent=11 // pred_check_branch
          %816 = sbr.rel (%p814) target = $region44
        $region43: #{tpu_custom_call.1} parent=11 // pred_region
          _
        $region44: #{tpu_custom_call.1} parent=11 // pred_fallthru
          _
        // Predicated region
        $region45: #{tpu_custom_call.1} parent=11 // pred_check
          %p817 = pneg %p369
        $region46: #{tpu_custom_call.1} parent=11 // pred_check_branch
          %819 = sbr.rel (%p817) target = $region48
        $region47: #{tpu_custom_call.1} parent=11 // pred_region
          _
        $region48: #{tpu_custom_call.1} parent=11 // pred_fallthru
          _
        // Predicated region
        $region49: #{tpu_custom_call.1} parent=11 // pred_check
          %p820 = pneg %p390
        $region50: #{tpu_custom_call.1} parent=11 // pred_check_branch
          %822 = sbr.rel (%p820) target = $region52
        $region51: #{tpu_custom_call.1} parent=11 // pred_region
          _
        $region52: #{tpu_custom_call.1} parent=11 // pred_fallthru
          _
        // Predicated region
        $region53: #{tpu_custom_call.1} parent=11 // pred_check
          %p823 = pneg %p411
        $region54: #{tpu_custom_call.1} parent=11 // pred_check_branch
          %825 = sbr.rel (%p823) target = $region56
        $region55: #{tpu_custom_call.1} parent=11 // pred_region
          _
        $region56: #{tpu_custom_call.1} parent=11 // pred_fallthru
          _
        // Predicated region
        $region57: #{tpu_custom_call.1} parent=11 // pred_check
          %p826 = pneg %p432
        $region58: #{tpu_custom_call.1} parent=11 // pred_check_branch
          %828 = sbr.rel (%p826) target = $region60
        $region59: #{tpu_custom_call.1} parent=11 // pred_region
          _
        $region60: #{tpu_custom_call.1} parent=11 // pred_fallthru
          _
        // Predicated region
        $region61: #{tpu_custom_call.1} parent=11 // pred_check
          %p829 = pneg %p453
        $region62: #{tpu_custom_call.1} parent=11 // pred_check_branch
          %831 = sbr.rel (%p829) target = $region64
        $region63: #{tpu_custom_call.1} parent=11 // pred_region
          _
        $region64: #{tpu_custom_call.1} parent=11 // pred_fallthru
          _
        // Predicated region
        $region65: #{tpu_custom_call.1} parent=11 // pred_check
          %p832 = pneg %p474
        $region66: #{tpu_custom_call.1} parent=11 // pred_check_branch
          %834 = sbr.rel (%p832) target = $region68
        $region67: #{tpu_custom_call.1} parent=11 // pred_region
          _
        $region68: #{tpu_custom_call.1} parent=11 // pred_fallthru
          _
        // Predicated region
        $region69: #{tpu_custom_call.1} parent=11 // pred_check
          %p835 = pneg %p495
        $region70: #{tpu_custom_call.1} parent=11 // pred_check_branch
          %837 = sbr.rel (%p835) target = $region72
        $region71: #{tpu_custom_call.1} parent=11 // pred_region
          _
        $region72: #{tpu_custom_call.1} parent=11 // pred_fallthru
          _
        // Predicated region
        $region73: #{tpu_custom_call.1} parent=11 // pred_check
          %p838 = pneg %p516
        $region74: #{tpu_custom_call.1} parent=11 // pred_check_branch
          %840 = sbr.rel (%p838) target = $region76
        $region75: #{tpu_custom_call.1} parent=11 // pred_region
          _
        $region76: #{tpu_custom_call.1} parent=11 // pred_fallthru
          _
        // Predicated region
        $region77: #{tpu_custom_call.1} parent=11 // pred_check
          %p841 = pneg %p537
        $region78: #{tpu_custom_call.1} parent=11 // pred_check_branch
          %843 = sbr.rel (%p841) target = $region80
        $region79: #{tpu_custom_call.1} parent=11 // pred_region
          _
        $region80: #{tpu_custom_call.1} parent=11 // pred_fallthru
          _
        // Predicated region
        $region81: #{tpu_custom_call.1} parent=11 // pred_check
          %p844 = pneg %p558
        $region82: #{tpu_custom_call.1} parent=11 // pred_check_branch
          %846 = sbr.rel (%p844) target = $region84
        $region83: #{tpu_custom_call.1} parent=11 // pred_region
          _
        $region84: #{tpu_custom_call.1} parent=11 // pred_fallthru
          _
        // Predicated region
        $region85: #{tpu_custom_call.1} parent=11 // pred_check
          %p847 = pneg %p579
        $region86: #{tpu_custom_call.1} parent=11 // pred_check_branch
          %849 = sbr.rel (%p847) target = $region88
        $region87: #{tpu_custom_call.1} parent=11 // pred_region
          _
        $region88: #{tpu_custom_call.1} parent=11 // pred_fallthru
          _
        // Predicated region
        $region89: #{tpu_custom_call.1} parent=11 // pred_check
          %p850 = pneg %p600
        $region90: #{tpu_custom_call.1} parent=11 // pred_check_branch
          %852 = sbr.rel (%p850) target = $region92
        $region91: #{tpu_custom_call.1} parent=11 // pred_region
          _
        $region92: #{tpu_custom_call.1} parent=11 // pred_fallthru
          _
        // Predicated region
        $region93: #{tpu_custom_call.1} parent=11 // pred_check
          %p853 = pneg %p621
        $region94: #{tpu_custom_call.1} parent=11 // pred_check_branch
          %855 = sbr.rel (%p853) target = $region96
        $region95: #{tpu_custom_call.1} parent=11 // pred_region
          _
        $region96: #{tpu_custom_call.1} parent=11 // pred_fallthru
          _
        // Predicated region
        $region97: #{tpu_custom_call.1} parent=11 // pred_check
          %p856 = pneg %p642
        $region98: #{tpu_custom_call.1} parent=11 // pred_check_branch
          %858 = sbr.rel (%p856) target = $region100
        $region99: #{tpu_custom_call.1} parent=11 // pred_region
          _
        $region100: #{tpu_custom_call.1} parent=11 // pred_fallthru
          _
        // Predicated region
        $region101: #{tpu_custom_call.1} parent=11 // pred_check
          %p859 = pneg %p663
        $region102: #{tpu_custom_call.1} parent=11 // pred_check_branch
          %861 = sbr.rel (%p859) target = $region104
        $region103: #{tpu_custom_call.1} parent=11 // pred_region
          _
        $region104: #{tpu_custom_call.1} parent=11 // pred_fallthru
          _
        // Predicated region
        $region105: #{tpu_custom_call.1} parent=11 // pred_check
          %p862 = pneg %p684
        $region106: #{tpu_custom_call.1} parent=11 // pred_check_branch
          %864 = sbr.rel (%p862) target = $region108
        $region107: #{tpu_custom_call.1} parent=11 // pred_region
          _
        $region108: #{tpu_custom_call.1} parent=11 // pred_fallthru
          _
        // Predicated region
        $region109: #{tpu_custom_call.1} parent=11 // pred_check
          %p865 = pneg %p705
        $region110: #{tpu_custom_call.1} parent=11 // pred_check_branch
          %867 = sbr.rel (%p865) target = $region112
        $region111: #{tpu_custom_call.1} parent=11 // pred_region
          _
        $region112: #{tpu_custom_call.1} parent=11 // pred_fallthru
          _
        // Predicated region
        $region113: #{tpu_custom_call.1} parent=11 // pred_check
          %p868 = pneg %p726
        $region114: #{tpu_custom_call.1} parent=11 // pred_check_branch
          %870 = sbr.rel (%p868) target = $region116
        $region115: #{tpu_custom_call.1} parent=11 // pred_region
          _
        $region116: #{tpu_custom_call.1} parent=11 // pred_fallthru
          _
      $region12: #{tpu_custom_call.1} parent=5 // pred_fallthru
        _
      %p871 = scmp.lt.s32.totalorder %s76, 2
      // Predicated region
      $region117: #{tpu_custom_call.1} parent=5 // pred_check
        %p872 = pneg %p871
      $region118: #{tpu_custom_call.1} parent=5 // pred_check_branch
        %874 = sbr.rel (%p872) target = $region120
      $region119: #{tpu_custom_call.1} parent=5 // pred_region
        // Predicated region
        $region121: #{tpu_custom_call.1} parent=119 // pred_check
          %p875 = pneg %p96
        $region122: #{tpu_custom_call.1} parent=119 // pred_check_branch
          %877 = sbr.rel (%p875) target = $region124
        $region123: #{tpu_custom_call.1} parent=119 // pred_region
          %p878 = scmp.lt.s32.totalorder %s76, 1
          %s879 = scalar_select %p878, %s76, 1
          %s880 = smul.addr %s879, 8
          %s881 = scalar_lea.vmem %s1, %s880
        $region124: #{tpu_custom_call.1} parent=119 // pred_fallthru
          _
        // Predicated region
        $region125: #{tpu_custom_call.1} parent=119 // pred_check
          %p882 = pneg %p122
        $region126: #{tpu_custom_call.1} parent=119 // pred_check_branch
          %884 = sbr.rel (%p882) target = $region128
        $region127: #{tpu_custom_call.1} parent=119 // pred_region
          %p885 = scmp.lt.s32.totalorder %s76, 1
          %s886 = scalar_select %p885, %s76, 1
          %s887 = smul.addr %s886, 4
          %s888 = scalar_lea.vmem %s3, %s887
        $region128: #{tpu_custom_call.1} parent=119 // pred_fallthru
          _
        // Predicated region
        $region129: #{tpu_custom_call.1} parent=119 // pred_check
          %p889 = pneg %p148
        $region130: #{tpu_custom_call.1} parent=119 // pred_check_branch
          %891 = sbr.rel (%p889) target = $region132
        $region131: #{tpu_custom_call.1} parent=119 // pred_region
          %p892 = scmp.lt.s32.totalorder %s76, 1
          %s893 = scalar_select %p892, %s76, 1
          %s894 = smul.addr %s893, 8
          %s895 = scalar_lea.vmem %s5, %s894
        $region132: #{tpu_custom_call.1} parent=119 // pred_fallthru
          _
        // Predicated region
        $region133: #{tpu_custom_call.1} parent=119 // pred_check
          %p896 = pneg %p174
        $region134: #{tpu_custom_call.1} parent=119 // pred_check_branch
          %898 = sbr.rel (%p896) target = $region136
        $region135: #{tpu_custom_call.1} parent=119 // pred_region
          %p899 = scmp.lt.s32.totalorder %s76, 1
          %s900 = scalar_select %p899, %s76, 1
          %s901 = scalar_lea.vmem %s7, %s900
        $region136: #{tpu_custom_call.1} parent=119 // pred_fallthru
          _
      $region120: #{tpu_custom_call.1} parent=5 // pred_fallthru
        _
      %p902 = scmp.le.s32.totalorder 1, %s76
      %p903 = scmp.lt.s32.totalorder %s76, 3
      %p904 = pnand %p902, %p903
      %p905 = pneg %p904
      // Predicated region
      $region137: #{tpu_custom_call.1} parent=5 // pred_check
        _
      $region138: #{tpu_custom_call.1} parent=5 // pred_check_branch
        %907 = sbr.rel (%p904) target = $region140
      $region139: #{tpu_custom_call.1} parent=5 // pred_region
        %s908 = ssub.s32 %s76, 1
        %p909 = scmp.lt.s32.totalorder %s81, 1
        %s910 = scalar_select %p909, %s81, 1
        %s911 = smul.addr %s910, 8
        %s912 = scalar_lea.vmem %s1, %s911
        %p913 = pneg %p102
        %p914 = pneg %p99
        %p915 = scmp.lt.s32.totalorder %s81, 1
        %s916 = scalar_select %p915, %s81, 1
        %s917 = smul.addr %s916, 4
        %s918 = scalar_lea.vmem %s3, %s917
        %p919 = pneg %p128
        %p920 = pneg %p125
        %p921 = scmp.lt.s32.totalorder %s81, 1
        %s922 = scalar_select %p921, %s81, 1
        %s923 = smul.addr %s922, 8
        %s924 = scalar_lea.vmem %s5, %s923
        %p925 = pneg %p154
        %p926 = pneg %p151
        %p927 = scmp.lt.s32.totalorder %s81, 1
        %s928 = scalar_select %p927, %s81, 1
        %s929 = scalar_lea.vmem %s7, %s928
        %p930 = pneg %p180
        %p931 = pneg %p177
        %p932 = pneg %p201
        %p933 = pneg %p198
        %p934 = pneg %p222
        %p935 = pneg %p219
        %p936 = pneg %p243
        %p937 = pneg %p240
        %p938 = pneg %p264
        %p939 = pneg %p261
        %p940 = pneg %p285
        %p941 = pneg %p282
        %p942 = pneg %p306
        %p943 = pneg %p303
        %p944 = pneg %p327
        %p945 = pneg %p324
        %p946 = pneg %p348
        %p947 = pneg %p345
        %p948 = pneg %p369
        %p949 = pneg %p366
        %p950 = pneg %p390
        %p951 = pneg %p387
        %p952 = pneg %p411
        %p953 = pneg %p408
        %p954 = pneg %p432
        %p955 = pneg %p429
        %p956 = pneg %p453
        %p957 = pneg %p450
        %p958 = pneg %p474
        %p959 = pneg %p471
        %p960 = pneg %p495
        %p961 = pneg %p492
        %p962 = pneg %p516
        %p963 = pneg %p513
        %p964 = pneg %p537
        %p965 = pneg %p534
        %p966 = pneg %p558
        %p967 = pneg %p555
        %p968 = pneg %p579
        %p969 = pneg %p576
        %p970 = pneg %p600
        %p971 = pneg %p597
        %p972 = pneg %p621
        %p973 = pneg %p618
        %p974 = pneg %p642
        %p975 = pneg %p639
        %p976 = pneg %p663
        %p977 = pneg %p660
        %p978 = pneg %p684
        %p979 = pneg %p681
        %p980 = pneg %p705
        %p981 = pneg %p702
        %p982 = pneg %p726
        %p983 = pneg %p723
        %p984 = pneg %p752
        %p985 = pneg %p749
        %s986 = sand.u32 %s739, 1
        %s987 = scalar_lea.sflag [#allocation3], %s986
        %s988 = sand.u32 %s739, 1
        %s989 = smul.addr %s988, 8
        %s990 = scalar_lea.vmem [#allocation2], %s989
        %p991 = pneg %p778
        %p992 = pneg %p775
        %s993 = sand.u32 %s765, 1
        %s994 = scalar_lea.sflag [#allocation5], %s993
        %s995 = sand.u32 %s765, 1
        %s996 = smul.addr %s995, 32
        %s997 = scalar_lea.vmem [#allocation4], %s996
        %p998 = scmp.lt.s32.totalorder %s81, 1
        %s999 = scalar_select %p998, %s81, 1
        %s1000 = smul.addr %s999, 8
        %s1001 = scalar_lea.vmem %s1, %s1000
        %p1002 = scmp.lt.s32.totalorder %s81, 1
        %s1003 = scalar_select %p1002, %s81, 1
        %s1004 = smul.addr %s1003, 4
        %s1005 = scalar_lea.vmem %s3, %s1004
        %p1006 = scmp.lt.s32.totalorder %s81, 1
        %s1007 = scalar_select %p1006, %s81, 1
        %s1008 = smul.addr %s1007, 8
        %s1009 = scalar_lea.vmem %s5, %s1008
        %p1010 = scmp.lt.s32.totalorder %s81, 1
        %s1011 = scalar_select %p1010, %s81, 1
        %s1012 = scalar_lea.vmem %s7, %s1011
        %v1014 = vld [vmem:[%s1001] sm:$0xff]
        %v1015 = vld [vmem:[%s11] sm:$0x1]
        %v1017 = vlaneseq
        %v1018 = vshrl.u32 %v1017, 7
        %v1019 = vsub.s32 0, %v1018
        %v1020 = vrot.slane %v1015, %v1019
        %v1022 = vadd.f32 %v1014, %v1020
        %v1023 = vld [vmem:[%s1005] sm:$0xf]
        %v1024 = vld [vmem:[%s1009] sm:$0xff]
        %vm1025 = vcmp.gt.f32.partialorder %v1024, 0.0
        %v1026 = vsel %vm1025, -1e+30, 0.0
        %v1027 = vld [vmem:[%s1012] sm:$0x1]
        %vm1028 = vcmp.gt.f32.partialorder %v1027, 0.0
        %v1029 = vsel %vm1028, -1e+30, 0.0
        %v1030 = vld [vmem:[%s13] sm:$0x1]
        %v1031 = vld [vmem:[%s15] sm:$0x1]
        %vm1032 = vcmask 261120
        %v1033 = vsel %vm1032, %v1022, 0.0
        %1034 = vadd.xlane.f32.xlu0 %v1033
        %v1035 = vpop.xlane.xlu0 %1034
        %v1036 = vrcp.pop 32.0
        %v1037 = vmul.f32 %v1035, %v1036
        %v1038 = vsub.f32 %v1022, %v1037
        %v1039 = vmul.f32 %v1038, %v1038
        %v1040 = vsel %vm1032, %v1039, 0.0
        %1041 = vadd.xlane.f32.xlu0 %v1040
        %v1042 = vpop.xlane.xlu0 %1041
        %v1043 = vmul.f32 %v1042, %v1036
        %v1044 = vadd.f32 %v1043, 1e-05
        %v1045 = vrsqrt.pop %v1044
        %v1046 = vmul.f32 %v1038, %v1045
        %v1048 = vlaneseq
        %v1049 = vshrl.u32 %v1048, 7
        %v1050 = vsub.s32 0, %v1049
        %v1051 = vrot.slane %v1030, %v1050
        %v1053 = vmul.f32 %v1046, %v1051
        %v1055 = vlaneseq
        %v1056 = vshrl.u32 %v1055, 7
        %v1057 = vsub.s32 0, %v1056
        %v1058 = vrot.slane %v1031, %v1057
        %v1060 = vadd.f32 %v1053, %v1058
        %v1061 = vld [vmem:[%s17] sm:$0xf]
        %v1062 = vld [vmem:[%s17 + $0x4] sm:$0xf]
        %v1063 = vld [vmem:[%s17 + $0x8] sm:$0xf]
        %v1064 = vld [vmem:[%s17 + $0xc] sm:$0xf]
        %v1065 = vld [vmem:[%s17 + $0x10] sm:$0xf]
        %v1066 = vld [vmem:[%s17 + $0x14] sm:$0xf]
        %v1067 = vld [vmem:[%s17 + $0x18] sm:$0xf]
        %v1068 = vld [vmem:[%s17 + $0x1c] sm:$0xf]
        %v1069 = vld [vmem:[%s17 + $0x20] sm:$0xf]
        %v1070 = vld [vmem:[%s17 + $0x24] sm:$0xf]
        %v1071 = vld [vmem:[%s17 + $0x28] sm:$0xf]
        %v1072 = vld [vmem:[%s17 + $0x2c] sm:$0xf]
        %v1073 = vld [vmem:[%s19] sm:$0x1]
        %v1074 = vpack.c.bf16 %v1060, %v1060
        %v1076 = vlaneseq
        %v1077 = vshrl.u32 %v1076, 7
        %v1078 = vsub.s32 0, %v1077
        %v1079 = vrot.slane %v1073, %v1078
        %v1093 = vunpack.c.l.b16 %v1061
        %v1094 = vunpack.c.l.b16 %v1062
        %v1095 = vunpack.c.l.b16 %v1063
        %v1096 = vunpack.c.l.b16 %v1064
        %v1097 = vunpack.c.l.b16 %v1065
        %v1098 = vunpack.c.l.b16 %v1066
        %v1099 = vunpack.c.l.b16 %v1067
        %v1100 = vunpack.c.l.b16 %v1068
        %v1101 = vunpack.c.l.b16 %v1069
        %v1102 = vunpack.c.l.b16 %v1070
        %v1103 = vunpack.c.l.b16 %v1071
        %v1104 = vunpack.c.l.b16 %v1072
        %v1105 = vpack.c.b16 %v1094, %v1093
        %v1106 = vpack.c.b16 %v1096, %v1095
        %v1107 = vpack.c.b16 %v1098, %v1097
        %v1108 = vpack.c.b16 %v1100, %v1099
        %v1109 = vpack.c.b16 %v1102, %v1101
        %v1110 = vpack.c.b16 %v1104, %v1103
        %v1112 = vsel %vm1032, %v1074, 0
        %v1115 = vsel %vm1032, %v1105, 0
        %v1118 = vsel %vm1032, %v1106, 0
        %v1121 = vsel %vm1032, %v1107, 0
        %v1124 = vsel %vm1032, %v1108, 0
        %v1127 = vsel %vm1032, %v1109, 0
        %v1130 = vsel %vm1032, %v1110, 0
        %1132 = vmatprep.subr.bf16.mxu0 0
        %1133 = vmatpush1.bf16.xpose.msra.mxu0 %v1115
        %1134 = vmatprep.subr.bf16.mxu0 0
        %1135 = vmatpush1.bf16.xpose.msra.mxu0 %v1118
        %1136 = vmatprep.subr.bf16.mxu0 0
        %1137 = vmatpush1.bf16.xpose.msra.mxu0 %v1121
        %1138 = vmatprep.subr.bf16.mxu0 0
        %1139 = vmatpush1.bf16.xpose.msra.mxu0 %v1124
        %1140 = vmatprep.subr.bf16.mxu0 0
        %1141 = vmatpush1.bf16.xpose.msra.mxu0 %v1127
        %1142 = vmatprep.subr.bf16.mxu0 0
        %1143 = vmatpush1.bf16.xpose.msra.mxu0 %v1130
        %1144 = vmatprep.subr.bf16.mxu0 0
        %1145 = vmatpush1.bf16.xpose.msra.mxu0 0
        %1146 = vmatprep.subr.bf16.mxu0 0
        %1147 = vmatpush1.bf16.xpose.msra.mxu0 0
        %1148 = vmatprep.subr.bf16.mxu0 0
        %1149 = vmatpush1.bf16.xpose.msra.mxu0 0
        %1150 = vmatprep.subr.bf16.mxu0 0
        %1151 = vmatpush1.bf16.xpose.msra.mxu0 0
        %1152 = vmatprep.subr.bf16.mxu0 0
        %1153 = vmatpush1.bf16.xpose.msra.mxu0 0
        %1154 = vmatprep.subr.bf16.mxu0 0
        %1155 = vmatpush1.bf16.xpose.msra.mxu0 0
        %1156 = vmatprep.subr.bf16.mxu0 0
        %1157 = vmatpush1.bf16.xpose.msra.mxu0 0
        %1158 = vmatprep.subr.bf16.mxu0 0
        %1159 = vmatpush1.bf16.xpose.msra.mxu0 0
        %1160 = vmatprep.subr.bf16.mxu0 0
        %1161 = vmatpush1.bf16.xpose.msra.mxu0 0
        %1162 = vmatprep.subr.bf16.mxu0 0
        %1163 = vmatpush1.bf16.xpose.msra.mxu0 0
        %1164 = vmatprep.mubr.bf16.mxu0 0
        %1165 = vmatmul.mubr.bf16.gmra.mrb[0].mxu0 %v1112
        %v1166 = vpop.f32.mrb[0].mxu0
        %v1167 = vadd.f32 %v1079, %v1166
        %v1168 = vpop.f32.mrb[0].mxu0
        %v1169 = vpop.f32.mrb[0].mxu0
        %v1170 = vpop.f32.mrb[0].mxu0
        %1171 = vdwg.mxu0
        %v1172 = vld [vmem:[%s9] sm:$0xff]
        %v1173 = vld [vmem:[%s21] sm:$0xf]
        %v1174 = vld [vmem:[%s21 + $0x4] sm:$0xf]
        %v1175 = vld [vmem:[%s21 + $0x8] sm:$0xf]
        %v1176 = vld [vmem:[%s21 + $0xc] sm:$0xf]
        %v1177 = vld [vmem:[%s23] sm:$0x1]
        %v1178 = vpack.c.bf16 %v1172, %v1172
        %v1180 = vlaneseq
        %v1181 = vshrl.u32 %v1180, 7
        %v1182 = vsub.s32 0, %v1181
        %v1183 = vrot.slane %v1177, %v1182
        %v1189 = vunpack.c.l.b16 %v1173
        %v1190 = vunpack.c.l.b16 %v1174
        %v1191 = vunpack.c.l.b16 %v1175
        %v1192 = vunpack.c.l.b16 %v1176
        %v1193 = vpack.c.b16 %v1190, %v1189
        %v1194 = vpack.c.b16 %v1192, %v1191
        %v1196 = vsel %vm1032, %v1178, 0
        %v1199 = vsel %vm1032, %v1193, 0
        %v1202 = vsel %vm1032, %v1194, 0
        %1204 = vmatprep.subr.bf16.mxu0 0
        %1205 = vmatpush1.bf16.xpose.msra.mxu0 %v1199
        %1206 = vmatprep.subr.bf16.mxu0 0
        %1207 = vmatpush1.bf16.xpose.msra.mxu0 %v1202
        %1208 = vmatprep.subr.bf16.mxu0 0
        %1209 = vmatpush1.bf16.xpose.msra.mxu0 0
        %1210 = vmatprep.subr.bf16.mxu0 0
        %1211 = vmatpush1.bf16.xpose.msra.mxu0 0
        %1212 = vmatprep.subr.bf16.mxu0 0
        %1213 = vmatpush1.bf16.xpose.msra.mxu0 0
        %1214 = vmatprep.subr.bf16.mxu0 0
        %1215 = vmatpush1.bf16.xpose.msra.mxu0 0
        %1216 = vmatprep.subr.bf16.mxu0 0
        %1217 = vmatpush1.bf16.xpose.msra.mxu0 0
        %1218 = vmatprep.subr.bf16.mxu0 0
        %1219 = vmatpush1.bf16.xpose.msra.mxu0 0
        %1220 = vmatprep.subr.bf16.mxu0 0
        %1221 = vmatpush1.bf16.xpose.msra.mxu0 0
        %1222 = vmatprep.subr.bf16.mxu0 0
        %1223 = vmatpush1.bf16.xpose.msra.mxu0 0
        %1224 = vmatprep.subr.bf16.mxu0 0
        %1225 = vmatpush1.bf16.xpose.msra.mxu0 0
        %1226 = vmatprep.subr.bf16.mxu0 0
        %1227 = vmatpush1.bf16.xpose.msra.mxu0 0
        %1228 = vmatprep.subr.bf16.mxu0 0
        %1229 = vmatpush1.bf16.xpose.msra.mxu0 0
        %1230 = vmatprep.subr.bf16.mxu0 0
        %1231 = vmatpush1.bf16.xpose.msra.mxu0 0
        %1232 = vmatprep.subr.bf16.mxu0 0
        %1233 = vmatpush1.bf16.xpose.msra.mxu0 0
        %1234 = vmatprep.subr.bf16.mxu0 0
        %1235 = vmatpush1.bf16.xpose.msra.mxu0 0
        %1236 = vmatprep.mubr.bf16.mxu0 0
        %1237 = vmatmul.mubr.bf16.gmra.mrb[0].mxu0 %v1196
        %v1238 = vpop.f32.mrb[0].mxu0
        %v1239 = vadd.f32 %v1183, %v1238
        %v1240 = vpop.f32.mrb[0].mxu0
        %v1241 = vpop.f32.mrb[0].mxu0
        %v1242 = vpop.f32.mrb[0].mxu0
        %1243 = vdwg.mxu0
        %1245 = vrot.lane.b32.xlu0 %v1167, 120
        %v1246 = vpop.permute.xlu0 %1245
        %1248 = vrot.lane.b32.xlu0 %v1167, 112
        %v1249 = vpop.permute.xlu0 %1248
        %1251 = vrot.lane.b32.xlu0 %v1167, 104
        %v1252 = vpop.permute.xlu0 %1251
        %v1254 = vpack.c.bf16 %v1167, %v1167
        %v1255 = vpack.c.bf16 %v1246, %v1246
        %v1256 = vpack.c.bf16 %v1249, %v1249
        %v1257 = vpack.c.bf16 %v1252, %v1252
        %1259 = vrot.lane.b32.xlu0 %v1239, 120
        %v1260 = vpop.permute.xlu0 %1259
        %1262 = vrot.lane.b32.xlu0 %v1239, 112
        %v1263 = vpop.permute.xlu0 %1262
        %1265 = vrot.lane.b32.xlu0 %v1239, 104
        %v1266 = vpop.permute.xlu0 %1265
        %v1268 = vpack.c.bf16 %v1239, %v1239
        %v1269 = vpack.c.bf16 %v1260, %v1260
        %v1270 = vpack.c.bf16 %v1263, %v1263
        %v1271 = vpack.c.bf16 %v1266, %v1266
        %v1272 = vld [vmem:[%s25] sm:$0x1]
        %v1273 = vld [vmem:[%s25 + $0x1] sm:$0x1]
        %v1274 = vld [vmem:[%s25 + $0x2] sm:$0x1]
        %v1275 = vld [vmem:[%s25 + $0x3] sm:$0x1]
        %v1280 = vlaneseq
        %v1281 = vshrl.u32 %v1280, 7
        %v1282 = vsub.s32 0, %v1281
        %v1283 = vrot.slane %v1272, %v1282
        %v1284 = vlaneseq
        %v1285 = vshrl.u32 %v1284, 7
        %v1286 = vsub.s32 0, %v1285
        %v1287 = vrot.slane %v1273, %v1286
        %v1288 = vlaneseq
        %v1289 = vshrl.u32 %v1288, 7
        %v1290 = vsub.s32 0, %v1289
        %v1291 = vrot.slane %v1274, %v1290
        %v1292 = vlaneseq
        %v1293 = vshrl.u32 %v1292, 7
        %v1294 = vsub.s32 0, %v1293
        %v1295 = vrot.slane %v1275, %v1294
        %v1300 = vadd.f32 %v1167, %v1283
        %v1301 = vadd.f32 %v1246, %v1287
        %v1302 = vadd.f32 %v1249, %v1291
        %v1303 = vadd.f32 %v1252, %v1295
        %v1304 = vpack.c.bf16 %v1300, %v1300
        %v1305 = vpack.c.bf16 %v1301, %v1301
        %v1306 = vpack.c.bf16 %v1302, %v1302
        %v1307 = vpack.c.bf16 %v1303, %v1303
        %v1308 = vld [vmem:[%s27] sm:$0x1]
        %v1309 = vld [vmem:[%s27 + $0x1] sm:$0x1]
        %v1310 = vld [vmem:[%s27 + $0x2] sm:$0x1]
        %v1311 = vld [vmem:[%s27 + $0x3] sm:$0x1]
        %v1316 = vlaneseq
        %v1317 = vshrl.u32 %v1316, 7
        %v1318 = vsub.s32 0, %v1317
        %v1319 = vrot.slane %v1308, %v1318
        %v1320 = vlaneseq
        %v1321 = vshrl.u32 %v1320, 7
        %v1322 = vsub.s32 0, %v1321
        %v1323 = vrot.slane %v1309, %v1322
        %v1324 = vlaneseq
        %v1325 = vshrl.u32 %v1324, 7
        %v1326 = vsub.s32 0, %v1325
        %v1327 = vrot.slane %v1310, %v1326
        %v1328 = vlaneseq
        %v1329 = vshrl.u32 %v1328, 7
        %v1330 = vsub.s32 0, %v1329
        %v1331 = vrot.slane %v1311, %v1330
        %v1336 = vadd.f32 %v1167, %v1319
        %v1337 = vadd.f32 %v1246, %v1323
        %v1338 = vadd.f32 %v1249, %v1327
        %v1339 = vadd.f32 %v1252, %v1331
        %v1340 = vpack.c.bf16 %v1336, %v1336
        %v1341 = vpack.c.bf16 %v1337, %v1337
        %v1342 = vpack.c.bf16 %v1338, %v1338
        %v1343 = vpack.c.bf16 %v1339, %v1339
        %vm1344 = vcmask 64512
        %v1346 = vsel %vm1344, %v1340, 0
        %v1349 = vsel %vm1344, %v1268, 0
        %1351 = vmatprep.subr.bf16.mxu0 0
        %1352 = vmatpush1.bf16.xpose.msra.mxu0 %v1349
        %1353 = vmatprep.subr.bf16.mxu0 0
        %1354 = vmatpush1.bf16.xpose.msra.mxu0 0
        %1355 = vmatprep.subr.bf16.mxu0 0
        %1356 = vmatpush1.bf16.xpose.msra.mxu0 0
        %1357 = vmatprep.subr.bf16.mxu0 0
        %1358 = vmatpush1.bf16.xpose.msra.mxu0 0
        %1359 = vmatprep.subr.bf16.mxu0 0
        %1360 = vmatpush1.bf16.xpose.msra.mxu0 0
        %1361 = vmatprep.subr.bf16.mxu0 0
        %1362 = vmatpush1.bf16.xpose.msra.mxu0 0
        %1363 = vmatprep.subr.bf16.mxu0 0
        %1364 = vmatpush1.bf16.xpose.msra.mxu0 0
        %1365 = vmatprep.subr.bf16.mxu0 0
        %1366 = vmatpush1.bf16.xpose.msra.mxu0 0
        %1367 = vmatprep.subr.bf16.mxu0 0
        %1368 = vmatpush1.bf16.xpose.msra.mxu0 0
        %1369 = vmatprep.subr.bf16.mxu0 0
        %1370 = vmatpush1.bf16.xpose.msra.mxu0 0
        %1371 = vmatprep.subr.bf16.mxu0 0
        %1372 = vmatpush1.bf16.xpose.msra.mxu0 0
        %1373 = vmatprep.subr.bf16.mxu0 0
        %1374 = vmatpush1.bf16.xpose.msra.mxu0 0
        %1375 = vmatprep.subr.bf16.mxu0 0
        %1376 = vmatpush1.bf16.xpose.msra.mxu0 0
        %1377 = vmatprep.subr.bf16.mxu0 0
        %1378 = vmatpush1.bf16.xpose.msra.mxu0 0
        %1379 = vmatprep.subr.bf16.mxu0 0
        %1380 = vmatpush1.bf16.xpose.msra.mxu0 0
        %1381 = vmatprep.subr.bf16.mxu0 0
        %1382 = vmatpush1.bf16.xpose.msra.mxu0 0
        %1383 = vmatprep.mubr.bf16.mxu0 0
        %1384 = vmatmul.mubr.bf16.gmra.mrb[0].mxu0 %v1346
        %v1385 = vpop.f32.mrb[0].mxu0
        %v1386 = vadd.f32 0.0, %v1385
        %v1387 = vpop.f32.mrb[0].mxu0
        %v1388 = vpop.f32.mrb[0].mxu0
        %v1389 = vpop.f32.mrb[0].mxu0
        %1390 = vdwg.mxu0
        %v1392 = vsel %vm1344, %v1341, 0
        %v1395 = vsel %vm1344, %v1269, 0
        %1397 = vmatprep.subr.bf16.mxu0 0
        %1398 = vmatpush1.bf16.xpose.msra.mxu0 %v1395
        %1399 = vmatprep.subr.bf16.mxu0 0
        %1400 = vmatpush1.bf16.xpose.msra.mxu0 0
        %1401 = vmatprep.subr.bf16.mxu0 0
        %1402 = vmatpush1.bf16.xpose.msra.mxu0 0
        %1403 = vmatprep.subr.bf16.mxu0 0
        %1404 = vmatpush1.bf16.xpose.msra.mxu0 0
        %1405 = vmatprep.subr.bf16.mxu0 0
        %1406 = vmatpush1.bf16.xpose.msra.mxu0 0
        %1407 = vmatprep.subr.bf16.mxu0 0
        %1408 = vmatpush1.bf16.xpose.msra.mxu0 0
        %1409 = vmatprep.subr.bf16.mxu0 0
        %1410 = vmatpush1.bf16.xpose.msra.mxu0 0
        %1411 = vmatprep.subr.bf16.mxu0 0
        %1412 = vmatpush1.bf16.xpose.msra.mxu0 0
        %1413 = vmatprep.subr.bf16.mxu0 0
        %1414 = vmatpush1.bf16.xpose.msra.mxu0 0
        %1415 = vmatprep.subr.bf16.mxu0 0
        %1416 = vmatpush1.bf16.xpose.msra.mxu0 0
        %1417 = vmatprep.subr.bf16.mxu0 0
        %1418 = vmatpush1.bf16.xpose.msra.mxu0 0
        %1419 = vmatprep.subr.bf16.mxu0 0
        %1420 = vmatpush1.bf16.xpose.msra.mxu0 0
        %1421 = vmatprep.subr.bf16.mxu0 0
        %1422 = vmatpush1.bf16.xpose.msra.mxu0 0
        %1423 = vmatprep.subr.bf16.mxu0 0
        %1424 = vmatpush1.bf16.xpose.msra.mxu0 0
        %1425 = vmatprep.subr.bf16.mxu0 0
        %1426 = vmatpush1.bf16.xpose.msra.mxu0 0
        %1427 = vmatprep.subr.bf16.mxu0 0
        %1428 = vmatpush1.bf16.xpose.msra.mxu0 0
        %1429 = vmatprep.mubr.bf16.mxu0 0
        %1430 = vmatmul.mubr.bf16.gmra.mrb[0].mxu0 %v1392
        %v1431 = vpop.f32.mrb[0].mxu0
        %v1432 = vadd.f32 0.0, %v1431
        %v1433 = vpop.f32.mrb[0].mxu0
        %v1434 = vpop.f32.mrb[0].mxu0
        %v1435 = vpop.f32.mrb[0].mxu0
        %1436 = vdwg.mxu0
        %v1438 = vsel %vm1344, %v1342, 0
        %v1441 = vsel %vm1344, %v1270, 0
        %1443 = vmatprep.subr.bf16.mxu0 0
        %1444 = vmatpush1.bf16.xpose.msra.mxu0 %v1441
        %1445 = vmatprep.subr.bf16.mxu0 0
        %1446 = vmatpush1.bf16.xpose.msra.mxu0 0
        %1447 = vmatprep.subr.bf16.mxu0 0
        %1448 = vmatpush1.bf16.xpose.msra.mxu0 0
        %1449 = vmatprep.subr.bf16.mxu0 0
        %1450 = vmatpush1.bf16.xpose.msra.mxu0 0
        %1451 = vmatprep.subr.bf16.mxu0 0
        %1452 = vmatpush1.bf16.xpose.msra.mxu0 0
        %1453 = vmatprep.subr.bf16.mxu0 0
        %1454 = vmatpush1.bf16.xpose.msra.mxu0 0
        %1455 = vmatprep.subr.bf16.mxu0 0
        %1456 = vmatpush1.bf16.xpose.msra.mxu0 0
        %1457 = vmatprep.subr.bf16.mxu0 0
        %1458 = vmatpush1.bf16.xpose.msra.mxu0 0
        %1459 = vmatprep.subr.bf16.mxu0 0
        %1460 = vmatpush1.bf16.xpose.msra.mxu0 0
        %1461 = vmatprep.subr.bf16.mxu0 0
        %1462 = vmatpush1.bf16.xpose.msra.mxu0 0
        %1463 = vmatprep.subr.bf16.mxu0 0
        %1464 = vmatpush1.bf16.xpose.msra.mxu0 0
        %1465 = vmatprep.subr.bf16.mxu0 0
        %1466 = vmatpush1.bf16.xpose.msra.mxu0 0
        %1467 = vmatprep.subr.bf16.mxu0 0
        %1468 = vmatpush1.bf16.xpose.msra.mxu0 0
        %1469 = vmatprep.subr.bf16.mxu0 0
        %1470 = vmatpush1.bf16.xpose.msra.mxu0 0
        %1471 = vmatprep.subr.bf16.mxu0 0
        %1472 = vmatpush1.bf16.xpose.msra.mxu0 0
        %1473 = vmatprep.subr.bf16.mxu0 0
        %1474 = vmatpush1.bf16.xpose.msra.mxu0 0
        %1475 = vmatprep.mubr.bf16.mxu0 0
        %1476 = vmatmul.mubr.bf16.gmra.mrb[0].mxu0 %v1438
        %v1477 = vpop.f32.mrb[0].mxu0
        %v1478 = vadd.f32 0.0, %v1477
        %v1479 = vpop.f32.mrb[0].mxu0
        %v1480 = vpop.f32.mrb[0].mxu0
        %v1481 = vpop.f32.mrb[0].mxu0
        %1482 = vdwg.mxu0
        %v1484 = vsel %vm1344, %v1343, 0
        %v1487 = vsel %vm1344, %v1271, 0
        %1489 = vmatprep.subr.bf16.mxu0 0
        %1490 = vmatpush1.bf16.xpose.msra.mxu0 %v1487
        %1491 = vmatprep.subr.bf16.mxu0 0
        %1492 = vmatpush1.bf16.xpose.msra.mxu0 0
        %1493 = vmatprep.subr.bf16.mxu0 0
        %1494 = vmatpush1.bf16.xpose.msra.mxu0 0
        %1495 = vmatprep.subr.bf16.mxu0 0
        %1496 = vmatpush1.bf16.xpose.msra.mxu0 0
        %1497 = vmatprep.subr.bf16.mxu0 0
        %1498 = vmatpush1.bf16.xpose.msra.mxu0 0
        %1499 = vmatprep.subr.bf16.mxu0 0
        %1500 = vmatpush1.bf16.xpose.msra.mxu0 0
        %1501 = vmatprep.subr.bf16.mxu0 0
        %1502 = vmatpush1.bf16.xpose.msra.mxu0 0
        %1503 = vmatprep.subr.bf16.mxu0 0
        %1504 = vmatpush1.bf16.xpose.msra.mxu0 0
        %1505 = vmatprep.subr.bf16.mxu0 0
        %1506 = vmatpush1.bf16.xpose.msra.mxu0 0
        %1507 = vmatprep.subr.bf16.mxu0 0
        %1508 = vmatpush1.bf16.xpose.msra.mxu0 0
        %1509 = vmatprep.subr.bf16.mxu0 0
        %1510 = vmatpush1.bf16.xpose.msra.mxu0 0
        %1511 = vmatprep.subr.bf16.mxu0 0
        %1512 = vmatpush1.bf16.xpose.msra.mxu0 0
        %1513 = vmatprep.subr.bf16.mxu0 0
        %1514 = vmatpush1.bf16.xpose.msra.mxu0 0
        %1515 = vmatprep.subr.bf16.mxu0 0
        %1516 = vmatpush1.bf16.xpose.msra.mxu0 0
        %1517 = vmatprep.subr.bf16.mxu0 0
        %1518 = vmatpush1.bf16.xpose.msra.mxu0 0
        %1519 = vmatprep.subr.bf16.mxu0 0
        %1520 = vmatpush1.bf16.xpose.msra.mxu0 0
        %1521 = vmatprep.mubr.bf16.mxu0 0
        %1522 = vmatmul.mubr.bf16.gmra.mrb[0].mxu0 %v1484
        %v1523 = vpop.f32.mrb[0].mxu0
        %v1524 = vadd.f32 0.0, %v1523
        %v1525 = vpop.f32.mrb[0].mxu0
        %v1526 = vpop.f32.mrb[0].mxu0
        %v1527 = vpop.f32.mrb[0].mxu0
        %1528 = vdwg.mxu0
        %v1529 = vsel %vm1344, %v1386, 0.0
        %v1530 = vsel %vm1344, %v1432, 0.0
        %v1531 = vsel %vm1344, %v1478, 0.0
        %v1532 = vsel %vm1344, %v1524, 0.0
        %1537 = vrot.lane.b32.xlu0 %v1529, 1
        %v1538 = vpop.permute.xlu0 %1537
        %1539 = vrot.lane.b32.xlu0 %v1530, 1
        %v1540 = vpop.permute.xlu0 %1539
        %1541 = vrot.lane.b32.xlu0 %v1531, 1
        %v1542 = vpop.permute.xlu0 %1541
        %1543 = vrot.lane.b32.xlu0 %v1532, 1
        %v1544 = vpop.permute.xlu0 %1543
        %1549 = vrot.lane.b32.xlu0 %v1529, 2
        %v1550 = vpop.permute.xlu0 %1549
        %1551 = vrot.lane.b32.xlu0 %v1530, 2
        %v1552 = vpop.permute.xlu0 %1551
        %1553 = vrot.lane.b32.xlu0 %v1531, 2
        %v1554 = vpop.permute.xlu0 %1553
        %1555 = vrot.lane.b32.xlu0 %v1532, 2
        %v1556 = vpop.permute.xlu0 %1555
        %1561 = vrot.lane.b32.xlu0 %v1529, 3
        %v1562 = vpop.permute.xlu0 %1561
        %1563 = vrot.lane.b32.xlu0 %v1530, 3
        %v1564 = vpop.permute.xlu0 %1563
        %1565 = vrot.lane.b32.xlu0 %v1531, 3
        %v1566 = vpop.permute.xlu0 %1565
        %1567 = vrot.lane.b32.xlu0 %v1532, 3
        %v1568 = vpop.permute.xlu0 %1567
        %1573 = vrot.lane.b32.xlu0 %v1529, 4
        %v1574 = vpop.permute.xlu0 %1573
        %1575 = vrot.lane.b32.xlu0 %v1530, 4
        %v1576 = vpop.permute.xlu0 %1575
        %1577 = vrot.lane.b32.xlu0 %v1531, 4
        %v1578 = vpop.permute.xlu0 %1577
        %1579 = vrot.lane.b32.xlu0 %v1532, 4
        %v1580 = vpop.permute.xlu0 %1579
        %1585 = vrot.lane.b32.xlu0 %v1529, 5
        %v1586 = vpop.permute.xlu0 %1585
        %1587 = vrot.lane.b32.xlu0 %v1530, 5
        %v1588 = vpop.permute.xlu0 %1587
        %1589 = vrot.lane.b32.xlu0 %v1531, 5
        %v1590 = vpop.permute.xlu0 %1589
        %1591 = vrot.lane.b32.xlu0 %v1532, 5
        %v1592 = vpop.permute.xlu0 %1591
        %1597 = vrot.lane.b32.xlu0 %v1529, 6
        %v1598 = vpop.permute.xlu0 %1597
        %1599 = vrot.lane.b32.xlu0 %v1530, 6
        %v1600 = vpop.permute.xlu0 %1599
        %1601 = vrot.lane.b32.xlu0 %v1531, 6
        %v1602 = vpop.permute.xlu0 %1601
        %1603 = vrot.lane.b32.xlu0 %v1532, 6
        %v1604 = vpop.permute.xlu0 %1603
        %1609 = vrot.lane.b32.xlu0 %v1529, 7
        %v1610 = vpop.permute.xlu0 %1609
        %1611 = vrot.lane.b32.xlu0 %v1530, 7
        %v1612 = vpop.permute.xlu0 %1611
        %1613 = vrot.lane.b32.xlu0 %v1531, 7
        %v1614 = vpop.permute.xlu0 %1613
        %1615 = vrot.lane.b32.xlu0 %v1532, 7
        %v1616 = vpop.permute.xlu0 %1615
        %vm1621 = vcmask 1040384
        %v1622 = vsel %vm1621, %v1529, %v1538
        %v1623 = vsel %vm1621, %v1530, %v1540
        %v1624 = vsel %vm1621, %v1531, %v1542
        %v1625 = vsel %vm1621, %v1532, %v1544
        %vm1626 = vcmask 1041408
        %v1627 = vsel %vm1626, %v1622, %v1550
        %v1628 = vsel %vm1626, %v1623, %v1552
        %v1629 = vsel %vm1626, %v1624, %v1554
        %v1630 = vsel %vm1626, %v1625, %v1556
        %vm1631 = vcmask 1042432
        %v1632 = vsel %vm1631, %v1627, %v1562
        %v1633 = vsel %vm1631, %v1628, %v1564
        %v1634 = vsel %vm1631, %v1629, %v1566
        %v1635 = vsel %vm1631, %v1630, %v1568
        %vm1636 = vcmask 1043456
        %v1637 = vsel %vm1636, %v1632, %v1574
        %v1638 = vsel %vm1636, %v1633, %v1576
        %v1639 = vsel %vm1636, %v1634, %v1578
        %v1640 = vsel %vm1636, %v1635, %v1580
        %vm1641 = vcmask 1044480
        %v1642 = vsel %vm1641, %v1637, %v1586
        %v1643 = vsel %vm1641, %v1638, %v1588
        %v1644 = vsel %vm1641, %v1639, %v1590
        %v1645 = vsel %vm1641, %v1640, %v1592
        %vm1646 = vcmask 1045504
        %v1647 = vsel %vm1646, %v1642, %v1598
        %v1648 = vsel %vm1646, %v1643, %v1600
        %v1649 = vsel %vm1646, %v1644, %v1602
        %v1650 = vsel %vm1646, %v1645, %v1604
        %vm1651 = vcmask 1046528
        %v1652 = vsel %vm1651, %v1647, %v1610
        %v1653 = vsel %vm1651, %v1648, %v1612
        %v1654 = vsel %vm1651, %v1649, %v1614
        %v1655 = vsel %vm1651, %v1650, %v1616
        %1657 = vrot.lane.b32.xlu0 %v1254, 96
        %v1658 = vpop.permute.xlu0 %1657
        %1660 = vrot.lane.b32.xlu0 %v1652, 121
        %v1661 = vpop.permute.xlu0 %1660
        %v1664 = vsel %vm1344, %v1304, 0
        %v1667 = vsel %vm1344, %v1658, 0
        %1669 = vmatprep.subr.bf16.mxu0 0
        %1670 = vmatpush1.bf16.xpose.msra.mxu0 %v1667
        %1671 = vmatprep.subr.bf16.mxu0 0
        %1672 = vmatpush1.bf16.xpose.msra.mxu0 0
        %1673 = vmatprep.subr.bf16.mxu0 0
        %1674 = vmatpush1.bf16.xpose.msra.mxu0 0
        %1675 = vmatprep.subr.bf16.mxu0 0
        %1676 = vmatpush1.bf16.xpose.msra.mxu0 0
        %1677 = vmatprep.subr.bf16.mxu0 0
        %1678 = vmatpush1.bf16.xpose.msra.mxu0 0
        %1679 = vmatprep.subr.bf16.mxu0 0
        %1680 = vmatpush1.bf16.xpose.msra.mxu0 0
        %1681 = vmatprep.subr.bf16.mxu0 0
        %1682 = vmatpush1.bf16.xpose.msra.mxu0 0
        %1683 = vmatprep.subr.bf16.mxu0 0
        %1684 = vmatpush1.bf16.xpose.msra.mxu0 0
        %1685 = vmatprep.subr.bf16.mxu0 0
        %1686 = vmatpush1.bf16.xpose.msra.mxu0 0
        %1687 = vmatprep.subr.bf16.mxu0 0
        %1688 = vmatpush1.bf16.xpose.msra.mxu0 0
        %1689 = vmatprep.subr.bf16.mxu0 0
        %1690 = vmatpush1.bf16.xpose.msra.mxu0 0
        %1691 = vmatprep.subr.bf16.mxu0 0
        %1692 = vmatpush1.bf16.xpose.msra.mxu0 0
        %1693 = vmatprep.subr.bf16.mxu0 0
        %1694 = vmatpush1.bf16.xpose.msra.mxu0 0
        %1695 = vmatprep.subr.bf16.mxu0 0
        %1696 = vmatpush1.bf16.xpose.msra.mxu0 0
        %1697 = vmatprep.subr.bf16.mxu0 0
        %1698 = vmatpush1.bf16.xpose.msra.mxu0 0
        %1699 = vmatprep.subr.bf16.mxu0 0
        %1700 = vmatpush1.bf16.xpose.msra.mxu0 0
        %1701 = vmatprep.mubr.bf16.mxu0 0
        %1702 = vmatmul.mubr.bf16.gmra.mrb[0].mxu0 %v1664
        %v1703 = vpop.f32.mrb[0].mxu0
        %v1704 = vadd.f32 %v1661, %v1703
        %v1705 = vpop.f32.mrb[0].mxu0
        %v1706 = vpop.f32.mrb[0].mxu0
        %v1707 = vpop.f32.mrb[0].mxu0
        %1708 = vdwg.mxu0
        %1710 = vrot.lane.b32.xlu0 %v1255, 96
        %v1711 = vpop.permute.xlu0 %1710
        %1713 = vrot.lane.b32.xlu0 %v1653, 121
        %v1714 = vpop.permute.xlu0 %1713
        %v1717 = vsel %vm1344, %v1305, 0
        %v1720 = vsel %vm1344, %v1711, 0
        %1722 = vmatprep.subr.bf16.mxu0 0
        %1723 = vmatpush1.bf16.xpose.msra.mxu0 %v1720
        %1724 = vmatprep.subr.bf16.mxu0 0
        %1725 = vmatpush1.bf16.xpose.msra.mxu0 0
        %1726 = vmatprep.subr.bf16.mxu0 0
        %1727 = vmatpush1.bf16.xpose.msra.mxu0 0
        %1728 = vmatprep.subr.bf16.mxu0 0
        %1729 = vmatpush1.bf16.xpose.msra.mxu0 0
        %1730 = vmatprep.subr.bf16.mxu0 0
        %1731 = vmatpush1.bf16.xpose.msra.mxu0 0
        %1732 = vmatprep.subr.bf16.mxu0 0
        %1733 = vmatpush1.bf16.xpose.msra.mxu0 0
        %1734 = vmatprep.subr.bf16.mxu0 0
        %1735 = vmatpush1.bf16.xpose.msra.mxu0 0
        %1736 = vmatprep.subr.bf16.mxu0 0
        %1737 = vmatpush1.bf16.xpose.msra.mxu0 0
        %1738 = vmatprep.subr.bf16.mxu0 0
        %1739 = vmatpush1.bf16.xpose.msra.mxu0 0
        %1740 = vmatprep.subr.bf16.mxu0 0
        %1741 = vmatpush1.bf16.xpose.msra.mxu0 0
        %1742 = vmatprep.subr.bf16.mxu0 0
        %1743 = vmatpush1.bf16.xpose.msra.mxu0 0
        %1744 = vmatprep.subr.bf16.mxu0 0
        %1745 = vmatpush1.bf16.xpose.msra.mxu0 0
        %1746 = vmatprep.subr.bf16.mxu0 0
        %1747 = vmatpush1.bf16.xpose.msra.mxu0 0
        %1748 = vmatprep.subr.bf16.mxu0 0
        %1749 = vmatpush1.bf16.xpose.msra.mxu0 0
        %1750 = vmatprep.subr.bf16.mxu0 0
        %1751 = vmatpush1.bf16.xpose.msra.mxu0 0
        %1752 = vmatprep.subr.bf16.mxu0 0
        %1753 = vmatpush1.bf16.xpose.msra.mxu0 0
        %1754 = vmatprep.mubr.bf16.mxu0 0
        %1755 = vmatmul.mubr.bf16.gmra.mrb[0].mxu0 %v1717
        %v1756 = vpop.f32.mrb[0].mxu0
        %v1757 = vadd.f32 %v1714, %v1756
        %v1758 = vpop.f32.mrb[0].mxu0
        %v1759 = vpop.f32.mrb[0].mxu0
        %v1760 = vpop.f32.mrb[0].mxu0
        %1761 = vdwg.mxu0
        %1763 = vrot.lane.b32.xlu0 %v1256, 96
        %v1764 = vpop.permute.xlu0 %1763
        %1766 = vrot.lane.b32.xlu0 %v1654, 121
        %v1767 = vpop.permute.xlu0 %1766
        %v1770 = vsel %vm1344, %v1306, 0
        %v1773 = vsel %vm1344, %v1764, 0
        %1775 = vmatprep.subr.bf16.mxu0 0
        %1776 = vmatpush1.bf16.xpose.msra.mxu0 %v1773
        %1777 = vmatprep.subr.bf16.mxu0 0
        %1778 = vmatpush1.bf16.xpose.msra.mxu0 0
        %1779 = vmatprep.subr.bf16.mxu0 0
        %1780 = vmatpush1.bf16.xpose.msra.mxu0 0
        %1781 = vmatprep.subr.bf16.mxu0 0
        %1782 = vmatpush1.bf16.xpose.msra.mxu0 0
        %1783 = vmatprep.subr.bf16.mxu0 0
        %1784 = vmatpush1.bf16.xpose.msra.mxu0 0
        %1785 = vmatprep.subr.bf16.mxu0 0
        %1786 = vmatpush1.bf16.xpose.msra.mxu0 0
        %1787 = vmatprep.subr.bf16.mxu0 0
        %1788 = vmatpush1.bf16.xpose.msra.mxu0 0
        %1789 = vmatprep.subr.bf16.mxu0 0
        %1790 = vmatpush1.bf16.xpose.msra.mxu0 0
        %1791 = vmatprep.subr.bf16.mxu0 0
        %1792 = vmatpush1.bf16.xpose.msra.mxu0 0
        %1793 = vmatprep.subr.bf16.mxu0 0
        %1794 = vmatpush1.bf16.xpose.msra.mxu0 0
        %1795 = vmatprep.subr.bf16.mxu0 0
        %1796 = vmatpush1.bf16.xpose.msra.mxu0 0
        %1797 = vmatprep.subr.bf16.mxu0 0
        %1798 = vmatpush1.bf16.xpose.msra.mxu0 0
        %1799 = vmatprep.subr.bf16.mxu0 0
        %1800 = vmatpush1.bf16.xpose.msra.mxu0 0
        %1801 = vmatprep.subr.bf16.mxu0 0
        %1802 = vmatpush1.bf16.xpose.msra.mxu0 0
        %1803 = vmatprep.subr.bf16.mxu0 0
        %1804 = vmatpush1.bf16.xpose.msra.mxu0 0
        %1805 = vmatprep.subr.bf16.mxu0 0
        %1806 = vmatpush1.bf16.xpose.msra.mxu0 0
        %1807 = vmatprep.mubr.bf16.mxu0 0
        %1808 = vmatmul.mubr.bf16.gmra.mrb[0].mxu0 %v1770
        %v1809 = vpop.f32.mrb[0].mxu0
        %v1810 = vadd.f32 %v1767, %v1809
        %v1811 = vpop.f32.mrb[0].mxu0
        %v1812 = vpop.f32.mrb[0].mxu0
        %v1813 = vpop.f32.mrb[0].mxu0
        %1814 = vdwg.mxu0
        %1816 = vrot.lane.b32.xlu0 %v1257, 96
        %v1817 = vpop.permute.xlu0 %1816
        %1819 = vrot.lane.b32.xlu0 %v1655, 121
        %v1820 = vpop.permute.xlu0 %1819
        %v1823 = vsel %vm1344, %v1307, 0
        %v1826 = vsel %vm1344, %v1817, 0
        %1828 = vmatprep.subr.bf16.mxu0 0
        %1829 = vmatpush1.bf16.xpose.msra.mxu0 %v1826
        %1830 = vmatprep.subr.bf16.mxu0 0
        %1831 = vmatpush1.bf16.xpose.msra.mxu0 0
        %1832 = vmatprep.subr.bf16.mxu0 0
        %1833 = vmatpush1.bf16.xpose.msra.mxu0 0
        %1834 = vmatprep.subr.bf16.mxu0 0
        %1835 = vmatpush1.bf16.xpose.msra.mxu0 0
        %1836 = vmatprep.subr.bf16.mxu0 0
        %1837 = vmatpush1.bf16.xpose.msra.mxu0 0
        %1838 = vmatprep.subr.bf16.mxu0 0
        %1839 = vmatpush1.bf16.xpose.msra.mxu0 0
        %1840 = vmatprep.subr.bf16.mxu0 0
        %1841 = vmatpush1.bf16.xpose.msra.mxu0 0
        %1842 = vmatprep.subr.bf16.mxu0 0
        %1843 = vmatpush1.bf16.xpose.msra.mxu0 0
        %1844 = vmatprep.subr.bf16.mxu0 0
        %1845 = vmatpush1.bf16.xpose.msra.mxu0 0
        %1846 = vmatprep.subr.bf16.mxu0 0
        %1847 = vmatpush1.bf16.xpose.msra.mxu0 0
        %1848 = vmatprep.subr.bf16.mxu0 0
        %1849 = vmatpush1.bf16.xpose.msra.mxu0 0
        %1850 = vmatprep.subr.bf16.mxu0 0
        %1851 = vmatpush1.bf16.xpose.msra.mxu0 0
        %1852 = vmatprep.subr.bf16.mxu0 0
        %1853 = vmatpush1.bf16.xpose.msra.mxu0 0
        %1854 = vmatprep.subr.bf16.mxu0 0
        %1855 = vmatpush1.bf16.xpose.msra.mxu0 0
        %1856 = vmatprep.subr.bf16.mxu0 0
        %1857 = vmatpush1.bf16.xpose.msra.mxu0 0
        %1858 = vmatprep.subr.bf16.mxu0 0
        %1859 = vmatpush1.bf16.xpose.msra.mxu0 0
        %1860 = vmatprep.mubr.bf16.mxu0 0
        %1861 = vmatmul.mubr.bf16.gmra.mrb[0].mxu0 %v1823
        %v1862 = vpop.f32.mrb[0].mxu0
        %v1863 = vadd.f32 %v1820, %v1862
        %v1864 = vpop.f32.mrb[0].mxu0
        %v1865 = vpop.f32.mrb[0].mxu0
        %v1866 = vpop.f32.mrb[0].mxu0
        %1867 = vdwg.mxu0
        %v1868 = vmul.f32 %v1704, 0.35355338
        %v1869 = vmul.f32 %v1757, 0.35355338
        %v1870 = vmul.f32 %v1810, 0.35355338
        %v1871 = vmul.f32 %v1863, 0.35355338
        %v1872 = vadd.f32 %v1868, %v1026
        %v1873 = vadd.f32 %v1869, %v1026
        %v1874 = vadd.f32 %v1870, %v1026
        %v1875 = vadd.f32 %v1871, %v1026
        %v1876 = vsel %vm1344, %v1872, -inf
        %1877 = vmax.xlane.f32.xlu0 %v1876
        %v1878 = vpop.xlane.xlu0 %1877
        %v1879 = vsel %vm1344, %v1873, -inf
        %1880 = vmax.xlane.f32.xlu0 %v1879
        %v1881 = vpop.xlane.xlu0 %1880
        %v1882 = vsel %vm1344, %v1874, -inf
        %1883 = vmax.xlane.f32.xlu0 %v1882
        %v1884 = vpop.xlane.xlu0 %1883
        %v1885 = vsel %vm1344, %v1875, -inf
        %1886 = vmax.xlane.f32.xlu0 %v1885
        %v1887 = vpop.xlane.xlu0 %1886
        %v1888 = vsub.f32 %v1872, %v1878
        %v1889 = vsub.f32 %v1873, %v1881
        %v1890 = vsub.f32 %v1874, %v1884
        %v1891 = vsub.f32 %v1875, %v1887
        %v1892 = vmul.f32 %v1888, 1.442695
        %v1893 = vpow.pop %v1892
        %v1894 = vmul.f32 %v1889, 1.442695
        %v1895 = vpow.pop %v1894
        %v1896 = vmul.f32 %v1890, 1.442695
        %v1897 = vpow.pop %v1896
        %v1898 = vmul.f32 %v1891, 1.442695
        %v1899 = vpow.pop %v1898
        %v1900 = vsel %vm1344, %v1893, 0.0
        %1901 = vadd.xlane.f32.xlu0 %v1900
        %v1902 = vpop.xlane.xlu0 %1901
        %v1903 = vsel %vm1344, %v1895, 0.0
        %1904 = vadd.xlane.f32.xlu0 %v1903
        %v1905 = vpop.xlane.xlu0 %1904
        %v1906 = vsel %vm1344, %v1897, 0.0
        %1907 = vadd.xlane.f32.xlu0 %v1906
        %v1908 = vpop.xlane.xlu0 %1907
        %v1909 = vsel %vm1344, %v1899, 0.0
        %1910 = vadd.xlane.f32.xlu0 %v1909
        %v1911 = vpop.xlane.xlu0 %1910
        %v1912 = vrcp.pop %v1902
        %v1913 = vrcp.pop %v1905
        %v1914 = vrcp.pop %v1908
        %v1915 = vrcp.pop %v1911
        %v1916 = vmul.f32 %v1893, %v1912
        %v1917 = vmul.f32 %v1895, %v1913
        %v1918 = vmul.f32 %v1897, %v1914
        %v1919 = vmul.f32 %v1899, %v1915
        %v1920 = vpack.c.bf16 %v1916, %v1916
        %v1921 = vpack.c.bf16 %v1917, %v1917
        %v1922 = vpack.c.bf16 %v1918, %v1918
        %v1923 = vpack.c.bf16 %v1919, %v1919
        %1924 = vrot.lane.b32.xlu0 %v1254, 64
        %v1925 = vpop.permute.xlu0 %1924
        %v1927 = vsel %vm1344, %v1920, 0
        %v1930 = vsel %vm1636, %v1925, 0
        %1932 = vmatprep.subr.bf16.mxu0 0
        %1933 = vmatpush1.bf16.msra.mxu0 %v1930
        %1934 = vmatprep.subr.bf16.mxu0 0
        %1935 = vmatpush1.bf16.msra.mxu0 0
        %1936 = vmatprep.subr.bf16.mxu0 0
        %1937 = vmatpush1.bf16.msra.mxu0 0
        %1938 = vmatprep.subr.bf16.mxu0 0
        %1939 = vmatpush1.bf16.msra.mxu0 0
        %1940 = vmatprep.subr.bf16.mxu0 0
        %1941 = vmatpush1.bf16.msra.mxu0 0
        %1942 = vmatprep.subr.bf16.mxu0 0
        %1943 = vmatpush1.bf16.msra.mxu0 0
        %1944 = vmatprep.subr.bf16.mxu0 0
        %1945 = vmatpush1.bf16.msra.mxu0 0
        %1946 = vmatprep.subr.bf16.mxu0 0
        %1947 = vmatpush1.bf16.msra.mxu0 0
        %1948 = vmatprep.subr.bf16.mxu0 0
        %1949 = vmatpush1.bf16.msra.mxu0 0
        %1950 = vmatprep.subr.bf16.mxu0 0
        %1951 = vmatpush1.bf16.msra.mxu0 0
        %1952 = vmatprep.subr.bf16.mxu0 0
        %1953 = vmatpush1.bf16.msra.mxu0 0
        %1954 = vmatprep.subr.bf16.mxu0 0
        %1955 = vmatpush1.bf16.msra.mxu0 0
        %1956 = vmatprep.subr.bf16.mxu0 0
        %1957 = vmatpush1.bf16.msra.mxu0 0
        %1958 = vmatprep.subr.bf16.mxu0 0
        %1959 = vmatpush1.bf16.msra.mxu0 0
        %1960 = vmatprep.subr.bf16.mxu0 0
        %1961 = vmatpush1.bf16.msra.mxu0 0
        %1962 = vmatprep.subr.bf16.mxu0 0
        %1963 = vmatpush1.bf16.msra.mxu0 0
        %1964 = vmatprep.mubr.bf16.mxu0 0
        %1965 = vmatmul.mubr.bf16.gmra.mrb[0].mxu0 %v1927
        %v1966 = vpop.f32.mrb[0].mxu0
        %v1967 = vadd.f32 0.0, %v1966
        %v1968 = vpop.f32.mrb[0].mxu0
        %v1969 = vpop.f32.mrb[0].mxu0
        %v1970 = vpop.f32.mrb[0].mxu0
        %1971 = vdwg.mxu0
        %1972 = vrot.lane.b32.xlu0 %v1255, 64
        %v1973 = vpop.permute.xlu0 %1972
        %v1975 = vsel %vm1344, %v1921, 0
        %v1978 = vsel %vm1636, %v1973, 0
        %1980 = vmatprep.subr.bf16.mxu0 0
        %1981 = vmatpush1.bf16.msra.mxu0 %v1978
        %1982 = vmatprep.subr.bf16.mxu0 0
        %1983 = vmatpush1.bf16.msra.mxu0 0
        %1984 = vmatprep.subr.bf16.mxu0 0
        %1985 = vmatpush1.bf16.msra.mxu0 0
        %1986 = vmatprep.subr.bf16.mxu0 0
        %1987 = vmatpush1.bf16.msra.mxu0 0
        %1988 = vmatprep.subr.bf16.mxu0 0
        %1989 = vmatpush1.bf16.msra.mxu0 0
        %1990 = vmatprep.subr.bf16.mxu0 0
        %1991 = vmatpush1.bf16.msra.mxu0 0
        %1992 = vmatprep.subr.bf16.mxu0 0
        %1993 = vmatpush1.bf16.msra.mxu0 0
        %1994 = vmatprep.subr.bf16.mxu0 0
        %1995 = vmatpush1.bf16.msra.mxu0 0
        %1996 = vmatprep.subr.bf16.mxu0 0
        %1997 = vmatpush1.bf16.msra.mxu0 0
        %1998 = vmatprep.subr.bf16.mxu0 0
        %1999 = vmatpush1.bf16.msra.mxu0 0
        %2000 = vmatprep.subr.bf16.mxu0 0
        %2001 = vmatpush1.bf16.msra.mxu0 0
        %2002 = vmatprep.subr.bf16.mxu0 0
        %2003 = vmatpush1.bf16.msra.mxu0 0
        %2004 = vmatprep.subr.bf16.mxu0 0
        %2005 = vmatpush1.bf16.msra.mxu0 0
        %2006 = vmatprep.subr.bf16.mxu0 0
        %2007 = vmatpush1.bf16.msra.mxu0 0
        %2008 = vmatprep.subr.bf16.mxu0 0
        %2009 = vmatpush1.bf16.msra.mxu0 0
        %2010 = vmatprep.subr.bf16.mxu0 0
        %2011 = vmatpush1.bf16.msra.mxu0 0
        %2012 = vmatprep.mubr.bf16.mxu0 0
        %2013 = vmatmul.mubr.bf16.gmra.mrb[0].mxu0 %v1975
        %v2014 = vpop.f32.mrb[0].mxu0
        %v2015 = vadd.f32 0.0, %v2014
        %v2016 = vpop.f32.mrb[0].mxu0
        %v2017 = vpop.f32.mrb[0].mxu0
        %v2018 = vpop.f32.mrb[0].mxu0
        %2019 = vdwg.mxu0
        %2020 = vrot.lane.b32.xlu0 %v1256, 64
        %v2021 = vpop.permute.xlu0 %2020
        %v2023 = vsel %vm1344, %v1922, 0
        %v2026 = vsel %vm1636, %v2021, 0
        %2028 = vmatprep.subr.bf16.mxu0 0
        %2029 = vmatpush1.bf16.msra.mxu0 %v2026
        %2030 = vmatprep.subr.bf16.mxu0 0
        %2031 = vmatpush1.bf16.msra.mxu0 0
        %2032 = vmatprep.subr.bf16.mxu0 0
        %2033 = vmatpush1.bf16.msra.mxu0 0
        %2034 = vmatprep.subr.bf16.mxu0 0
        %2035 = vmatpush1.bf16.msra.mxu0 0
        %2036 = vmatprep.subr.bf16.mxu0 0
        %2037 = vmatpush1.bf16.msra.mxu0 0
        %2038 = vmatprep.subr.bf16.mxu0 0
        %2039 = vmatpush1.bf16.msra.mxu0 0
        %2040 = vmatprep.subr.bf16.mxu0 0
        %2041 = vmatpush1.bf16.msra.mxu0 0
        %2042 = vmatprep.subr.bf16.mxu0 0
        %2043 = vmatpush1.bf16.msra.mxu0 0
        %2044 = vmatprep.subr.bf16.mxu0 0
        %2045 = vmatpush1.bf16.msra.mxu0 0
        %2046 = vmatprep.subr.bf16.mxu0 0
        %2047 = vmatpush1.bf16.msra.mxu0 0
        %2048 = vmatprep.subr.bf16.mxu0 0
        %2049 = vmatpush1.bf16.msra.mxu0 0
        %2050 = vmatprep.subr.bf16.mxu0 0
        %2051 = vmatpush1.bf16.msra.mxu0 0
        %2052 = vmatprep.subr.bf16.mxu0 0
        %2053 = vmatpush1.bf16.msra.mxu0 0
        %2054 = vmatprep.subr.bf16.mxu0 0
        %2055 = vmatpush1.bf16.msra.mxu0 0
        %2056 = vmatprep.subr.bf16.mxu0 0
        %2057 = vmatpush1.bf16.msra.mxu0 0
        %2058 = vmatprep.subr.bf16.mxu0 0
        %2059 = vmatpush1.bf16.msra.mxu0 0
        %2060 = vmatprep.mubr.bf16.mxu0 0
        %2061 = vmatmul.mubr.bf16.gmra.mrb[0].mxu0 %v2023
        %v2062 = vpop.f32.mrb[0].mxu0
        %v2063 = vadd.f32 0.0, %v2062
        %v2064 = vpop.f32.mrb[0].mxu0
        %v2065 = vpop.f32.mrb[0].mxu0
        %v2066 = vpop.f32.mrb[0].mxu0
        %2067 = vdwg.mxu0
        %2068 = vrot.lane.b32.xlu0 %v1257, 64
        %v2069 = vpop.permute.xlu0 %2068
        %v2071 = vsel %vm1344, %v1923, 0
        %v2074 = vsel %vm1636, %v2069, 0
        %2076 = vmatprep.subr.bf16.mxu0 0
        %2077 = vmatpush1.bf16.msra.mxu0 %v2074
        %2078 = vmatprep.subr.bf16.mxu0 0
        %2079 = vmatpush1.bf16.msra.mxu0 0
        %2080 = vmatprep.subr.bf16.mxu0 0
        %2081 = vmatpush1.bf16.msra.mxu0 0
        %2082 = vmatprep.subr.bf16.mxu0 0
        %2083 = vmatpush1.bf16.msra.mxu0 0
        %2084 = vmatprep.subr.bf16.mxu0 0
        %2085 = vmatpush1.bf16.msra.mxu0 0
        %2086 = vmatprep.subr.bf16.mxu0 0
        %2087 = vmatpush1.bf16.msra.mxu0 0
        %2088 = vmatprep.subr.bf16.mxu0 0
        %2089 = vmatpush1.bf16.msra.mxu0 0
        %2090 = vmatprep.subr.bf16.mxu0 0
        %2091 = vmatpush1.bf16.msra.mxu0 0
        %2092 = vmatprep.subr.bf16.mxu0 0
        %2093 = vmatpush1.bf16.msra.mxu0 0
        %2094 = vmatprep.subr.bf16.mxu0 0
        %2095 = vmatpush1.bf16.msra.mxu0 0
        %2096 = vmatprep.subr.bf16.mxu0 0
        %2097 = vmatpush1.bf16.msra.mxu0 0
        %2098 = vmatprep.subr.bf16.mxu0 0
        %2099 = vmatpush1.bf16.msra.mxu0 0
        %2100 = vmatprep.subr.bf16.mxu0 0
        %2101 = vmatpush1.bf16.msra.mxu0 0
        %2102 = vmatprep.subr.bf16.mxu0 0
        %2103 = vmatpush1.bf16.msra.mxu0 0
        %2104 = vmatprep.subr.bf16.mxu0 0
        %2105 = vmatpush1.bf16.msra.mxu0 0
        %2106 = vmatprep.subr.bf16.mxu0 0
        %2107 = vmatpush1.bf16.msra.mxu0 0
        %2108 = vmatprep.mubr.bf16.mxu0 0
        %2109 = vmatmul.mubr.bf16.gmra.mrb[0].mxu0 %v2071
        %v2110 = vpop.f32.mrb[0].mxu0
        %v2111 = vadd.f32 0.0, %v2110
        %v2112 = vpop.f32.mrb[0].mxu0
        %v2113 = vpop.f32.mrb[0].mxu0
        %v2114 = vpop.f32.mrb[0].mxu0
        %2115 = vdwg.mxu0
        %2117 = vrot.lane.b32.xlu0 %v2015, 8
        %v2118 = vpop.permute.xlu0 %2117
        %2121 = vrot.lane.b32.xlu0 %v2063, 16
        %v2122 = vpop.permute.xlu0 %2121
        %2125 = vrot.lane.b32.xlu0 %v2111, 24
        %v2126 = vpop.permute.xlu0 %2125
        %v2128 = vsel %vm1344, %v1967, %v2118
        %vm2129 = vcmask 130048
        %v2130 = vsel %vm2129, %v2128, %v2122
        %vm2131 = vcmask 195584
        %v2132 = vsel %vm2131, %v2130, %v2126
        %v2133 = vld [vmem:[%s29] sm:$0xf]
        %v2134 = vld [vmem:[%s29 + $0x4] sm:$0xf]
        %v2135 = vld [vmem:[%s29 + $0x8] sm:$0xf]
        %v2136 = vld [vmem:[%s29 + $0xc] sm:$0xf]
        %v2137 = vld [vmem:[%s31] sm:$0x1]
        %v2138 = vpack.c.bf16 %v2132, %v2132
        %v2140 = vlaneseq
        %v2141 = vshrl.u32 %v2140, 7
        %v2142 = vsub.s32 0, %v2141
        %v2143 = vrot.slane %v2137, %v2142
        %v2149 = vunpack.c.l.b16 %v2133
        %v2150 = vunpack.c.l.b16 %v2134
        %v2151 = vunpack.c.l.b16 %v2135
        %v2152 = vunpack.c.l.b16 %v2136
        %v2153 = vpack.c.b16 %v2150, %v2149
        %v2154 = vpack.c.b16 %v2152, %v2151
        %v2156 = vsel %vm1032, %v2138, 0
        %v2159 = vsel %vm1032, %v2153, 0
        %v2162 = vsel %vm1032, %v2154, 0
        %2164 = vmatprep.subr.bf16.mxu0 0
        %2165 = vmatpush1.bf16.xpose.msra.mxu0 %v2159
        %2166 = vmatprep.subr.bf16.mxu0 0
        %2167 = vmatpush1.bf16.xpose.msra.mxu0 %v2162
        %2168 = vmatprep.subr.bf16.mxu0 0
        %2169 = vmatpush1.bf16.xpose.msra.mxu0 0
        %2170 = vmatprep.subr.bf16.mxu0 0
        %2171 = vmatpush1.bf16.xpose.msra.mxu0 0
        %2172 = vmatprep.subr.bf16.mxu0 0
        %2173 = vmatpush1.bf16.xpose.msra.mxu0 0
        %2174 = vmatprep.subr.bf16.mxu0 0
        %2175 = vmatpush1.bf16.xpose.msra.mxu0 0
        %2176 = vmatprep.subr.bf16.mxu0 0
        %2177 = vmatpush1.bf16.xpose.msra.mxu0 0
        %2178 = vmatprep.subr.bf16.mxu0 0
        %2179 = vmatpush1.bf16.xpose.msra.mxu0 0
        %2180 = vmatprep.subr.bf16.mxu0 0
        %2181 = vmatpush1.bf16.xpose.msra.mxu0 0
        %2182 = vmatprep.subr.bf16.mxu0 0
        %2183 = vmatpush1.bf16.xpose.msra.mxu0 0
        %2184 = vmatprep.subr.bf16.mxu0 0
        %2185 = vmatpush1.bf16.xpose.msra.mxu0 0
        %2186 = vmatprep.subr.bf16.mxu0 0
        %2187 = vmatpush1.bf16.xpose.msra.mxu0 0
        %2188 = vmatprep.subr.bf16.mxu0 0
        %2189 = vmatpush1.bf16.xpose.msra.mxu0 0
        %2190 = vmatprep.subr.bf16.mxu0 0
        %2191 = vmatpush1.bf16.xpose.msra.mxu0 0
        %2192 = vmatprep.subr.bf16.mxu0 0
        %2193 = vmatpush1.bf16.xpose.msra.mxu0 0
        %2194 = vmatprep.subr.bf16.mxu0 0
        %2195 = vmatpush1.bf16.xpose.msra.mxu0 0
        %2196 = vmatprep.mubr.bf16.mxu0 0
        %2197 = vmatmul.mubr.bf16.gmra.mrb[0].mxu0 %v2156
        %v2198 = vpop.f32.mrb[0].mxu0
        %v2199 = vadd.f32 %v2143, %v2198
        %v2200 = vpop.f32.mrb[0].mxu0
        %v2201 = vpop.f32.mrb[0].mxu0
        %v2202 = vpop.f32.mrb[0].mxu0
        %2203 = vdwg.mxu0
        %v2204 = vadd.f32 %v1022, %v2199
        %v2205 = vld [vmem:[%s33] sm:$0x1]
        %v2206 = vld [vmem:[%s35] sm:$0x1]
        %v2207 = vsel %vm1032, %v2204, 0.0
        %2208 = vadd.xlane.f32.xlu0 %v2207
        %v2209 = vpop.xlane.xlu0 %2208
        %v2210 = vmul.f32 %v2209, %v1036
        %v2211 = vsub.f32 %v2204, %v2210
        %v2212 = vmul.f32 %v2211, %v2211
        %v2213 = vsel %vm1032, %v2212, 0.0
        %2214 = vadd.xlane.f32.xlu0 %v2213
        %v2215 = vpop.xlane.xlu0 %2214
        %v2216 = vmul.f32 %v2215, %v1036
        %v2217 = vadd.f32 %v2216, 1e-05
        %v2218 = vrsqrt.pop %v2217
        %v2219 = vmul.f32 %v2211, %v2218
        %v2221 = vlaneseq
        %v2222 = vshrl.u32 %v2221, 7
        %v2223 = vsub.s32 0, %v2222
        %v2224 = vrot.slane %v2205, %v2223
        %v2226 = vmul.f32 %v2219, %v2224
        %v2228 = vlaneseq
        %v2229 = vshrl.u32 %v2228, 7
        %v2230 = vsub.s32 0, %v2229
        %v2231 = vrot.slane %v2206, %v2230
        %v2233 = vadd.f32 %v2226, %v2231
        %v2234 = vld [vmem:[%s37] sm:$0xf]
        %v2235 = vld [vmem:[%s37 + $0x4] sm:$0xf]
        %v2236 = vld [vmem:[%s37 + $0x8] sm:$0xf]
        %v2237 = vld [vmem:[%s37 + $0xc] sm:$0xf]
        %v2238 = vld [vmem:[%s39] sm:$0x1]
        %v2239 = vpack.c.bf16 %v2233, %v2233
        %v2241 = vlaneseq
        %v2242 = vshrl.u32 %v2241, 7
        %v2243 = vsub.s32 0, %v2242
        %v2244 = vrot.slane %v2238, %v2243
        %v2250 = vunpack.c.l.b16 %v2234
        %v2251 = vunpack.c.l.b16 %v2235
        %v2252 = vunpack.c.l.b16 %v2236
        %v2253 = vunpack.c.l.b16 %v2237
        %v2254 = vpack.c.b16 %v2251, %v2250
        %v2255 = vpack.c.b16 %v2253, %v2252
        %v2257 = vsel %vm1032, %v2239, 0
        %v2260 = vsel %vm1032, %v2254, 0
        %v2263 = vsel %vm1032, %v2255, 0
        %2265 = vmatprep.subr.bf16.mxu0 0
        %2266 = vmatpush1.bf16.xpose.msra.mxu0 %v2260
        %2267 = vmatprep.subr.bf16.mxu0 0
        %2268 = vmatpush1.bf16.xpose.msra.mxu0 %v2263
        %2269 = vmatprep.subr.bf16.mxu0 0
        %2270 = vmatpush1.bf16.xpose.msra.mxu0 0
        %2271 = vmatprep.subr.bf16.mxu0 0
        %2272 = vmatpush1.bf16.xpose.msra.mxu0 0
        %2273 = vmatprep.subr.bf16.mxu0 0
        %2274 = vmatpush1.bf16.xpose.msra.mxu0 0
        %2275 = vmatprep.subr.bf16.mxu0 0
        %2276 = vmatpush1.bf16.xpose.msra.mxu0 0
        %2277 = vmatprep.subr.bf16.mxu0 0
        %2278 = vmatpush1.bf16.xpose.msra.mxu0 0
        %2279 = vmatprep.subr.bf16.mxu0 0
        %2280 = vmatpush1.bf16.xpose.msra.mxu0 0
        %2281 = vmatprep.subr.bf16.mxu0 0
        %2282 = vmatpush1.bf16.xpose.msra.mxu0 0
        %2283 = vmatprep.subr.bf16.mxu0 0
        %2284 = vmatpush1.bf16.xpose.msra.mxu0 0
        %2285 = vmatprep.subr.bf16.mxu0 0
        %2286 = vmatpush1.bf16.xpose.msra.mxu0 0
        %2287 = vmatprep.subr.bf16.mxu0 0
        %2288 = vmatpush1.bf16.xpose.msra.mxu0 0
        %2289 = vmatprep.subr.bf16.mxu0 0
        %2290 = vmatpush1.bf16.xpose.msra.mxu0 0
        %2291 = vmatprep.subr.bf16.mxu0 0
        %2292 = vmatpush1.bf16.xpose.msra.mxu0 0
        %2293 = vmatprep.subr.bf16.mxu0 0
        %2294 = vmatpush1.bf16.xpose.msra.mxu0 0
        %2295 = vmatprep.subr.bf16.mxu0 0
        %2296 = vmatpush1.bf16.xpose.msra.mxu0 0
        %2297 = vmatprep.mubr.bf16.mxu0 0
        %2298 = vmatmul.mubr.bf16.gmra.mrb[0].mxu0 %v2257
        %v2299 = vpop.f32.mrb[0].mxu0
        %v2300 = vadd.f32 %v2244, %v2299
        %v2301 = vpop.f32.mrb[0].mxu0
        %v2302 = vpop.f32.mrb[0].mxu0
        %v2303 = vpop.f32.mrb[0].mxu0
        %2304 = vdwg.mxu0
        %v2305 = vld [vmem:[%s41] sm:$0xf]
        %v2306 = vld [vmem:[%s41 + $0x4] sm:$0xf]
        %v2307 = vld [vmem:[%s41 + $0x8] sm:$0xf]
        %v2308 = vld [vmem:[%s41 + $0xc] sm:$0xf]
        %v2309 = vld [vmem:[%s41 + $0x10] sm:$0xf]
        %v2310 = vld [vmem:[%s41 + $0x14] sm:$0xf]
        %v2311 = vld [vmem:[%s41 + $0x18] sm:$0xf]
        %v2312 = vld [vmem:[%s41 + $0x1c] sm:$0xf]
        %v2313 = vld [vmem:[%s43] sm:$0x1]
        %v2315 = vlaneseq
        %v2316 = vshrl.u32 %v2315, 7
        %v2317 = vsub.s32 0, %v2316
        %v2318 = vrot.slane %v2313, %v2317
        %v2328 = vunpack.c.l.b16 %v2305
        %v2329 = vunpack.c.l.b16 %v2306
        %v2330 = vunpack.c.l.b16 %v2307
        %v2331 = vunpack.c.l.b16 %v2308
        %v2332 = vunpack.c.l.b16 %v2309
        %v2333 = vunpack.c.l.b16 %v2310
        %v2334 = vunpack.c.l.b16 %v2311
        %v2335 = vunpack.c.l.b16 %v2312
        %v2336 = vpack.c.b16 %v2329, %v2328
        %v2337 = vpack.c.b16 %v2331, %v2330
        %v2338 = vpack.c.b16 %v2333, %v2332
        %v2339 = vpack.c.b16 %v2335, %v2334
        %v2341 = vsel %vm1032, %v1023, 0
        %v2344 = vsel %vm1032, %v2336, 0
        %v2347 = vsel %vm1032, %v2337, 0
        %v2350 = vsel %vm1032, %v2338, 0
        %v2353 = vsel %vm1032, %v2339, 0
        %2355 = vmatprep.subr.bf16.mxu0 0
        %2356 = vmatpush1.bf16.xpose.msra.mxu0 %v2344
        %2357 = vmatprep.subr.bf16.mxu0 0
        %2358 = vmatpush1.bf16.xpose.msra.mxu0 %v2347
        %2359 = vmatprep.subr.bf16.mxu0 0
        %2360 = vmatpush1.bf16.xpose.msra.mxu0 %v2350
        %2361 = vmatprep.subr.bf16.mxu0 0
        %2362 = vmatpush1.bf16.xpose.msra.mxu0 %v2353
        %2363 = vmatprep.subr.bf16.mxu0 0
        %2364 = vmatpush1.bf16.xpose.msra.mxu0 0
        %2365 = vmatprep.subr.bf16.mxu0 0
        %2366 = vmatpush1.bf16.xpose.msra.mxu0 0
        %2367 = vmatprep.subr.bf16.mxu0 0
        %2368 = vmatpush1.bf16.xpose.msra.mxu0 0
        %2369 = vmatprep.subr.bf16.mxu0 0
        %2370 = vmatpush1.bf16.xpose.msra.mxu0 0
        %2371 = vmatprep.subr.bf16.mxu0 0
        %2372 = vmatpush1.bf16.xpose.msra.mxu0 0
        %2373 = vmatprep.subr.bf16.mxu0 0
        %2374 = vmatpush1.bf16.xpose.msra.mxu0 0
        %2375 = vmatprep.subr.bf16.mxu0 0
        %2376 = vmatpush1.bf16.xpose.msra.mxu0 0
        %2377 = vmatprep.subr.bf16.mxu0 0
        %2378 = vmatpush1.bf16.xpose.msra.mxu0 0
        %2379 = vmatprep.subr.bf16.mxu0 0
        %2380 = vmatpush1.bf16.xpose.msra.mxu0 0
        %2381 = vmatprep.subr.bf16.mxu0 0
        %2382 = vmatpush1.bf16.xpose.msra.mxu0 0
        %2383 = vmatprep.subr.bf16.mxu0 0
        %2384 = vmatpush1.bf16.xpose.msra.mxu0 0
        %2385 = vmatprep.subr.bf16.mxu0 0
        %2386 = vmatpush1.bf16.xpose.msra.mxu0 0
        %2387 = vmatprep.mubr.bf16.mxu0 0
        %2388 = vmatmul.mubr.bf16.gmra.mrb[0].mxu0 %v2341
        %v2389 = vpop.f32.mrb[0].mxu0
        %v2390 = vadd.f32 %v2318, %v2389
        %v2391 = vpop.f32.mrb[0].mxu0
        %v2392 = vpop.f32.mrb[0].mxu0
        %v2393 = vpop.f32.mrb[0].mxu0
        %2394 = vdwg.mxu0
        %2396 = vrot.lane.b32.xlu0 %v2300, 120
        %v2397 = vpop.permute.xlu0 %2396
        %2399 = vrot.lane.b32.xlu0 %v2300, 112
        %v2400 = vpop.permute.xlu0 %2399
        %2402 = vrot.lane.b32.xlu0 %v2300, 104
        %v2403 = vpop.permute.xlu0 %2402
        %v2405 = vpack.c.bf16 %v2300, %v2300
        %v2406 = vpack.c.bf16 %v2397, %v2397
        %v2407 = vpack.c.bf16 %v2400, %v2400
        %v2408 = vpack.c.bf16 %v2403, %v2403
        %2410 = vrot.lane.b32.xlu0 %v2390, 120
        %v2411 = vpop.permute.xlu0 %2410
        %2413 = vrot.lane.b32.xlu0 %v2390, 112
        %v2414 = vpop.permute.xlu0 %2413
        %2416 = vrot.lane.b32.xlu0 %v2390, 104
        %v2417 = vpop.permute.xlu0 %2416
        %v2419 = vpack.c.bf16 %v2390, %v2390
        %v2420 = vpack.c.bf16 %v2411, %v2411
        %v2421 = vpack.c.bf16 %v2414, %v2414
        %v2422 = vpack.c.bf16 %v2417, %v2417
        %v2424 = vsel %vm1344, %v2405, 0
        %v2427 = vsel %vm1344, %v2419, 0
        %2429 = vmatprep.subr.bf16.mxu0 0
        %2430 = vmatpush1.bf16.xpose.msra.mxu0 %v2427
        %2431 = vmatprep.subr.bf16.mxu0 0
        %2432 = vmatpush1.bf16.xpose.msra.mxu0 0
        %2433 = vmatprep.subr.bf16.mxu0 0
        %2434 = vmatpush1.bf16.xpose.msra.mxu0 0
        %2435 = vmatprep.subr.bf16.mxu0 0
        %2436 = vmatpush1.bf16.xpose.msra.mxu0 0
        %2437 = vmatprep.subr.bf16.mxu0 0
        %2438 = vmatpush1.bf16.xpose.msra.mxu0 0
        %2439 = vmatprep.subr.bf16.mxu0 0
        %2440 = vmatpush1.bf16.xpose.msra.mxu0 0
        %2441 = vmatprep.subr.bf16.mxu0 0
        %2442 = vmatpush1.bf16.xpose.msra.mxu0 0
        %2443 = vmatprep.subr.bf16.mxu0 0
        %2444 = vmatpush1.bf16.xpose.msra.mxu0 0
        %2445 = vmatprep.subr.bf16.mxu0 0
        %2446 = vmatpush1.bf16.xpose.msra.mxu0 0
        %2447 = vmatprep.subr.bf16.mxu0 0
        %2448 = vmatpush1.bf16.xpose.msra.mxu0 0
        %2449 = vmatprep.subr.bf16.mxu0 0
        %2450 = vmatpush1.bf16.xpose.msra.mxu0 0
        %2451 = vmatprep.subr.bf16.mxu0 0
        %2452 = vmatpush1.bf16.xpose.msra.mxu0 0
        %2453 = vmatprep.subr.bf16.mxu0 0
        %2454 = vmatpush1.bf16.xpose.msra.mxu0 0
        %2455 = vmatprep.subr.bf16.mxu0 0
        %2456 = vmatpush1.bf16.xpose.msra.mxu0 0
        %2457 = vmatprep.subr.bf16.mxu0 0
        %2458 = vmatpush1.bf16.xpose.msra.mxu0 0
        %2459 = vmatprep.subr.bf16.mxu0 0
        %2460 = vmatpush1.bf16.xpose.msra.mxu0 0
        %2461 = vmatprep.mubr.bf16.mxu0 0
        %2462 = vmatmul.mubr.bf16.gmra.mrb[0].mxu0 %v2424
        %v2463 = vpop.f32.mrb[0].mxu0
        %v2464 = vadd.f32 0.0, %v2463
        %v2465 = vpop.f32.mrb[0].mxu0
        %v2466 = vpop.f32.mrb[0].mxu0
        %v2467 = vpop.f32.mrb[0].mxu0
        %2468 = vdwg.mxu0
        %v2470 = vsel %vm1344, %v2406, 0
        %v2473 = vsel %vm1344, %v2420, 0
        %2475 = vmatprep.subr.bf16.mxu0 0
        %2476 = vmatpush1.bf16.xpose.msra.mxu0 %v2473
        %2477 = vmatprep.subr.bf16.mxu0 0
        %2478 = vmatpush1.bf16.xpose.msra.mxu0 0
        %2479 = vmatprep.subr.bf16.mxu0 0
        %2480 = vmatpush1.bf16.xpose.msra.mxu0 0
        %2481 = vmatprep.subr.bf16.mxu0 0
        %2482 = vmatpush1.bf16.xpose.msra.mxu0 0
        %2483 = vmatprep.subr.bf16.mxu0 0
        %2484 = vmatpush1.bf16.xpose.msra.mxu0 0
        %2485 = vmatprep.subr.bf16.mxu0 0
        %2486 = vmatpush1.bf16.xpose.msra.mxu0 0
        %2487 = vmatprep.subr.bf16.mxu0 0
        %2488 = vmatpush1.bf16.xpose.msra.mxu0 0
        %2489 = vmatprep.subr.bf16.mxu0 0
        %2490 = vmatpush1.bf16.xpose.msra.mxu0 0
        %2491 = vmatprep.subr.bf16.mxu0 0
        %2492 = vmatpush1.bf16.xpose.msra.mxu0 0
        %2493 = vmatprep.subr.bf16.mxu0 0
        %2494 = vmatpush1.bf16.xpose.msra.mxu0 0
        %2495 = vmatprep.subr.bf16.mxu0 0
        %2496 = vmatpush1.bf16.xpose.msra.mxu0 0
        %2497 = vmatprep.subr.bf16.mxu0 0
        %2498 = vmatpush1.bf16.xpose.msra.mxu0 0
        %2499 = vmatprep.subr.bf16.mxu0 0
        %2500 = vmatpush1.bf16.xpose.msra.mxu0 0
        %2501 = vmatprep.subr.bf16.mxu0 0
        %2502 = vmatpush1.bf16.xpose.msra.mxu0 0
        %2503 = vmatprep.subr.bf16.mxu0 0
        %2504 = vmatpush1.bf16.xpose.msra.mxu0 0
        %2505 = vmatprep.subr.bf16.mxu0 0
        %2506 = vmatpush1.bf16.xpose.msra.mxu0 0
        %2507 = vmatprep.mubr.bf16.mxu0 0
        %2508 = vmatmul.mubr.bf16.gmra.mrb[0].mxu0 %v2470
        %v2509 = vpop.f32.mrb[0].mxu0
        %v2510 = vadd.f32 0.0, %v2509
        %v2511 = vpop.f32.mrb[0].mxu0
        %v2512 = vpop.f32.mrb[0].mxu0
        %v2513 = vpop.f32.mrb[0].mxu0
        %2514 = vdwg.mxu0
        %v2516 = vsel %vm1344, %v2407, 0
        %v2519 = vsel %vm1344, %v2421, 0
        %2521 = vmatprep.subr.bf16.mxu0 0
        %2522 = vmatpush1.bf16.xpose.msra.mxu0 %v2519
        %2523 = vmatprep.subr.bf16.mxu0 0
        %2524 = vmatpush1.bf16.xpose.msra.mxu0 0
        %2525 = vmatprep.subr.bf16.mxu0 0
        %2526 = vmatpush1.bf16.xpose.msra.mxu0 0
        %2527 = vmatprep.subr.bf16.mxu0 0
        %2528 = vmatpush1.bf16.xpose.msra.mxu0 0
        %2529 = vmatprep.subr.bf16.mxu0 0
        %2530 = vmatpush1.bf16.xpose.msra.mxu0 0
        %2531 = vmatprep.subr.bf16.mxu0 0
        %2532 = vmatpush1.bf16.xpose.msra.mxu0 0
        %2533 = vmatprep.subr.bf16.mxu0 0
        %2534 = vmatpush1.bf16.xpose.msra.mxu0 0
        %2535 = vmatprep.subr.bf16.mxu0 0
        %2536 = vmatpush1.bf16.xpose.msra.mxu0 0
        %2537 = vmatprep.subr.bf16.mxu0 0
        %2538 = vmatpush1.bf16.xpose.msra.mxu0 0
        %2539 = vmatprep.subr.bf16.mxu0 0
        %2540 = vmatpush1.bf16.xpose.msra.mxu0 0
        %2541 = vmatprep.subr.bf16.mxu0 0
        %2542 = vmatpush1.bf16.xpose.msra.mxu0 0
        %2543 = vmatprep.subr.bf16.mxu0 0
        %2544 = vmatpush1.bf16.xpose.msra.mxu0 0
        %2545 = vmatprep.subr.bf16.mxu0 0
        %2546 = vmatpush1.bf16.xpose.msra.mxu0 0
        %2547 = vmatprep.subr.bf16.mxu0 0
        %2548 = vmatpush1.bf16.xpose.msra.mxu0 0
        %2549 = vmatprep.subr.bf16.mxu0 0
        %2550 = vmatpush1.bf16.xpose.msra.mxu0 0
        %2551 = vmatprep.subr.bf16.mxu0 0
        %2552 = vmatpush1.bf16.xpose.msra.mxu0 0
        %2553 = vmatprep.mubr.bf16.mxu0 0
        %2554 = vmatmul.mubr.bf16.gmra.mrb[0].mxu0 %v2516
        %v2555 = vpop.f32.mrb[0].mxu0
        %v2556 = vadd.f32 0.0, %v2555
        %v2557 = vpop.f32.mrb[0].mxu0
        %v2558 = vpop.f32.mrb[0].mxu0
        %v2559 = vpop.f32.mrb[0].mxu0
        %2560 = vdwg.mxu0
        %v2562 = vsel %vm1344, %v2408, 0
        %v2565 = vsel %vm1344, %v2422, 0
        %2567 = vmatprep.subr.bf16.mxu0 0
        %2568 = vmatpush1.bf16.xpose.msra.mxu0 %v2565
        %2569 = vmatprep.subr.bf16.mxu0 0
        %2570 = vmatpush1.bf16.xpose.msra.mxu0 0
        %2571 = vmatprep.subr.bf16.mxu0 0
        %2572 = vmatpush1.bf16.xpose.msra.mxu0 0
        %2573 = vmatprep.subr.bf16.mxu0 0
        %2574 = vmatpush1.bf16.xpose.msra.mxu0 0
        %2575 = vmatprep.subr.bf16.mxu0 0
        %2576 = vmatpush1.bf16.xpose.msra.mxu0 0
        %2577 = vmatprep.subr.bf16.mxu0 0
        %2578 = vmatpush1.bf16.xpose.msra.mxu0 0
        %2579 = vmatprep.subr.bf16.mxu0 0
        %2580 = vmatpush1.bf16.xpose.msra.mxu0 0
        %2581 = vmatprep.subr.bf16.mxu0 0
        %2582 = vmatpush1.bf16.xpose.msra.mxu0 0
        %2583 = vmatprep.subr.bf16.mxu0 0
        %2584 = vmatpush1.bf16.xpose.msra.mxu0 0
        %2585 = vmatprep.subr.bf16.mxu0 0
        %2586 = vmatpush1.bf16.xpose.msra.mxu0 0
        %2587 = vmatprep.subr.bf16.mxu0 0
        %2588 = vmatpush1.bf16.xpose.msra.mxu0 0
        %2589 = vmatprep.subr.bf16.mxu0 0
        %2590 = vmatpush1.bf16.xpose.msra.mxu0 0
        %2591 = vmatprep.subr.bf16.mxu0 0
        %2592 = vmatpush1.bf16.xpose.msra.mxu0 0
        %2593 = vmatprep.subr.bf16.mxu0 0
        %2594 = vmatpush1.bf16.xpose.msra.mxu0 0
        %2595 = vmatprep.subr.bf16.mxu0 0
        %2596 = vmatpush1.bf16.xpose.msra.mxu0 0
        %2597 = vmatprep.subr.bf16.mxu0 0
        %2598 = vmatpush1.bf16.xpose.msra.mxu0 0
        %2599 = vmatprep.mubr.bf16.mxu0 0
        %2600 = vmatmul.mubr.bf16.gmra.mrb[0].mxu0 %v2562
        %v2601 = vpop.f32.mrb[0].mxu0
        %v2602 = vadd.f32 0.0, %v2601
        %v2603 = vpop.f32.mrb[0].mxu0
        %v2604 = vpop.f32.mrb[0].mxu0
        %v2605 = vpop.f32.mrb[0].mxu0
        %2606 = vdwg.mxu0
        %v2607 = vmul.f32 %v2464, 0.35355338
        %v2608 = vmul.f32 %v2510, 0.35355338
        %v2609 = vmul.f32 %v2556, 0.35355338
        %v2610 = vmul.f32 %v2602, 0.35355338
        %v2612 = vlaneseq
        %v2613 = vshrl.u32 %v2612, 7
        %v2614 = vsub.s32 0, %v2613
        %v2615 = vrot.slane %v1029, %v2614
        %v2617 = vadd.f32 %v2607, %v2615
        %v2618 = vadd.f32 %v2608, %v2615
        %v2619 = vadd.f32 %v2609, %v2615
        %v2620 = vadd.f32 %v2610, %v2615
        %v2621 = vsel %vm1344, %v2617, -inf
        %2622 = vmax.xlane.f32.xlu0 %v2621
        %v2623 = vpop.xlane.xlu0 %2622
        %v2624 = vsel %vm1344, %v2618, -inf
        %2625 = vmax.xlane.f32.xlu0 %v2624
        %v2626 = vpop.xlane.xlu0 %2625
        %v2627 = vsel %vm1344, %v2619, -inf
        %2628 = vmax.xlane.f32.xlu0 %v2627
        %v2629 = vpop.xlane.xlu0 %2628
        %v2630 = vsel %vm1344, %v2620, -inf
        %2631 = vmax.xlane.f32.xlu0 %v2630
        %v2632 = vpop.xlane.xlu0 %2631
        %v2633 = vsub.f32 %v2617, %v2623
        %v2634 = vsub.f32 %v2618, %v2626
        %v2635 = vsub.f32 %v2619, %v2629
        %v2636 = vsub.f32 %v2620, %v2632
        %v2637 = vmul.f32 %v2633, 1.442695
        %v2638 = vpow.pop %v2637
        %v2639 = vmul.f32 %v2634, 1.442695
        %v2640 = vpow.pop %v2639
        %v2641 = vmul.f32 %v2635, 1.442695
        %v2642 = vpow.pop %v2641
        %v2643 = vmul.f32 %v2636, 1.442695
        %v2644 = vpow.pop %v2643
        %v2645 = vsel %vm1344, %v2638, 0.0
        %2646 = vadd.xlane.f32.xlu0 %v2645
        %v2647 = vpop.xlane.xlu0 %2646
        %v2648 = vsel %vm1344, %v2640, 0.0
        %2649 = vadd.xlane.f32.xlu0 %v2648
        %v2650 = vpop.xlane.xlu0 %2649
        %v2651 = vsel %vm1344, %v2642, 0.0
        %2652 = vadd.xlane.f32.xlu0 %v2651
        %v2653 = vpop.xlane.xlu0 %2652
        %v2654 = vsel %vm1344, %v2644, 0.0
        %2655 = vadd.xlane.f32.xlu0 %v2654
        %v2656 = vpop.xlane.xlu0 %2655
        %v2657 = vrcp.pop %v2647
        %v2658 = vrcp.pop %v2650
        %v2659 = vrcp.pop %v2653
        %v2660 = vrcp.pop %v2656
        %v2661 = vmul.f32 %v2638, %v2657
        %v2662 = vmul.f32 %v2640, %v2658
        %v2663 = vmul.f32 %v2642, %v2659
        %v2664 = vmul.f32 %v2644, %v2660
        %2665 = vst.msk [vmem:[%s997] sm:$0xff] %vm1344, %v2661
        %2666 = vst.msk [vmem:[%s997 + $0x8] sm:$0xff] %vm1344, %v2662
        %2667 = vst.msk [vmem:[%s997 + $0x10] sm:$0xff] %vm1344, %v2663
        %2668 = vst.msk [vmem:[%s997 + $0x18] sm:$0xff] %vm1344, %v2664
        %v2669 = vpack.c.bf16 %v2661, %v2661
        %v2670 = vpack.c.bf16 %v2662, %v2662
        %v2671 = vpack.c.bf16 %v2663, %v2663
        %v2672 = vpack.c.bf16 %v2664, %v2664
        %2674 = vrot.lane.b32.xlu0 %v2419, 96
        %v2675 = vpop.permute.xlu0 %2674
        %v2677 = vsel %vm1344, %v2669, 0
        %v2680 = vsel %vm1636, %v2675, 0
        %2682 = vmatprep.subr.bf16.mxu0 0
        %2683 = vmatpush1.bf16.msra.mxu0 %v2680
        %2684 = vmatprep.subr.bf16.mxu0 0
        %2685 = vmatpush1.bf16.msra.mxu0 0
        %2686 = vmatprep.subr.bf16.mxu0 0
        %2687 = vmatpush1.bf16.msra.mxu0 0
        %2688 = vmatprep.subr.bf16.mxu0 0
        %2689 = vmatpush1.bf16.msra.mxu0 0
        %2690 = vmatprep.subr.bf16.mxu0 0
        %2691 = vmatpush1.bf16.msra.mxu0 0
        %2692 = vmatprep.subr.bf16.mxu0 0
        %2693 = vmatpush1.bf16.msra.mxu0 0
        %2694 = vmatprep.subr.bf16.mxu0 0
        %2695 = vmatpush1.bf16.msra.mxu0 0
        %2696 = vmatprep.subr.bf16.mxu0 0
        %2697 = vmatpush1.bf16.msra.mxu0 0
        %2698 = vmatprep.subr.bf16.mxu0 0
        %2699 = vmatpush1.bf16.msra.mxu0 0
        %2700 = vmatprep.subr.bf16.mxu0 0
        %2701 = vmatpush1.bf16.msra.mxu0 0
        %2702 = vmatprep.subr.bf16.mxu0 0
        %2703 = vmatpush1.bf16.msra.mxu0 0
        %2704 = vmatprep.subr.bf16.mxu0 0
        %2705 = vmatpush1.bf16.msra.mxu0 0
        %2706 = vmatprep.subr.bf16.mxu0 0
        %2707 = vmatpush1.bf16.msra.mxu0 0
        %2708 = vmatprep.subr.bf16.mxu0 0
        %2709 = vmatpush1.bf16.msra.mxu0 0
        %2710 = vmatprep.subr.bf16.mxu0 0
        %2711 = vmatpush1.bf16.msra.mxu0 0
        %2712 = vmatprep.subr.bf16.mxu0 0
        %2713 = vmatpush1.bf16.msra.mxu0 0
        %2714 = vmatprep.mubr.bf16.mxu0 0
        %2715 = vmatmul.mubr.bf16.gmra.mrb[0].mxu0 %v2677
        %v2716 = vpop.f32.mrb[0].mxu0
        %v2717 = vadd.f32 0.0, %v2716
        %v2718 = vpop.f32.mrb[0].mxu0
        %v2719 = vpop.f32.mrb[0].mxu0
        %v2720 = vpop.f32.mrb[0].mxu0
        %2721 = vdwg.mxu0
        %2723 = vrot.lane.b32.xlu0 %v2420, 96
        %v2724 = vpop.permute.xlu0 %2723
        %v2726 = vsel %vm1344, %v2670, 0
        %v2729 = vsel %vm1636, %v2724, 0
        %2731 = vmatprep.subr.bf16.mxu0 0
        %2732 = vmatpush1.bf16.msra.mxu0 %v2729
        %2733 = vmatprep.subr.bf16.mxu0 0
        %2734 = vmatpush1.bf16.msra.mxu0 0
        %2735 = vmatprep.subr.bf16.mxu0 0
        %2736 = vmatpush1.bf16.msra.mxu0 0
        %2737 = vmatprep.subr.bf16.mxu0 0
        %2738 = vmatpush1.bf16.msra.mxu0 0
        %2739 = vmatprep.subr.bf16.mxu0 0
        %2740 = vmatpush1.bf16.msra.mxu0 0
        %2741 = vmatprep.subr.bf16.mxu0 0
        %2742 = vmatpush1.bf16.msra.mxu0 0
        %2743 = vmatprep.subr.bf16.mxu0 0
        %2744 = vmatpush1.bf16.msra.mxu0 0
        %2745 = vmatprep.subr.bf16.mxu0 0
        %2746 = vmatpush1.bf16.msra.mxu0 0
        %2747 = vmatprep.subr.bf16.mxu0 0
        %2748 = vmatpush1.bf16.msra.mxu0 0
        %2749 = vmatprep.subr.bf16.mxu0 0
        %2750 = vmatpush1.bf16.msra.mxu0 0
        %2751 = vmatprep.subr.bf16.mxu0 0
        %2752 = vmatpush1.bf16.msra.mxu0 0
        %2753 = vmatprep.subr.bf16.mxu0 0
        %2754 = vmatpush1.bf16.msra.mxu0 0
        %2755 = vmatprep.subr.bf16.mxu0 0
        %2756 = vmatpush1.bf16.msra.mxu0 0
        %2757 = vmatprep.subr.bf16.mxu0 0
        %2758 = vmatpush1.bf16.msra.mxu0 0
        %2759 = vmatprep.subr.bf16.mxu0 0
        %2760 = vmatpush1.bf16.msra.mxu0 0
        %2761 = vmatprep.subr.bf16.mxu0 0
        %2762 = vmatpush1.bf16.msra.mxu0 0
        %2763 = vmatprep.mubr.bf16.mxu0 0
        %2764 = vmatmul.mubr.bf16.gmra.mrb[0].mxu0 %v2726
        %v2765 = vpop.f32.mrb[0].mxu0
        %v2766 = vadd.f32 0.0, %v2765
        %v2767 = vpop.f32.mrb[0].mxu0
        %v2768 = vpop.f32.mrb[0].mxu0
        %v2769 = vpop.f32.mrb[0].mxu0
        %2770 = vdwg.mxu0
        %2772 = vrot.lane.b32.xlu0 %v2421, 96
        %v2773 = vpop.permute.xlu0 %2772
        %v2775 = vsel %vm1344, %v2671, 0
        %v2778 = vsel %vm1636, %v2773, 0
        %2780 = vmatprep.subr.bf16.mxu0 0
        %2781 = vmatpush1.bf16.msra.mxu0 %v2778
        %2782 = vmatprep.subr.bf16.mxu0 0
        %2783 = vmatpush1.bf16.msra.mxu0 0
        %2784 = vmatprep.subr.bf16.mxu0 0
        %2785 = vmatpush1.bf16.msra.mxu0 0
        %2786 = vmatprep.subr.bf16.mxu0 0
        %2787 = vmatpush1.bf16.msra.mxu0 0
        %2788 = vmatprep.subr.bf16.mxu0 0
        %2789 = vmatpush1.bf16.msra.mxu0 0
        %2790 = vmatprep.subr.bf16.mxu0 0
        %2791 = vmatpush1.bf16.msra.mxu0 0
        %2792 = vmatprep.subr.bf16.mxu0 0
        %2793 = vmatpush1.bf16.msra.mxu0 0
        %2794 = vmatprep.subr.bf16.mxu0 0
        %2795 = vmatpush1.bf16.msra.mxu0 0
        %2796 = vmatprep.subr.bf16.mxu0 0
        %2797 = vmatpush1.bf16.msra.mxu0 0
        %2798 = vmatprep.subr.bf16.mxu0 0
        %2799 = vmatpush1.bf16.msra.mxu0 0
        %2800 = vmatprep.subr.bf16.mxu0 0
        %2801 = vmatpush1.bf16.msra.mxu0 0
        %2802 = vmatprep.subr.bf16.mxu0 0
        %2803 = vmatpush1.bf16.msra.mxu0 0
        %2804 = vmatprep.subr.bf16.mxu0 0
        %2805 = vmatpush1.bf16.msra.mxu0 0
        %2806 = vmatprep.subr.bf16.mxu0 0
        %2807 = vmatpush1.bf16.msra.mxu0 0
        %2808 = vmatprep.subr.bf16.mxu0 0
        %2809 = vmatpush1.bf16.msra.mxu0 0
        %2810 = vmatprep.subr.bf16.mxu0 0
        %2811 = vmatpush1.bf16.msra.mxu0 0
        %2812 = vmatprep.mubr.bf16.mxu0 0
        %2813 = vmatmul.mubr.bf16.gmra.mrb[0].mxu0 %v2775
        %v2814 = vpop.f32.mrb[0].mxu0
        %v2815 = vadd.f32 0.0, %v2814
        %v2816 = vpop.f32.mrb[0].mxu0
        %v2817 = vpop.f32.mrb[0].mxu0
        %v2818 = vpop.f32.mrb[0].mxu0
        %2819 = vdwg.mxu0
        %2821 = vrot.lane.b32.xlu0 %v2422, 96
        %v2822 = vpop.permute.xlu0 %2821
        %v2824 = vsel %vm1344, %v2672, 0
        %v2827 = vsel %vm1636, %v2822, 0
        %2829 = vmatprep.subr.bf16.mxu0 0
        %2830 = vmatpush1.bf16.msra.mxu0 %v2827
        %2831 = vmatprep.subr.bf16.mxu0 0
        %2832 = vmatpush1.bf16.msra.mxu0 0
        %2833 = vmatprep.subr.bf16.mxu0 0
        %2834 = vmatpush1.bf16.msra.mxu0 0
        %2835 = vmatprep.subr.bf16.mxu0 0
        %2836 = vmatpush1.bf16.msra.mxu0 0
        %2837 = vmatprep.subr.bf16.mxu0 0
        %2838 = vmatpush1.bf16.msra.mxu0 0
        %2839 = vmatprep.subr.bf16.mxu0 0
        %2840 = vmatpush1.bf16.msra.mxu0 0
        %2841 = vmatprep.subr.bf16.mxu0 0
        %2842 = vmatpush1.bf16.msra.mxu0 0
        %2843 = vmatprep.subr.bf16.mxu0 0
        %2844 = vmatpush1.bf16.msra.mxu0 0
        %2845 = vmatprep.subr.bf16.mxu0 0
        %2846 = vmatpush1.bf16.msra.mxu0 0
        %2847 = vmatprep.subr.bf16.mxu0 0
        %2848 = vmatpush1.bf16.msra.mxu0 0
        %2849 = vmatprep.subr.bf16.mxu0 0
        %2850 = vmatpush1.bf16.msra.mxu0 0
        %2851 = vmatprep.subr.bf16.mxu0 0
        %2852 = vmatpush1.bf16.msra.mxu0 0
        %2853 = vmatprep.subr.bf16.mxu0 0
        %2854 = vmatpush1.bf16.msra.mxu0 0
        %2855 = vmatprep.subr.bf16.mxu0 0
        %2856 = vmatpush1.bf16.msra.mxu0 0
        %2857 = vmatprep.subr.bf16.mxu0 0
        %2858 = vmatpush1.bf16.msra.mxu0 0
        %2859 = vmatprep.subr.bf16.mxu0 0
        %2860 = vmatpush1.bf16.msra.mxu0 0
        %2861 = vmatprep.mubr.bf16.mxu0 0
        %2862 = vmatmul.mubr.bf16.gmra.mrb[0].mxu0 %v2824
        %v2863 = vpop.f32.mrb[0].mxu0
        %v2864 = vadd.f32 0.0, %v2863
        %v2865 = vpop.f32.mrb[0].mxu0
        %v2866 = vpop.f32.mrb[0].mxu0
        %v2867 = vpop.f32.mrb[0].mxu0
        %2868 = vdwg.mxu0
        %2870 = vrot.lane.b32.xlu0 %v2766, 8
        %v2871 = vpop.permute.xlu0 %2870
        %2874 = vrot.lane.b32.xlu0 %v2815, 16
        %v2875 = vpop.permute.xlu0 %2874
        %2878 = vrot.lane.b32.xlu0 %v2864, 24
        %v2879 = vpop.permute.xlu0 %2878
        %v2881 = vsel %vm1344, %v2717, %v2871
        %v2882 = vsel %vm2129, %v2881, %v2875
        %v2883 = vsel %vm2131, %v2882, %v2879
        %v2884 = vld [vmem:[%s45] sm:$0xf]
        %v2885 = vld [vmem:[%s45 + $0x4] sm:$0xf]
        %v2886 = vld [vmem:[%s45 + $0x8] sm:$0xf]
        %v2887 = vld [vmem:[%s45 + $0xc] sm:$0xf]
        %v2888 = vld [vmem:[%s47] sm:$0x1]
        %v2889 = vpack.c.bf16 %v2883, %v2883
        %v2891 = vlaneseq
        %v2892 = vshrl.u32 %v2891, 7
        %v2893 = vsub.s32 0, %v2892
        %v2894 = vrot.slane %v2888, %v2893
        %v2900 = vunpack.c.l.b16 %v2884
        %v2901 = vunpack.c.l.b16 %v2885
        %v2902 = vunpack.c.l.b16 %v2886
        %v2903 = vunpack.c.l.b16 %v2887
        %v2904 = vpack.c.b16 %v2901, %v2900
        %v2905 = vpack.c.b16 %v2903, %v2902
        %v2907 = vsel %vm1032, %v2889, 0
        %v2910 = vsel %vm1032, %v2904, 0
        %v2913 = vsel %vm1032, %v2905, 0
        %2915 = vmatprep.subr.bf16.mxu0 0
        %2916 = vmatpush1.bf16.xpose.msra.mxu0 %v2910
        %2917 = vmatprep.subr.bf16.mxu0 0
        %2918 = vmatpush1.bf16.xpose.msra.mxu0 %v2913
        %2919 = vmatprep.subr.bf16.mxu0 0
        %2920 = vmatpush1.bf16.xpose.msra.mxu0 0
        %2921 = vmatprep.subr.bf16.mxu0 0
        %2922 = vmatpush1.bf16.xpose.msra.mxu0 0
        %2923 = vmatprep.subr.bf16.mxu0 0
        %2924 = vmatpush1.bf16.xpose.msra.mxu0 0
        %2925 = vmatprep.subr.bf16.mxu0 0
        %2926 = vmatpush1.bf16.xpose.msra.mxu0 0
        %2927 = vmatprep.subr.bf16.mxu0 0
        %2928 = vmatpush1.bf16.xpose.msra.mxu0 0
        %2929 = vmatprep.subr.bf16.mxu0 0
        %2930 = vmatpush1.bf16.xpose.msra.mxu0 0
        %2931 = vmatprep.subr.bf16.mxu0 0
        %2932 = vmatpush1.bf16.xpose.msra.mxu0 0
        %2933 = vmatprep.subr.bf16.mxu0 0
        %2934 = vmatpush1.bf16.xpose.msra.mxu0 0
        %2935 = vmatprep.subr.bf16.mxu0 0
        %2936 = vmatpush1.bf16.xpose.msra.mxu0 0
        %2937 = vmatprep.subr.bf16.mxu0 0
        %2938 = vmatpush1.bf16.xpose.msra.mxu0 0
        %2939 = vmatprep.subr.bf16.mxu0 0
        %2940 = vmatpush1.bf16.xpose.msra.mxu0 0
        %2941 = vmatprep.subr.bf16.mxu0 0
        %2942 = vmatpush1.bf16.xpose.msra.mxu0 0
        %2943 = vmatprep.subr.bf16.mxu0 0
        %2944 = vmatpush1.bf16.xpose.msra.mxu0 0
        %2945 = vmatprep.subr.bf16.mxu0 0
        %2946 = vmatpush1.bf16.xpose.msra.mxu0 0
        %2947 = vmatprep.mubr.bf16.mxu0 0
        %2948 = vmatmul.mubr.bf16.gmra.mrb[0].mxu0 %v2907
        %v2949 = vpop.f32.mrb[0].mxu0
        %v2950 = vadd.f32 %v2894, %v2949
        %v2951 = vpop.f32.mrb[0].mxu0
        %v2952 = vpop.f32.mrb[0].mxu0
        %v2953 = vpop.f32.mrb[0].mxu0
        %2954 = vdwg.mxu0
        %v2955 = vadd.f32 %v2204, %v2950
        %v2956 = vld [vmem:[%s49] sm:$0x1]
        %v2957 = vld [vmem:[%s51] sm:$0x1]
        %v2958 = vsel %vm1032, %v2955, 0.0
        %2959 = vadd.xlane.f32.xlu0 %v2958
        %v2960 = vpop.xlane.xlu0 %2959
        %v2961 = vmul.f32 %v2960, %v1036
        %v2962 = vsub.f32 %v2955, %v2961
        %v2963 = vmul.f32 %v2962, %v2962
        %v2964 = vsel %vm1032, %v2963, 0.0
        %2965 = vadd.xlane.f32.xlu0 %v2964
        %v2966 = vpop.xlane.xlu0 %2965
        %v2967 = vmul.f32 %v2966, %v1036
        %v2968 = vadd.f32 %v2967, 1e-05
        %v2969 = vrsqrt.pop %v2968
        %v2970 = vmul.f32 %v2962, %v2969
        %v2972 = vlaneseq
        %v2973 = vshrl.u32 %v2972, 7
        %v2974 = vsub.s32 0, %v2973
        %v2975 = vrot.slane %v2956, %v2974
        %v2977 = vmul.f32 %v2970, %v2975
        %v2979 = vlaneseq
        %v2980 = vshrl.u32 %v2979, 7
        %v2981 = vsub.s32 0, %v2980
        %v2982 = vrot.slane %v2957, %v2981
        %v2984 = vadd.f32 %v2977, %v2982
        %v2985 = vld [vmem:[%s53] sm:$0xf]
        %v2986 = vld [vmem:[%s53 + $0x4] sm:$0xf]
        %v2987 = vld [vmem:[%s53 + $0x8] sm:$0xf]
        %v2988 = vld [vmem:[%s53 + $0xc] sm:$0xf]
        %v2989 = vld [vmem:[%s53 + $0x10] sm:$0xf]
        %v2990 = vld [vmem:[%s53 + $0x14] sm:$0xf]
        %v2991 = vld [vmem:[%s53 + $0x18] sm:$0xf]
        %v2992 = vld [vmem:[%s53 + $0x1c] sm:$0xf]
        %v2993 = vld [vmem:[%s55] sm:$0x1]
        %v2994 = vpack.c.bf16 %v2984, %v2984
        %v2996 = vlaneseq
        %v2997 = vshrl.u32 %v2996, 7
        %v2998 = vsub.s32 0, %v2997
        %v2999 = vrot.slane %v2993, %v2998
        %v3009 = vunpack.c.l.b16 %v2985
        %v3010 = vunpack.c.l.b16 %v2986
        %v3011 = vunpack.c.l.b16 %v2987
        %v3012 = vunpack.c.l.b16 %v2988
        %v3013 = vunpack.c.l.b16 %v2989
        %v3014 = vunpack.c.l.b16 %v2990
        %v3015 = vunpack.c.l.b16 %v2991
        %v3016 = vunpack.c.l.b16 %v2992
        %v3017 = vpack.c.b16 %v3010, %v3009
        %v3018 = vpack.c.b16 %v3012, %v3011
        %v3019 = vpack.c.b16 %v3014, %v3013
        %v3020 = vpack.c.b16 %v3016, %v3015
        %v3022 = vsel %vm1032, %v2994, 0
        %v3025 = vsel %vm1032, %v3017, 0
        %v3028 = vsel %vm1032, %v3018, 0
        %v3031 = vsel %vm1032, %v3019, 0
        %v3034 = vsel %vm1032, %v3020, 0
        %3036 = vmatprep.subr.bf16.mxu0 0
        %3037 = vmatpush1.bf16.xpose.msra.mxu0 %v3025
        %3038 = vmatprep.subr.bf16.mxu0 0
        %3039 = vmatpush1.bf16.xpose.msra.mxu0 %v3028
        %3040 = vmatprep.subr.bf16.mxu0 0
        %3041 = vmatpush1.bf16.xpose.msra.mxu0 %v3031
        %3042 = vmatprep.subr.bf16.mxu0 0
        %3043 = vmatpush1.bf16.xpose.msra.mxu0 %v3034
        %3044 = vmatprep.subr.bf16.mxu0 0
        %3045 = vmatpush1.bf16.xpose.msra.mxu0 0
        %3046 = vmatprep.subr.bf16.mxu0 0
        %3047 = vmatpush1.bf16.xpose.msra.mxu0 0
        %3048 = vmatprep.subr.bf16.mxu0 0
        %3049 = vmatpush1.bf16.xpose.msra.mxu0 0
        %3050 = vmatprep.subr.bf16.mxu0 0
        %3051 = vmatpush1.bf16.xpose.msra.mxu0 0
        %3052 = vmatprep.subr.bf16.mxu0 0
        %3053 = vmatpush1.bf16.xpose.msra.mxu0 0
        %3054 = vmatprep.subr.bf16.mxu0 0
        %3055 = vmatpush1.bf16.xpose.msra.mxu0 0
        %3056 = vmatprep.subr.bf16.mxu0 0
        %3057 = vmatpush1.bf16.xpose.msra.mxu0 0
        %3058 = vmatprep.subr.bf16.mxu0 0
        %3059 = vmatpush1.bf16.xpose.msra.mxu0 0
        %3060 = vmatprep.subr.bf16.mxu0 0
        %3061 = vmatpush1.bf16.xpose.msra.mxu0 0
        %3062 = vmatprep.subr.bf16.mxu0 0
        %3063 = vmatpush1.bf16.xpose.msra.mxu0 0
        %3064 = vmatprep.subr.bf16.mxu0 0
        %3065 = vmatpush1.bf16.xpose.msra.mxu0 0
        %3066 = vmatprep.subr.bf16.mxu0 0
        %3067 = vmatpush1.bf16.xpose.msra.mxu0 0
        %3068 = vmatprep.mubr.bf16.mxu0 0
        %3069 = vmatmul.mubr.bf16.gmra.mrb[0].mxu0 %v3022
        %v3070 = vpop.f32.mrb[0].mxu0
        %v3071 = vadd.f32 %v2999, %v3070
        %v3072 = vpop.f32.mrb[0].mxu0
        %v3073 = vpop.f32.mrb[0].mxu0
        %v3074 = vpop.f32.mrb[0].mxu0
        %3075 = vdwg.mxu0
        %v3076 = vmax.f32 %v3071, 0.0
        %v3077 = vld [vmem:[%s57] sm:$0xf]
        %v3078 = vld [vmem:[%s57 + $0x4] sm:$0xf]
        %v3079 = vld [vmem:[%s57 + $0x8] sm:$0xf]
        %v3080 = vld [vmem:[%s57 + $0xc] sm:$0xf]
        %v3081 = vld [vmem:[%s59] sm:$0x1]
        %v3082 = vpack.c.bf16 %v3076, %v3076
        %v3084 = vlaneseq
        %v3085 = vshrl.u32 %v3084, 7
        %v3086 = vsub.s32 0, %v3085
        %v3087 = vrot.slane %v3081, %v3086
        %v3093 = vunpack.c.l.b16 %v3077
        %v3094 = vunpack.c.l.b16 %v3078
        %v3095 = vunpack.c.l.b16 %v3079
        %v3096 = vunpack.c.l.b16 %v3080
        %v3097 = vpack.c.b16 %v3094, %v3093
        %v3098 = vpack.c.b16 %v3096, %v3095
        %vm3099 = vcmask 523264
        %v3101 = vsel %vm3099, %v3082, 0
        %v3104 = vsel %vm3099, %v3097, 0
        %v3107 = vsel %vm3099, %v3098, 0
        %3109 = vmatprep.subr.bf16.mxu0 0
        %3110 = vmatpush1.bf16.xpose.msra.mxu0 %v3104
        %3111 = vmatprep.subr.bf16.mxu0 0
        %3112 = vmatpush1.bf16.xpose.msra.mxu0 %v3107
        %3113 = vmatprep.subr.bf16.mxu0 0
        %3114 = vmatpush1.bf16.xpose.msra.mxu0 0
        %3115 = vmatprep.subr.bf16.mxu0 0
        %3116 = vmatpush1.bf16.xpose.msra.mxu0 0
        %3117 = vmatprep.subr.bf16.mxu0 0
        %3118 = vmatpush1.bf16.xpose.msra.mxu0 0
        %3119 = vmatprep.subr.bf16.mxu0 0
        %3120 = vmatpush1.bf16.xpose.msra.mxu0 0
        %3121 = vmatprep.subr.bf16.mxu0 0
        %3122 = vmatpush1.bf16.xpose.msra.mxu0 0
        %3123 = vmatprep.subr.bf16.mxu0 0
        %3124 = vmatpush1.bf16.xpose.msra.mxu0 0
        %3125 = vmatprep.subr.bf16.mxu0 0
        %3126 = vmatpush1.bf16.xpose.msra.mxu0 0
        %3127 = vmatprep.subr.bf16.mxu0 0
        %3128 = vmatpush1.bf16.xpose.msra.mxu0 0
        %3129 = vmatprep.subr.bf16.mxu0 0
        %3130 = vmatpush1.bf16.xpose.msra.mxu0 0
        %3131 = vmatprep.subr.bf16.mxu0 0
        %3132 = vmatpush1.bf16.xpose.msra.mxu0 0
        %3133 = vmatprep.subr.bf16.mxu0 0
        %3134 = vmatpush1.bf16.xpose.msra.mxu0 0
        %3135 = vmatprep.subr.bf16.mxu0 0
        %3136 = vmatpush1.bf16.xpose.msra.mxu0 0
        %3137 = vmatprep.subr.bf16.mxu0 0
        %3138 = vmatpush1.bf16.xpose.msra.mxu0 0
        %3139 = vmatprep.subr.bf16.mxu0 0
        %3140 = vmatpush1.bf16.xpose.msra.mxu0 0
        %3141 = vmatprep.mubr.bf16.mxu0 0
        %3142 = vmatmul.mubr.bf16.gmra.mrb[0].mxu0 %v3101
        %v3143 = vpop.f32.mrb[0].mxu0
        %v3144 = vadd.f32 %v3087, %v3143
        %v3145 = vpop.f32.mrb[0].mxu0
        %v3146 = vpop.f32.mrb[0].mxu0
        %v3147 = vpop.f32.mrb[0].mxu0
        %3148 = vdwg.mxu0
        %v3149 = vadd.f32 %v2955, %v3144
        %3150 = vst.msk [vmem:[%s990] sm:$0xff] %vm1032, %v3149
        %s3151 = sand.u32 %s739, 1
        %s3152 = scalar_lea.sflag [#allocation3], %s3151
        %s3153 = sand.u32 %s739, 1
        %s3154 = smul.addr %s3153, 8
        %s3155 = scalar_lea.vmem [#allocation2], %s3154
        %s3156 = sand.u32 %s765, 1
        %s3157 = scalar_lea.sflag [#allocation5], %s3156
        %s3158 = sand.u32 %s765, 1
        %s3159 = smul.addr %s3158, 32
        %s3160 = scalar_lea.vmem [#allocation4], %s3159
        // Predicated region
        $region141: #{tpu_custom_call.1} parent=139 // pred_check
          %p3161 = pneg %p749
        $region142: #{tpu_custom_call.1} parent=139 // pred_check_branch
          %3163 = sbr.rel (%p3161) target = $region144
        $region143: #{tpu_custom_call.1} parent=139 // pred_region
          %s3165 = ssub.s32 128, 128
          %3166 = vsyncadd %s3152, %s3165
          %s3167 = smul.addr %s81, 128
          %s3168 = scalar_lea.hbm %s61, %s3167
          %s3170 = sshll.u32 %s3155, 4
          %s3171 = int_to_ptr.vmem [resolvable:$true] %s3170
          %3173 = dma.vmem_to_hbm [thread:$0]  %s3171, 128, %s3168, %s3152
        $region144: #{tpu_custom_call.1} parent=139 // pred_fallthru
          _
        // Predicated region
        $region145: #{tpu_custom_call.1} parent=139 // pred_check
          %p3174 = pneg %p775
        $region146: #{tpu_custom_call.1} parent=139 // pred_check_branch
          %3176 = sbr.rel (%p3174) target = $region148
        $region147: #{tpu_custom_call.1} parent=139 // pred_region
          %s3178 = ssub.s32 512, 512
          %3179 = vsyncadd %s3157, %s3178
          %s3180 = smul.addr %s81, 4
          %s3181 = smul.addr %s3180, 128
          %s3182 = scalar_lea.hbm %s63, %s3181
          %s3183 = sshll.u32 %s3160, 4
          %s3184 = int_to_ptr.vmem [resolvable:$true] %s3183
          %3189 = dma.vmem_to_hbm [thread:$0]  %s3184, 512, %s3182, %s3157, 128, 128, 8
        $region148: #{tpu_custom_call.1} parent=139 // pred_fallthru
          _
      $region140: #{tpu_custom_call.1} parent=5 // pred_fallthru
        _
      %p3190 = scmp.le.s32.totalorder 2, %s76
      // Predicated region
      $region149: #{tpu_custom_call.1} parent=5 // pred_check
        %p3191 = pneg %p3190
      $region150: #{tpu_custom_call.1} parent=5 // pred_check_branch
        %3193 = sbr.rel (%p3191) target = $region152
      $region151: #{tpu_custom_call.1} parent=5 // pred_region
        %s3194 = ssub.s32 %s76, 2
        // Predicated region
        $region153: #{tpu_custom_call.1} parent=151 // pred_check
          %p3195 = pneg %p755
        $region154: #{tpu_custom_call.1} parent=151 // pred_check_branch
          %3197 = sbr.rel (%p3195) target = $region156
        $region155: #{tpu_custom_call.1} parent=151 // pred_region
          %s3198 = sand.u32 %s740, 1
          %s3199 = scalar_lea.sflag [#allocation3], %s3198
          %s3200 = sand.u32 %s740, 1
          %s3201 = smul.addr %s3200, 8
          %s3202 = scalar_lea.vmem [#allocation2], %s3201
          %3203 = dma.done %s3199, 128
        $region156: #{tpu_custom_call.1} parent=151 // pred_fallthru
          _
        // Predicated region
        $region157: #{tpu_custom_call.1} parent=151 // pred_check
          %p3204 = pneg %p781
        $region158: #{tpu_custom_call.1} parent=151 // pred_check_branch
          %3206 = sbr.rel (%p3204) target = $region160
        $region159: #{tpu_custom_call.1} parent=151 // pred_region
          %s3207 = sand.u32 %s766, 1
          %s3208 = scalar_lea.sflag [#allocation5], %s3207
          %s3209 = sand.u32 %s766, 1
          %s3210 = smul.addr %s3209, 32
          %s3211 = scalar_lea.vmem [#allocation4], %s3210
          %3212 = dma.done %s3208, 512
        $region160: #{tpu_custom_call.1} parent=151 // pred_fallthru
          _
      $region152: #{tpu_custom_call.1} parent=5 // pred_fallthru
        _
    $region6: #{tpu_custom_call.1} parent=1 // loop_footer
      %s80 = sadd.s32 1, %s76
    $region7: #{tpu_custom_call.1} parent=1 // loop_footer_branch
      %75 = sbr.rel target = $region3
    $region8: #{tpu_custom_call.1} parent=1 // loop_exit
      _
    %3213 = vsyncpa [#allocation3], 1
    %s3214 = scalar_lea.sflag [#allocation3], 1
    %3215 = vsyncpa %s3214, 1
    %3216 = vsyncpa [#allocation5], 1
    %s3217 = scalar_lea.sflag [#allocation5], 1
    %3218 = vsyncpa %s3217, 1

</llo_original>
